<compile_context>
chip_gen: v7x
topology: tpu7x:2x2x1
jax: 0.10.0
libtpu: 0.0.40
codegen_flags: <defaults>
</compile_context>

<pallas_src>
import numpy as np

import jax
import jax.numpy as jnp
from jax.experimental import pallas as pl
from jax.experimental.pallas import tpu as pltpu


# ---------------------------------------------------------------------------
# The single fused kernel: one grid step processes TB images.
# ---------------------------------------------------------------------------
def _lenet_kernel(x_ref,
                  t1_ref, b1_ref, sr1_ref,
                  t2_ref, b2_ref, sr2_ref,
                  w3_ref, b3_ref, w4_ref, b4_ref, w5_ref, b5_ref,
                  out_ref,
                  xr_ref, q1_ref, p1_ref, q2_ref, p2_ref):
    f32 = jnp.float32
    cdt = t1_ref.dtype                      # MXU operand dtype (bf16 default)
    TB = out_ref.shape[0]                   # images per grid step
    S1, S2, S3 = TB * 32, TB * 16, TB * 8   # frame rows per stage

    # ---- stage zero-row-padded input frames (32 rows/image) -----------------
    # rows t*32+2 .. t*32+29 hold image t; all other rows stay zero (padding).
    xr_ref[...] = jnp.zeros_like(xr_ref)
    for t in range(TB):
        xr_ref[t * 32 + 2:t * 32 + 30, :] = x_ref[t]

    # ---- conv1 (5x5, pad=2) + tanh, batched over all TB*32 frame rows -------
    #   acc1[r, oc*28+b] = sum_p xr[r+p, :] . T1[p][:, oc*28+b]
    acc1 = jnp.dot(xr_ref[0:S1, :].astype(cdt), t1_ref[0],
                   preferred_element_type=f32)
    for p in range(1, 5):
        acc1 += jnp.dot(xr_ref[p:p + S1, :].astype(cdt), t1_ref[p],
                        preferred_element_type=f32)
    a1 = jnp.tanh(acc1 + b1_ref[...])                       # (S1, 168)

    # ---- avg-pool 2x2: columns via SR1 (0.25), rows via stride-2 adds -------
    q1_ref[...] = jnp.dot(a1.astype(cdt), sr1_ref[...],
                          preferred_element_type=f32)       # (S1, 84)
    p1_ref[0:S2, :] = (q1_ref[pl.ds(0, S2, stride=2), :] +
                       q1_ref[pl.ds(1, S2, stride=2), :])
    p1_ref[S2:S2 + 8, :] = jnp.zeros((8, p1_ref.shape[1]), f32)

    # ---- conv2 (5x5, valid) + tanh, batched over all TB*16 frame rows -------
    acc2 = jnp.dot(p1_ref[0:S2, :].astype(cdt), t2_ref[0],
                   preferred_element_type=f32)
    for p in range(1, 5):
        acc2 += jnp.dot(p1_ref[p:p + S2, :].astype(cdt), t2_ref[p],
                        preferred_element_type=f32)
    a2 = jnp.tanh(acc2 + b2_ref[...])                       # (S2, 160)

    # ---- avg-pool 2x2 --------------------------------------------------------
    q2_ref[...] = jnp.dot(a2.astype(cdt), sr2_ref[...],
                          preferred_element_type=f32)       # (S2, 80)
    p2_ref[...] = (q2_ref[pl.ds(0, S3, stride=2), :] +
                   q2_ref[pl.ds(1, S3, stride=2), :])       # (S3, 80)

    # ---- conv3 (5x5 -> 1x1) + tanh: batch folded into M = TB ----------------
    acc3 = jnp.dot(p2_ref[pl.ds(0, TB, stride=8), :].astype(cdt), w3_ref[0],
                   preferred_element_type=f32)
    for i in range(1, 5):
        acc3 += jnp.dot(p2_ref[pl.ds(i, TB, stride=8), :].astype(cdt),
                        w3_ref[i], preferred_element_type=f32)
    a3 = jnp.tanh(acc3 + b3_ref[...])                       # (TB, 120)

    # ---- linear4 + tanh, linear5, log_softmax (all M = TB) ------------------
    h = jnp.tanh(jnp.dot(a3.astype(cdt), w4_ref[...],
                         preferred_element_type=f32) + b4_ref[...])
    z = jnp.dot(h.astype(cdt), w5_ref[...],
                preferred_element_type=f32) + b5_ref[...]
    z = z - jnp.max(z, axis=1, keepdims=True)
    z = z - jnp.log(jnp.sum(jnp.exp(z), axis=1, keepdims=True))
    out_ref[...] = z                                        # (TB, 10) dense


# ---------------------------------------------------------------------------
# Host-side (outside jit) weight preprocessing into matmul-ready matrices.
# ---------------------------------------------------------------------------
def prepare_params(params, compute_dtype=jnp.bfloat16):
    w1 = np.asarray(params["w1"], np.float32)   # (6, 1, 5, 5)
    b1 = np.asarray(params["b1"], np.float32)
    w2 = np.asarray(params["w2"], np.float32)   # (16, 6, 5, 5)
    b2 = np.asarray(params["b2"], np.float32)
    w3 = np.asarray(params["w3"], np.float32)   # (120, 16, 5, 5)
    b3 = np.asarray(params["b3"], np.float32)
    w4 = np.asarray(params["w4"], np.float32)   # (84, 120)
    b4 = np.asarray(params["b4"], np.float32)
    w5 = np.asarray(params["w5"], np.float32)   # (10, 84)
    b5 = np.asarray(params["b5"], np.float32)

    # conv1 band matrices per row-tap p; the 2-column zero padding is baked in
    # by dropping taps that fall outside the 28-wide input row.
    T1 = np.zeros((5, 28, 6 * 28), np.float32)
    for p in range(5):
        for oc in range(6):
            for b in range(28):
                for q in range(5):
                    j = b + q - 2
                    if 0 <= j < 28:
                        T1[p, j, oc * 28 + b] = w1[oc, 0, p, q]
    B1 = np.repeat(b1, 28)[None, :]                              # (1, 168)

    # Column half of the 2x2 average pool (0.25 weights; rows added in-kernel).
    SR1 = np.zeros((6 * 28, 6 * 14), np.float32)
    for oc in range(6):
        for j in range(14):
            SR1[oc * 28 + 2 * j, oc * 14 + j] = 0.25
            SR1[oc * 28 + 2 * j + 1, oc * 14 + j] = 0.25

    # conv2 band matrices (input channels folded into K = 84).
    T2 = np.zeros((5, 6 * 14, 16 * 10), np.float32)
    for p in range(5):
        for oc in range(16):
            for c in range(6):
                for b in range(10):
                    for q in range(5):
                        T2[p, c * 14 + b + q, oc * 10 + b] = w2[oc, c, p, q]
    B2 = np.repeat(b2, 10)[None, :]                              # (1, 160)

    SR2 = np.zeros((16 * 10, 16 * 5), np.float32)
    for oc in range(16):
        for j in range(5):
            SR2[oc * 10 + 2 * j, oc * 5 + j] = 0.25
            SR2[oc * 10 + 2 * j + 1, oc * 5 + j] = 0.25

    # conv3: per row-tap i, W3[i, c*5 + j, k] = w3[k, c, i, j]
    W3 = np.ascontiguousarray(w3.transpose(2, 1, 3, 0)).reshape(5, 80, 120)
    B3 = b3[None, :]
    W4T = np.ascontiguousarray(w4.T)                             # (120, 84)
    B4 = b4[None, :]
    W5T = np.ascontiguousarray(w5.T)                             # (84, 10)
    B5 = b5[None, :]

    cd = compute_dtype
    return (jnp.asarray(T1, cd), jnp.asarray(B1, jnp.float32),
            jnp.asarray(SR1, cd),
            jnp.asarray(T2, cd), jnp.asarray(B2, jnp.float32),
            jnp.asarray(SR2, cd),
            jnp.asarray(W3, cd), jnp.asarray(B3, jnp.float32),
            jnp.asarray(W4T, cd), jnp.asarray(B4, jnp.float32),
            jnp.asarray(W5T, cd), jnp.asarray(B5, jnp.float32))


# ---------------------------------------------------------------------------
# Wrapper
# ---------------------------------------------------------------------------
def lenet_forward(prep, x, block=8):
    """x: (B, 1, 28, 28) float32 NCHW -> (B, 10) log-probabilities."""
    (t1, b1, sr1, t2, b2, sr2, w3, b3, w4t, b4, w5t, b5) = prep
    B = x.shape[0]
    TB = max(8, ((int(block) + 7) // 8) * 8)        # keep sublane-dense output
    Bp = ((B + TB - 1) // TB) * TB
    x2 = x.reshape(B, 28, 28).astype(jnp.float32)
    if Bp != B:
        x2 = jnp.concatenate(
            [x2, jnp.zeros((Bp - B, 28, 28), jnp.float32)], axis=0)

    wspec2 = lambda a: pl.BlockSpec(a.shape, lambda i: (0, 0))
    wspec3 = lambda a: pl.BlockSpec(a.shape, lambda i: (0, 0, 0))

    out = pl.pallas_call(
        _lenet_kernel,
        out_shape=jax.ShapeDtypeStruct((Bp, 10), jnp.float32),
        grid=(Bp // TB,),
        in_specs=[
            pl.BlockSpec((TB, 28, 28), lambda i: (i, 0, 0)),     # image block
            wspec3(t1), wspec2(b1), wspec2(sr1),
            wspec3(t2), wspec2(b2), wspec2(sr2),
            wspec3(w3), wspec2(b3), wspec2(w4t), wspec2(b4),
            wspec2(w5t), wspec2(b5),
        ],
        out_specs=pl.BlockSpec((TB, 10), lambda i: (i, 0)),
        scratch_shapes=[
            pltpu.VMEM((TB * 32 + 8, 28), jnp.float32),   # zero-padded frames
            pltpu.VMEM((TB * 32, 84), jnp.float32),       # conv1 col-pooled
            pltpu.VMEM((TB * 16 + 8, 84), jnp.float32),   # pool1 output frames
            pltpu.VMEM((TB * 16, 80), jnp.float32),       # conv2 col-pooled
            pltpu.VMEM((TB * 8, 80), jnp.float32),        # pool2 output frames
        ],
        compiler_params=pltpu.CompilerParams(
            dimension_semantics=("parallel",)),
    )(x2, t1, b1, sr1, t2, b2, sr2, w3, b3, w4t, b4, w5t, b5)
    return out[:B]


# ---------------------------------------------------------------------------
# Parameters (deterministic, PyTorch-style uniform(-1/sqrt(fan_in), +))
# ---------------------------------------------------------------------------
def init_params(key):
    def uinit(k, shape, fan_in):
        bound = 1.0 / (fan_in ** 0.5)
        return jax.random.uniform(k, shape, jnp.float32, -bound, bound)

    ks = jax.random.split(key, 10)
    return dict(
        w1=uinit(ks[0], (6, 1, 5, 5), 25), b1=uinit(ks[1], (6,), 25),
        w2=uinit(ks[2], (16, 6, 5, 5), 150), b2=uinit(ks[3], (16,), 150),
        w3=uinit(ks[4], (120, 16, 5, 5), 400), b3=uinit(ks[5], (120,), 400),
        w4=uinit(ks[6], (84, 120), 120), b4=uinit(ks[7], (84,), 120),
        w5=uinit(ks[8], (10, 84), 84), b5=uinit(ks[9], (10,), 84),
    )


# ---------------------------------------------------------------------------
# Pure-JAX reference of the PyTorch module (for a numerical check)
# ---------------------------------------------------------------------------
def _avg_pool_ref(y):
    B, C, H, W = y.shape
    return y.reshape(B, C, H // 2, 2, W // 2, 2).mean(axis=(3, 5))


def reference_forward(params, x):
    dn = ("NCHW", "OIHW", "NCHW")
    y = jax.lax.conv_general_dilated(x, params["w1"], (1, 1),
                                     ((2, 2), (2, 2)), dimension_numbers=dn)
    y = _avg_pool_ref(jnp.tanh(y + params["b1"][None, :, None, None]))
    y = jax.lax.conv_general_dilated(y, params["w2"], (1, 1),
                                     ((0, 0), (0, 0)), dimension_numbers=dn)
    y = _avg_pool_ref(jnp.tanh(y + params["b2"][None, :, None, None]))
    y = jax.lax.conv_general_dilated(y, params["w3"], (1, 1),
                                     ((0, 0), (0, 0)), dimension_numbers=dn)
    y = jnp.tanh(y + params["b3"][None, :, None, None])
    y = y.reshape(y.shape[0], -1)
    y = jnp.tanh(y @ params["w4"].T + params["b4"])
    y = y @ params["w5"].T + params["b5"]
    return jax.nn.log_softmax(y, axis=1)


if __name__ == "__main__":
    key = jax.random.PRNGKey(0)
    pkey, xkey = jax.random.split(key)
    params = init_params(pkey)
    prep = prepare_params(params)          # host-side, outside jit (bf16)

    # LeNet-5 / MNIST-shaped inputs; 16 images -> 2 grid steps of 8 images.
    x = jax.random.normal(xkey, (16, 1, 28, 28), jnp.float32)

    fwd = jax.jit(lenet_forward)
    out = jax.block_until_ready(fwd(prep, x))

    assert out.shape == (16, 10)
    assert bool(jnp.all(jnp.isfinite(out)))
    # log_softmax rows must exponentiate-sum to ~1
    assert bool(jnp.allclose(jnp.sum(jnp.exp(out), axis=1), 1.0, atol=1e-3))
    # match the XLA reference of the original module (bf16 MXU operands)
    ref = jax.jit(reference_forward)(params, x)
    assert bool(jnp.allclose(out, ref, atol=5e-3, rtol=5e-3)), (
        float(jnp.max(jnp.abs(out - ref))))

    print("KERNEL_OK")
</pallas_src>

<mosaic_0001>
module attributes {stable_mosaic.version = 11 : i64} {
  func.func @_lenet_kernel(%arg0: i32, %arg1: memref<8x28x28xf32, #tpu.memory_space<vmem>>, %arg2: memref<5x28x168xbf16, #tpu.memory_space<vmem>>, %arg3: memref<1x168xf32, #tpu.memory_space<vmem>>, %arg4: memref<168x84xbf16, #tpu.memory_space<vmem>>, %arg5: memref<5x84x160xbf16, #tpu.memory_space<vmem>>, %arg6: memref<1x160xf32, #tpu.memory_space<vmem>>, %arg7: memref<160x80xbf16, #tpu.memory_space<vmem>>, %arg8: memref<5x80x120xbf16, #tpu.memory_space<vmem>>, %arg9: memref<1x120xf32, #tpu.memory_space<vmem>>, %arg10: memref<120x84xbf16, #tpu.memory_space<vmem>>, %arg11: memref<1x84xf32, #tpu.memory_space<vmem>>, %arg12: memref<84x10xbf16, #tpu.memory_space<vmem>>, %arg13: memref<1x10xf32, #tpu.memory_space<vmem>>, %arg14: memref<8x10xf32, #tpu.memory_space<vmem>>, %arg15: memref<264x28xf32, #tpu.memory_space<vmem>>, %arg16: memref<256x84xf32, #tpu.memory_space<vmem>>, %arg17: memref<136x84xf32, #tpu.memory_space<vmem>>, %arg18: memref<128x80xf32, #tpu.memory_space<vmem>>, %arg19: memref<64x80xf32, #tpu.memory_space<vmem>>) attributes {dimension_semantics = [#tpu.dimension_semantics<parallel>], iteration_bounds = array<i64: 2>, scalar_prefetch = 0 : i64, scratch_operands = 5 : i64, tpu.core_type = #tpu.core_type<tc>, window_params = [{transform_indices = @transform_0, window_bounds = array<i64: 8, 28, 28>}, {pipeline_mode = #tpu.pipeline_mode<synchronous>, transform_indices = @transform_1, window_bounds = array<i64: 5, 28, 168>}, {pipeline_mode = #tpu.pipeline_mode<synchronous>, transform_indices = @transform_2, window_bounds = array<i64: 1, 168>}, {pipeline_mode = #tpu.pipeline_mode<synchronous>, transform_indices = @transform_3, window_bounds = array<i64: 168, 84>}, {pipeline_mode = #tpu.pipeline_mode<synchronous>, transform_indices = @transform_4, window_bounds = array<i64: 5, 84, 160>}, {pipeline_mode = #tpu.pipeline_mode<synchronous>, transform_indices = @transform_5, window_bounds = array<i64: 1, 160>}, {pipeline_mode = #tpu.pipeline_mode<synchronous>, transform_indices = @transform_6, window_bounds = array<i64: 160, 80>}, {pipeline_mode = #tpu.pipeline_mode<synchronous>, transform_indices = @transform_7, window_bounds = array<i64: 5, 80, 120>}, {pipeline_mode = #tpu.pipeline_mode<synchronous>, transform_indices = @transform_8, window_bounds = array<i64: 1, 120>}, {pipeline_mode = #tpu.pipeline_mode<synchronous>, transform_indices = @transform_9, window_bounds = array<i64: 120, 84>}, {pipeline_mode = #tpu.pipeline_mode<synchronous>, transform_indices = @transform_10, window_bounds = array<i64: 1, 84>}, {pipeline_mode = #tpu.pipeline_mode<synchronous>, transform_indices = @transform_11, window_bounds = array<i64: 84, 10>}, {pipeline_mode = #tpu.pipeline_mode<synchronous>, transform_indices = @transform_12, window_bounds = array<i64: 1, 10>}, {transform_indices = @transform_13, window_bounds = array<i64: 8, 10>}]} {
    %cst = arith.constant 0.000000e+00 : f32
    %0 = vector.broadcast %cst : f32 to vector<264x28xf32>
    %c0 = arith.constant 0 : index
    %c0_0 = arith.constant 0 : index
    %1 = vector.load %arg15[%c0, %c0_0] : memref<264x28xf32, #tpu.memory_space<vmem>>, vector<264x28xf32>
    tpu.vector_store %arg15[%c0, %c0_0], %0 {strides = array<i32>} : memref<264x28xf32, #tpu.memory_space<vmem>>, vector<264x28xf32>,
    %c0_1 = arith.constant 0 : index
    %c0_2 = arith.constant 0 : index
    %c0_3 = arith.constant 0 : index
    %2 = vector.load %arg1[%c0_1, %c0_2, %c0_3] : memref<8x28x28xf32, #tpu.memory_space<vmem>>, vector<1x28x28xf32>
    %3 = vector.shape_cast %2 : vector<1x28x28xf32> to vector<28x28xf32>
    %c2 = arith.constant 2 : index
    %c0_4 = arith.constant 0 : index
    %4 = vector.load %arg15[%c2, %c0_4] : memref<264x28xf32, #tpu.memory_space<vmem>>, vector<28x28xf32>
    tpu.vector_store %arg15[%c2, %c0_4], %3 {strides = array<i32>} : memref<264x28xf32, #tpu.memory_space<vmem>>, vector<28x28xf32>,
    %c1 = arith.constant 1 : index
    %c0_5 = arith.constant 0 : index
    %c0_6 = arith.constant 0 : index
    %5 = vector.load %arg1[%c1, %c0_5, %c0_6] : memref<8x28x28xf32, #tpu.memory_space<vmem>>, vector<1x28x28xf32>
    %6 = vector.shape_cast %5 : vector<1x28x28xf32> to vector<28x28xf32>
    %c34 = arith.constant 34 : index
    %c0_7 = arith.constant 0 : index
    %7 = vector.load %arg15[%c34, %c0_7] : memref<264x28xf32, #tpu.memory_space<vmem>>, vector<28x28xf32>
    tpu.vector_store %arg15[%c34, %c0_7], %6 {strides = array<i32>} : memref<264x28xf32, #tpu.memory_space<vmem>>, vector<28x28xf32>,
    %c2_8 = arith.constant 2 : index
    %c0_9 = arith.constant 0 : index
    %c0_10 = arith.constant 0 : index
    %8 = vector.load %arg1[%c2_8, %c0_9, %c0_10] : memref<8x28x28xf32, #tpu.memory_space<vmem>>, vector<1x28x28xf32>
    %9 = vector.shape_cast %8 : vector<1x28x28xf32> to vector<28x28xf32>
    %c66 = arith.constant 66 : index
    %c0_11 = arith.constant 0 : index
    %10 = vector.load %arg15[%c66, %c0_11] : memref<264x28xf32, #tpu.memory_space<vmem>>, vector<28x28xf32>
    tpu.vector_store %arg15[%c66, %c0_11], %9 {strides = array<i32>} : memref<264x28xf32, #tpu.memory_space<vmem>>, vector<28x28xf32>,
    %c3 = arith.constant 3 : index
    %c0_12 = arith.constant 0 : index
    %c0_13 = arith.constant 0 : index
    %11 = vector.load %arg1[%c3, %c0_12, %c0_13] : memref<8x28x28xf32, #tpu.memory_space<vmem>>, vector<1x28x28xf32>
    %12 = vector.shape_cast %11 : vector<1x28x28xf32> to vector<28x28xf32>
    %c98 = arith.constant 98 : index
    %c0_14 = arith.constant 0 : index
    %13 = vector.load %arg15[%c98, %c0_14] : memref<264x28xf32, #tpu.memory_space<vmem>>, vector<28x28xf32>
    tpu.vector_store %arg15[%c98, %c0_14], %12 {strides = array<i32>} : memref<264x28xf32, #tpu.memory_space<vmem>>, vector<28x28xf32>,
    %c4 = arith.constant 4 : index
    %c0_15 = arith.constant 0 : index
    %c0_16 = arith.constant 0 : index
    %14 = vector.load %arg1[%c4, %c0_15, %c0_16] : memref<8x28x28xf32, #tpu.memory_space<vmem>>, vector<1x28x28xf32>
    %15 = vector.shape_cast %14 : vector<1x28x28xf32> to vector<28x28xf32>
    %c130 = arith.constant 130 : index
    %c0_17 = arith.constant 0 : index
    %16 = vector.load %arg15[%c130, %c0_17] : memref<264x28xf32, #tpu.memory_space<vmem>>, vector<28x28xf32>
    tpu.vector_store %arg15[%c130, %c0_17], %15 {strides = array<i32>} : memref<264x28xf32, #tpu.memory_space<vmem>>, vector<28x28xf32>,
    %c5 = arith.constant 5 : index
    %c0_18 = arith.constant 0 : index
    %c0_19 = arith.constant 0 : index
    %17 = vector.load %arg1[%c5, %c0_18, %c0_19] : memref<8x28x28xf32, #tpu.memory_space<vmem>>, vector<1x28x28xf32>
    %18 = vector.shape_cast %17 : vector<1x28x28xf32> to vector<28x28xf32>
    %c162 = arith.constant 162 : index
    %c0_20 = arith.constant 0 : index
    %19 = vector.load %arg15[%c162, %c0_20] : memref<264x28xf32, #tpu.memory_space<vmem>>, vector<28x28xf32>
    tpu.vector_store %arg15[%c162, %c0_20], %18 {strides = array<i32>} : memref<264x28xf32, #tpu.memory_space<vmem>>, vector<28x28xf32>,
    %c6 = arith.constant 6 : index
    %c0_21 = arith.constant 0 : index
    %c0_22 = arith.constant 0 : index
    %20 = vector.load %arg1[%c6, %c0_21, %c0_22] : memref<8x28x28xf32, #tpu.memory_space<vmem>>, vector<1x28x28xf32>
    %21 = vector.shape_cast %20 : vector<1x28x28xf32> to vector<28x28xf32>
    %c194 = arith.constant 194 : index
    %c0_23 = arith.constant 0 : index
    %22 = vector.load %arg15[%c194, %c0_23] : memref<264x28xf32, #tpu.memory_space<vmem>>, vector<28x28xf32>
    tpu.vector_store %arg15[%c194, %c0_23], %21 {strides = array<i32>} : memref<264x28xf32, #tpu.memory_space<vmem>>, vector<28x28xf32>,
    %c7 = arith.constant 7 : index
    %c0_24 = arith.constant 0 : index
    %c0_25 = arith.constant 0 : index
    %23 = vector.load %arg1[%c7, %c0_24, %c0_25] : memref<8x28x28xf32, #tpu.memory_space<vmem>>, vector<1x28x28xf32>
    %24 = vector.shape_cast %23 : vector<1x28x28xf32> to vector<28x28xf32>
    %c226 = arith.constant 226 : index
    %c0_26 = arith.constant 0 : index
    %25 = vector.load %arg15[%c226, %c0_26] : memref<264x28xf32, #tpu.memory_space<vmem>>, vector<28x28xf32>
    tpu.vector_store %arg15[%c226, %c0_26], %24 {strides = array<i32>} : memref<264x28xf32, #tpu.memory_space<vmem>>, vector<28x28xf32>,
    %c0_27 = arith.constant 0 : index
    %c0_28 = arith.constant 0 : index
    %26 = vector.load %arg15[%c0_27, %c0_28] : memref<264x28xf32, #tpu.memory_space<vmem>>, vector<256x28xf32>
    %27 = arith.truncf %26 : vector<256x28xf32> to vector<256x28xbf16>
    %c0_29 = arith.constant 0 : index
    %c0_30 = arith.constant 0 : index
    %c0_31 = arith.constant 0 : index
    %28 = vector.load %arg2[%c0_29, %c0_30, %c0_31] : memref<5x28x168xbf16, #tpu.memory_space<vmem>>, vector<1x28x168xbf16>
    %29 = vector.shape_cast %28 : vector<1x28x168xbf16> to vector<28x168xbf16>
    %cst_32 = arith.constant dense<0.000000e+00> : vector<256x168xf32>
    %30 = tpu.matmul %27, %29, %cst_32 {dimension_numbers = #tpu.dot_dimension_numbers<[1], [0], [0], [1], [0, 0, 1, 1], [], []>} : vector<256x28xbf16>, vector<28x168xbf16>, vector<256x168xf32> -> vector<256x168xf32>
    %c1_33 = arith.constant 1 : index
    %c0_34 = arith.constant 0 : index
    %31 = vector.load %arg15[%c1_33, %c0_34] : memref<264x28xf32, #tpu.memory_space<vmem>>, vector<256x28xf32>
    %32 = arith.truncf %31 : vector<256x28xf32> to vector<256x28xbf16>
    %c1_35 = arith.constant 1 : index
    %c0_36 = arith.constant 0 : index
    %c0_37 = arith.constant 0 : index
    %33 = vector.load %arg2[%c1_35, %c0_36, %c0_37] : memref<5x28x168xbf16, #tpu.memory_space<vmem>>, vector<1x28x168xbf16>
    %34 = vector.shape_cast %33 : vector<1x28x168xbf16> to vector<28x168xbf16>
    %cst_38 = arith.constant dense<0.000000e+00> : vector<256x168xf32>
    %35 = tpu.matmul %32, %34, %cst_38 {dimension_numbers = #tpu.dot_dimension_numbers<[1], [0], [0], [1], [0, 0, 1, 1], [], []>} : vector<256x28xbf16>, vector<28x168xbf16>, vector<256x168xf32> -> vector<256x168xf32>
    %36 = arith.addf %30, %35 : vector<256x168xf32>
    %c2_39 = arith.constant 2 : index
    %c0_40 = arith.constant 0 : index
    %37 = vector.load %arg15[%c2_39, %c0_40] : memref<264x28xf32, #tpu.memory_space<vmem>>, vector<256x28xf32>
    %38 = arith.truncf %37 : vector<256x28xf32> to vector<256x28xbf16>
    %c2_41 = arith.constant 2 : index
    %c0_42 = arith.constant 0 : index
    %c0_43 = arith.constant 0 : index
    %39 = vector.load %arg2[%c2_41, %c0_42, %c0_43] : memref<5x28x168xbf16, #tpu.memory_space<vmem>>, vector<1x28x168xbf16>
    %40 = vector.shape_cast %39 : vector<1x28x168xbf16> to vector<28x168xbf16>
    %cst_44 = arith.constant dense<0.000000e+00> : vector<256x168xf32>
    %41 = tpu.matmul %38, %40, %cst_44 {dimension_numbers = #tpu.dot_dimension_numbers<[1], [0], [0], [1], [0, 0, 1, 1], [], []>} : vector<256x28xbf16>, vector<28x168xbf16>, vector<256x168xf32> -> vector<256x168xf32>
    %42 = arith.addf %36, %41 : vector<256x168xf32>
    %c3_45 = arith.constant 3 : index
    %c0_46 = arith.constant 0 : index
    %43 = vector.load %arg15[%c3_45, %c0_46] : memref<264x28xf32, #tpu.memory_space<vmem>>, vector<256x28xf32>
    %44 = arith.truncf %43 : vector<256x28xf32> to vector<256x28xbf16>
    %c3_47 = arith.constant 3 : index
    %c0_48 = arith.constant 0 : index
    %c0_49 = arith.constant 0 : index
    %45 = vector.load %arg2[%c3_47, %c0_48, %c0_49] : memref<5x28x168xbf16, #tpu.memory_space<vmem>>, vector<1x28x168xbf16>
    %46 = vector.shape_cast %45 : vector<1x28x168xbf16> to vector<28x168xbf16>
    %cst_50 = arith.constant dense<0.000000e+00> : vector<256x168xf32>
    %47 = tpu.matmul %44, %46, %cst_50 {dimension_numbers = #tpu.dot_dimension_numbers<[1], [0], [0], [1], [0, 0, 1, 1], [], []>} : vector<256x28xbf16>, vector<28x168xbf16>, vector<256x168xf32> -> vector<256x168xf32>
    %48 = arith.addf %42, %47 : vector<256x168xf32>
    %c4_51 = arith.constant 4 : index
    %c0_52 = arith.constant 0 : index
    %49 = vector.load %arg15[%c4_51, %c0_52] : memref<264x28xf32, #tpu.memory_space<vmem>>, vector<256x28xf32>
    %50 = arith.truncf %49 : vector<256x28xf32> to vector<256x28xbf16>
    %c4_53 = arith.constant 4 : index
    %c0_54 = arith.constant 0 : index
    %c0_55 = arith.constant 0 : index
    %51 = vector.load %arg2[%c4_53, %c0_54, %c0_55] : memref<5x28x168xbf16, #tpu.memory_space<vmem>>, vector<1x28x168xbf16>
    %52 = vector.shape_cast %51 : vector<1x28x168xbf16> to vector<28x168xbf16>
    %cst_56 = arith.constant dense<0.000000e+00> : vector<256x168xf32>
    %53 = tpu.matmul %50, %52, %cst_56 {dimension_numbers = #tpu.dot_dimension_numbers<[1], [0], [0], [1], [0, 0, 1, 1], [], []>} : vector<256x28xbf16>, vector<28x168xbf16>, vector<256x168xf32> -> vector<256x168xf32>
    %54 = arith.addf %48, %53 : vector<256x168xf32>
    %c0_57 = arith.constant 0 : index
    %c0_58 = arith.constant 0 : index
    %55 = vector.load %arg3[%c0_57, %c0_58] : memref<1x168xf32, #tpu.memory_space<vmem>>, vector<1x168xf32>
    %56 = vector.broadcast %55 : vector<1x168xf32> to vector<256x168xf32>
    %57 = arith.addf %54, %56 : vector<256x168xf32>
    %58 = math.tanh %57 : vector<256x168xf32>
    %59 = arith.truncf %58 : vector<256x168xf32> to vector<256x168xbf16>
    %c0_59 = arith.constant 0 : index
    %c0_60 = arith.constant 0 : index
    %60 = vector.load %arg4[%c0_59, %c0_60] : memref<168x84xbf16, #tpu.memory_space<vmem>>, vector<168x84xbf16>
    %cst_61 = arith.constant dense<0.000000e+00> : vector<256x84xf32>
    %61 = tpu.matmul %59, %60, %cst_61 {dimension_numbers = #tpu.dot_dimension_numbers<[1], [0], [0], [1], [0, 0, 1, 1], [], []>} : vector<256x168xbf16>, vector<168x84xbf16>, vector<256x84xf32> -> vector<256x84xf32>
    %c0_62 = arith.constant 0 : index
    %c0_63 = arith.constant 0 : index
    %62 = vector.load %arg16[%c0_62, %c0_63] : memref<256x84xf32, #tpu.memory_space<vmem>>, vector<256x84xf32>
    tpu.vector_store %arg16[%c0_62, %c0_63], %61 {strides = array<i32>} : memref<256x84xf32, #tpu.memory_space<vmem>>, vector<256x84xf32>,
    %c0_64 = arith.constant 0 : index
    %c0_65 = arith.constant 0 : index
    %63 = tpu.strided_load %arg16[%c0_64, %c0_65] {strides = array<i32: 2, 1>} : memref<256x84xf32, #tpu.memory_space<vmem>>, vector<128x84xf32>
    %c1_66 = arith.constant 1 : index
    %c0_67 = arith.constant 0 : index
    %64 = tpu.strided_load %arg16[%c1_66, %c0_67] {strides = array<i32: 2, 1>} : memref<256x84xf32, #tpu.memory_space<vmem>>, vector<128x84xf32>
    %65 = arith.addf %63, %64 : vector<128x84xf32>
    %c0_68 = arith.constant 0 : index
    %c0_69 = arith.constant 0 : index
    %66 = vector.load %arg17[%c0_68, %c0_69] : memref<136x84xf32, #tpu.memory_space<vmem>>, vector<128x84xf32>
    tpu.vector_store %arg17[%c0_68, %c0_69], %65 {strides = array<i32>} : memref<136x84xf32, #tpu.memory_space<vmem>>, vector<128x84xf32>,
    %cst_70 = arith.constant 0.000000e+00 : f32
    %67 = vector.broadcast %cst_70 : f32 to vector<8x84xf32>
    %c128 = arith.constant 128 : index
    %c0_71 = arith.constant 0 : index
    %68 = vector.load %arg17[%c128, %c0_71] : memref<136x84xf32, #tpu.memory_space<vmem>>, vector<8x84xf32>
    tpu.vector_store %arg17[%c128, %c0_71], %67 {strides = array<i32>} : memref<136x84xf32, #tpu.memory_space<vmem>>, vector<8x84xf32>,
    %c0_72 = arith.constant 0 : index
    %c0_73 = arith.constant 0 : index
    %69 = vector.load %arg17[%c0_72, %c0_73] : memref<136x84xf32, #tpu.memory_space<vmem>>, vector<128x84xf32>
    %70 = arith.truncf %69 : vector<128x84xf32> to vector<128x84xbf16>
    %c0_74 = arith.constant 0 : index
    %c0_75 = arith.constant 0 : index
    %c0_76 = arith.constant 0 : index
    %71 = vector.load %arg5[%c0_74, %c0_75, %c0_76] : memref<5x84x160xbf16, #tpu.memory_space<vmem>>, vector<1x84x160xbf16>
    %72 = vector.shape_cast %71 : vector<1x84x160xbf16> to vector<84x160xbf16>
    %cst_77 = arith.constant dense<0.000000e+00> : vector<128x160xf32>
    %73 = tpu.matmul %70, %72, %cst_77 {dimension_numbers = #tpu.dot_dimension_numbers<[1], [0], [0], [1], [0, 0, 1, 1], [], []>} : vector<128x84xbf16>, vector<84x160xbf16>, vector<128x160xf32> -> vector<128x160xf32>
    %c1_78 = arith.constant 1 : index
    %c0_79 = arith.constant 0 : index
    %74 = vector.load %arg17[%c1_78, %c0_79] : memref<136x84xf32, #tpu.memory_space<vmem>>, vector<128x84xf32>
    %75 = arith.truncf %74 : vector<128x84xf32> to vector<128x84xbf16>
    %c1_80 = arith.constant 1 : index
    %c0_81 = arith.constant 0 : index
    %c0_82 = arith.constant 0 : index
    %76 = vector.load %arg5[%c1_80, %c0_81, %c0_82] : memref<5x84x160xbf16, #tpu.memory_space<vmem>>, vector<1x84x160xbf16>
    %77 = vector.shape_cast %76 : vector<1x84x160xbf16> to vector<84x160xbf16>
    %cst_83 = arith.constant dense<0.000000e+00> : vector<128x160xf32>
    %78 = tpu.matmul %75, %77, %cst_83 {dimension_numbers = #tpu.dot_dimension_numbers<[1], [0], [0], [1], [0, 0, 1, 1], [], []>} : vector<128x84xbf16>, vector<84x160xbf16>, vector<128x160xf32> -> vector<128x160xf32>
    %79 = arith.addf %73, %78 : vector<128x160xf32>
    %c2_84 = arith.constant 2 : index
    %c0_85 = arith.constant 0 : index
    %80 = vector.load %arg17[%c2_84, %c0_85] : memref<136x84xf32, #tpu.memory_space<vmem>>, vector<128x84xf32>
    %81 = arith.truncf %80 : vector<128x84xf32> to vector<128x84xbf16>
    %c2_86 = arith.constant 2 : index
    %c0_87 = arith.constant 0 : index
    %c0_88 = arith.constant 0 : index
    %82 = vector.load %arg5[%c2_86, %c0_87, %c0_88] : memref<5x84x160xbf16, #tpu.memory_space<vmem>>, vector<1x84x160xbf16>
    %83 = vector.shape_cast %82 : vector<1x84x160xbf16> to vector<84x160xbf16>
    %cst_89 = arith.constant dense<0.000000e+00> : vector<128x160xf32>
    %84 = tpu.matmul %81, %83, %cst_89 {dimension_numbers = #tpu.dot_dimension_numbers<[1], [0], [0], [1], [0, 0, 1, 1], [], []>} : vector<128x84xbf16>, vector<84x160xbf16>, vector<128x160xf32> -> vector<128x160xf32>
    %85 = arith.addf %79, %84 : vector<128x160xf32>
    %c3_90 = arith.constant 3 : index
    %c0_91 = arith.constant 0 : index
    %86 = vector.load %arg17[%c3_90, %c0_91] : memref<136x84xf32, #tpu.memory_space<vmem>>, vector<128x84xf32>
    %87 = arith.truncf %86 : vector<128x84xf32> to vector<128x84xbf16>
    %c3_92 = arith.constant 3 : index
    %c0_93 = arith.constant 0 : index
    %c0_94 = arith.constant 0 : index
    %88 = vector.load %arg5[%c3_92, %c0_93, %c0_94] : memref<5x84x160xbf16, #tpu.memory_space<vmem>>, vector<1x84x160xbf16>
    %89 = vector.shape_cast %88 : vector<1x84x160xbf16> to vector<84x160xbf16>
    %cst_95 = arith.constant dense<0.000000e+00> : vector<128x160xf32>
    %90 = tpu.matmul %87, %89, %cst_95 {dimension_numbers = #tpu.dot_dimension_numbers<[1], [0], [0], [1], [0, 0, 1, 1], [], []>} : vector<128x84xbf16>, vector<84x160xbf16>, vector<128x160xf32> -> vector<128x160xf32>
    %91 = arith.addf %85, %90 : vector<128x160xf32>
    %c4_96 = arith.constant 4 : index
    %c0_97 = arith.constant 0 : index
    %92 = vector.load %arg17[%c4_96, %c0_97] : memref<136x84xf32, #tpu.memory_space<vmem>>, vector<128x84xf32>
    %93 = arith.truncf %92 : vector<128x84xf32> to vector<128x84xbf16>
    %c4_98 = arith.constant 4 : index
    %c0_99 = arith.constant 0 : index
    %c0_100 = arith.constant 0 : index
    %94 = vector.load %arg5[%c4_98, %c0_99, %c0_100] : memref<5x84x160xbf16, #tpu.memory_space<vmem>>, vector<1x84x160xbf16>
    %95 = vector.shape_cast %94 : vector<1x84x160xbf16> to vector<84x160xbf16>
    %cst_101 = arith.constant dense<0.000000e+00> : vector<128x160xf32>
    %96 = tpu.matmul %93, %95, %cst_101 {dimension_numbers = #tpu.dot_dimension_numbers<[1], [0], [0], [1], [0, 0, 1, 1], [], []>} : vector<128x84xbf16>, vector<84x160xbf16>, vector<128x160xf32> -> vector<128x160xf32>
    %97 = arith.addf %91, %96 : vector<128x160xf32>
    %c0_102 = arith.constant 0 : index
    %c0_103 = arith.constant 0 : index
    %98 = vector.load %arg6[%c0_102, %c0_103] : memref<1x160xf32, #tpu.memory_space<vmem>>, vector<1x160xf32>
    %99 = vector.broadcast %98 : vector<1x160xf32> to vector<128x160xf32>
    %100 = arith.addf %97, %99 : vector<128x160xf32>
    %101 = math.tanh %100 : vector<128x160xf32>
    %102 = arith.truncf %101 : vector<128x160xf32> to vector<128x160xbf16>
    %c0_104 = arith.constant 0 : index
    %c0_105 = arith.constant 0 : index
    %103 = vector.load %arg7[%c0_104, %c0_105] : memref<160x80xbf16, #tpu.memory_space<vmem>>, vector<160x80xbf16>
    %cst_106 = arith.constant dense<0.000000e+00> : vector<128x80xf32>
    %104 = tpu.matmul %102, %103, %cst_106 {dimension_numbers = #tpu.dot_dimension_numbers<[1], [0], [0], [1], [0, 0, 1, 1], [], []>} : vector<128x160xbf16>, vector<160x80xbf16>, vector<128x80xf32> -> vector<128x80xf32>
    %c0_107 = arith.constant 0 : index
    %c0_108 = arith.constant 0 : index
    %105 = vector.load %arg18[%c0_107, %c0_108] : memref<128x80xf32, #tpu.memory_space<vmem>>, vector<128x80xf32>
    tpu.vector_store %arg18[%c0_107, %c0_108], %104 {strides = array<i32>} : memref<128x80xf32, #tpu.memory_space<vmem>>, vector<128x80xf32>,
    %c0_109 = arith.constant 0 : index
    %c0_110 = arith.constant 0 : index
    %106 = tpu.strided_load %arg18[%c0_109, %c0_110] {strides = array<i32: 2, 1>} : memref<128x80xf32, #tpu.memory_space<vmem>>, vector<64x80xf32>
    %c1_111 = arith.constant 1 : index
    %c0_112 = arith.constant 0 : index
    %107 = tpu.strided_load %arg18[%c1_111, %c0_112] {strides = array<i32: 2, 1>} : memref<128x80xf32, #tpu.memory_space<vmem>>, vector<64x80xf32>
    %108 = arith.addf %106, %107 : vector<64x80xf32>
    %c0_113 = arith.constant 0 : index
    %c0_114 = arith.constant 0 : index
    %109 = vector.load %arg19[%c0_113, %c0_114] : memref<64x80xf32, #tpu.memory_space<vmem>>, vector<64x80xf32>
    tpu.vector_store %arg19[%c0_113, %c0_114], %108 {strides = array<i32>} : memref<64x80xf32, #tpu.memory_space<vmem>>, vector<64x80xf32>,
    %c0_115 = arith.constant 0 : index
    %c0_116 = arith.constant 0 : index
    %110 = tpu.strided_load %arg19[%c0_115, %c0_116] {strides = array<i32: 8, 1>} : memref<64x80xf32, #tpu.memory_space<vmem>>, vector<8x80xf32>
    %111 = arith.truncf %110 : vector<8x80xf32> to vector<8x80xbf16>
    %c0_117 = arith.constant 0 : index
    %c0_118 = arith.constant 0 : index
    %c0_119 = arith.constant 0 : index
    %112 = vector.load %arg8[%c0_117, %c0_118, %c0_119] : memref<5x80x120xbf16, #tpu.memory_space<vmem>>, vector<1x80x120xbf16>
    %113 = vector.shape_cast %112 : vector<1x80x120xbf16> to vector<80x120xbf16>
    %cst_120 = arith.constant dense<0.000000e+00> : vector<8x120xf32>
    %114 = tpu.matmul %111, %113, %cst_120 {dimension_numbers = #tpu.dot_dimension_numbers<[1], [0], [0], [1], [0, 0, 1, 1], [], []>} : vector<8x80xbf16>, vector<80x120xbf16>, vector<8x120xf32> -> vector<8x120xf32>
    %c1_121 = arith.constant 1 : index
    %c0_122 = arith.constant 0 : index
    %115 = tpu.strided_load %arg19[%c1_121, %c0_122] {strides = array<i32: 8, 1>} : memref<64x80xf32, #tpu.memory_space<vmem>>, vector<8x80xf32>
    %116 = arith.truncf %115 : vector<8x80xf32> to vector<8x80xbf16>
    %c1_123 = arith.constant 1 : index
    %c0_124 = arith.constant 0 : index
    %c0_125 = arith.constant 0 : index
    %117 = vector.load %arg8[%c1_123, %c0_124, %c0_125] : memref<5x80x120xbf16, #tpu.memory_space<vmem>>, vector<1x80x120xbf16>
    %118 = vector.shape_cast %117 : vector<1x80x120xbf16> to vector<80x120xbf16>
    %cst_126 = arith.constant dense<0.000000e+00> : vector<8x120xf32>
    %119 = tpu.matmul %116, %118, %cst_126 {dimension_numbers = #tpu.dot_dimension_numbers<[1], [0], [0], [1], [0, 0, 1, 1], [], []>} : vector<8x80xbf16>, vector<80x120xbf16>, vector<8x120xf32> -> vector<8x120xf32>
    %120 = arith.addf %114, %119 : vector<8x120xf32>
    %c2_127 = arith.constant 2 : index
    %c0_128 = arith.constant 0 : index
    %121 = tpu.strided_load %arg19[%c2_127, %c0_128] {strides = array<i32: 8, 1>} : memref<64x80xf32, #tpu.memory_space<vmem>>, vector<8x80xf32>
    %122 = arith.truncf %121 : vector<8x80xf32> to vector<8x80xbf16>
    %c2_129 = arith.constant 2 : index
    %c0_130 = arith.constant 0 : index
    %c0_131 = arith.constant 0 : index
    %123 = vector.load %arg8[%c2_129, %c0_130, %c0_131] : memref<5x80x120xbf16, #tpu.memory_space<vmem>>, vector<1x80x120xbf16>
    %124 = vector.shape_cast %123 : vector<1x80x120xbf16> to vector<80x120xbf16>
    %cst_132 = arith.constant dense<0.000000e+00> : vector<8x120xf32>
    %125 = tpu.matmul %122, %124, %cst_132 {dimension_numbers = #tpu.dot_dimension_numbers<[1], [0], [0], [1], [0, 0, 1, 1], [], []>} : vector<8x80xbf16>, vector<80x120xbf16>, vector<8x120xf32> -> vector<8x120xf32>
    %126 = arith.addf %120, %125 : vector<8x120xf32>
    %c3_133 = arith.constant 3 : index
    %c0_134 = arith.constant 0 : index
    %127 = tpu.strided_load %arg19[%c3_133, %c0_134] {strides = array<i32: 8, 1>} : memref<64x80xf32, #tpu.memory_space<vmem>>, vector<8x80xf32>
    %128 = arith.truncf %127 : vector<8x80xf32> to vector<8x80xbf16>
    %c3_135 = arith.constant 3 : index
    %c0_136 = arith.constant 0 : index
    %c0_137 = arith.constant 0 : index
    %129 = vector.load %arg8[%c3_135, %c0_136, %c0_137] : memref<5x80x120xbf16, #tpu.memory_space<vmem>>, vector<1x80x120xbf16>
    %130 = vector.shape_cast %129 : vector<1x80x120xbf16> to vector<80x120xbf16>
    %cst_138 = arith.constant dense<0.000000e+00> : vector<8x120xf32>
    %131 = tpu.matmul %128, %130, %cst_138 {dimension_numbers = #tpu.dot_dimension_numbers<[1], [0], [0], [1], [0, 0, 1, 1], [], []>} : vector<8x80xbf16>, vector<80x120xbf16>, vector<8x120xf32> -> vector<8x120xf32>
    %132 = arith.addf %126, %131 : vector<8x120xf32>
    %c4_139 = arith.constant 4 : index
    %c0_140 = arith.constant 0 : index
    %133 = tpu.strided_load %arg19[%c4_139, %c0_140] {strides = array<i32: 8, 1>} : memref<64x80xf32, #tpu.memory_space<vmem>>, vector<8x80xf32>
    %134 = arith.truncf %133 : vector<8x80xf32> to vector<8x80xbf16>
    %c4_141 = arith.constant 4 : index
    %c0_142 = arith.constant 0 : index
    %c0_143 = arith.constant 0 : index
    %135 = vector.load %arg8[%c4_141, %c0_142, %c0_143] : memref<5x80x120xbf16, #tpu.memory_space<vmem>>, vector<1x80x120xbf16>
    %136 = vector.shape_cast %135 : vector<1x80x120xbf16> to vector<80x120xbf16>
    %cst_144 = arith.constant dense<0.000000e+00> : vector<8x120xf32>
    %137 = tpu.matmul %134, %136, %cst_144 {dimension_numbers = #tpu.dot_dimension_numbers<[1], [0], [0], [1], [0, 0, 1, 1], [], []>} : vector<8x80xbf16>, vector<80x120xbf16>, vector<8x120xf32> -> vector<8x120xf32>
    %138 = arith.addf %132, %137 : vector<8x120xf32>
    %c0_145 = arith.constant 0 : index
    %c0_146 = arith.constant 0 : index
    %139 = vector.load %arg9[%c0_145, %c0_146] : memref<1x120xf32, #tpu.memory_space<vmem>>, vector<1x120xf32>
    %140 = vector.broadcast %139 : vector<1x120xf32> to vector<8x120xf32>
    %141 = arith.addf %138, %140 : vector<8x120xf32>
    %142 = math.tanh %141 : vector<8x120xf32>
    %143 = arith.truncf %142 : vector<8x120xf32> to vector<8x120xbf16>
    %c0_147 = arith.constant 0 : index
    %c0_148 = arith.constant 0 : index
    %144 = vector.load %arg10[%c0_147, %c0_148] : memref<120x84xbf16, #tpu.memory_space<vmem>>, vector<120x84xbf16>
    %cst_149 = arith.constant dense<0.000000e+00> : vector<8x84xf32>
    %145 = tpu.matmul %143, %144, %cst_149 {dimension_numbers = #tpu.dot_dimension_numbers<[1], [0], [0], [1], [0, 0, 1, 1], [], []>} : vector<8x120xbf16>, vector<120x84xbf16>, vector<8x84xf32> -> vector<8x84xf32>
    %c0_150 = arith.constant 0 : index
    %c0_151 = arith.constant 0 : index
    %146 = vector.load %arg11[%c0_150, %c0_151] : memref<1x84xf32, #tpu.memory_space<vmem>>, vector<1x84xf32>
    %147 = vector.broadcast %146 : vector<1x84xf32> to vector<8x84xf32>
    %148 = arith.addf %145, %147 : vector<8x84xf32>
    %149 = math.tanh %148 : vector<8x84xf32>
    %150 = arith.truncf %149 : vector<8x84xf32> to vector<8x84xbf16>
    %c0_152 = arith.constant 0 : index
    %c0_153 = arith.constant 0 : index
    %151 = vector.load %arg12[%c0_152, %c0_153] : memref<84x10xbf16, #tpu.memory_space<vmem>>, vector<84x10xbf16>
    %cst_154 = arith.constant dense<0.000000e+00> : vector<8x10xf32>
    %152 = tpu.matmul %150, %151, %cst_154 {dimension_numbers = #tpu.dot_dimension_numbers<[1], [0], [0], [1], [0, 0, 1, 1], [], []>} : vector<8x84xbf16>, vector<84x10xbf16>, vector<8x10xf32> -> vector<8x10xf32>
    %c0_155 = arith.constant 0 : index
    %c0_156 = arith.constant 0 : index
    %153 = vector.load %arg13[%c0_155, %c0_156] : memref<1x10xf32, #tpu.memory_space<vmem>>, vector<1x10xf32>
    %154 = vector.broadcast %153 : vector<1x10xf32> to vector<8x10xf32>
    %155 = arith.addf %152, %154 : vector<8x10xf32>
    %cst_157 = arith.constant dense<0xFF800000> : vector<8xf32>
    %156 = vector.multi_reduction <maximumf>, %155, %cst_157 [1] : vector<8x10xf32> to vector<8xf32>
    %157 = vector.shape_cast %156 : vector<8xf32> to vector<8x1xf32>
    %158 = vector.broadcast %157 : vector<8x1xf32> to vector<8x10xf32>
    %159 = arith.subf %155, %158 : vector<8x10xf32>
    %160 = math.exp %159 : vector<8x10xf32>
    %cst_158 = arith.constant dense<0.000000e+00> : vector<8xf32>
    %161 = vector.multi_reduction <add>, %160, %cst_158 [1] : vector<8x10xf32> to vector<8xf32>
    %162 = vector.shape_cast %161 : vector<8xf32> to vector<8x1xf32>
    %163 = math.log %162 : vector<8x1xf32>
    %164 = vector.broadcast %163 : vector<8x1xf32> to vector<8x10xf32>
    %165 = arith.subf %159, %164 : vector<8x10xf32>
    %c0_159 = arith.constant 0 : index
    %c0_160 = arith.constant 0 : index
    %166 = vector.load %arg14[%c0_159, %c0_160] : memref<8x10xf32, #tpu.memory_space<vmem>>, vector<8x10xf32>
    tpu.vector_store %arg14[%c0_159, %c0_160], %165 {strides = array<i32>} : memref<8x10xf32, #tpu.memory_space<vmem>>, vector<8x10xf32>,
    return
  }
  func.func @transform_0(%arg0: i32) -> (i32, i32, i32) {
    %c0_i32 = arith.constant 0 : i32
    %c0_i32_0 = arith.constant 0 : i32
    %c0_i32_1 = arith.constant 0 : i32
    return %arg0, %c0_i32, %c0_i32_0 : i32, i32, i32
  }
  func.func @transform_1(%arg0: i32) -> (i32, i32, i32) {
    %c0_i32 = arith.constant 0 : i32
    %c0_i32_0 = arith.constant 0 : i32
    %c0_i32_1 = arith.constant 0 : i32
    %c0_i32_2 = arith.constant 0 : i32
    return %c0_i32, %c0_i32_0, %c0_i32_1 : i32, i32, i32
  }
  func.func @transform_2(%arg0: i32) -> (i32, i32) {
    %c0_i32 = arith.constant 0 : i32
    %c0_i32_0 = arith.constant 0 : i32
    %c0_i32_1 = arith.constant 0 : i32
    return %c0_i32, %c0_i32_0 : i32, i32
  }
  func.func @transform_3(%arg0: i32) -> (i32, i32) {
    %c0_i32 = arith.constant 0 : i32
    %c0_i32_0 = arith.constant 0 : i32
    %c0_i32_1 = arith.constant 0 : i32
    return %c0_i32, %c0_i32_0 : i32, i32
  }
  func.func @transform_4(%arg0: i32) -> (i32, i32, i32) {
    %c0_i32 = arith.constant 0 : i32
    %c0_i32_0 = arith.constant 0 : i32
    %c0_i32_1 = arith.constant 0 : i32
    %c0_i32_2 = arith.constant 0 : i32
    return %c0_i32, %c0_i32_0, %c0_i32_1 : i32, i32, i32
  }
  func.func @transform_5(%arg0: i32) -> (i32, i32) {
    %c0_i32 = arith.constant 0 : i32
    %c0_i32_0 = arith.constant 0 : i32
    %c0_i32_1 = arith.constant 0 : i32
    return %c0_i32, %c0_i32_0 : i32, i32
  }
  func.func @transform_6(%arg0: i32) -> (i32, i32) {
    %c0_i32 = arith.constant 0 : i32
    %c0_i32_0 = arith.constant 0 : i32
    %c0_i32_1 = arith.constant 0 : i32
    return %c0_i32, %c0_i32_0 : i32, i32
  }
  func.func @transform_7(%arg0: i32) -> (i32, i32, i32) {
    %c0_i32 = arith.constant 0 : i32
    %c0_i32_0 = arith.constant 0 : i32
    %c0_i32_1 = arith.constant 0 : i32
    %c0_i32_2 = arith.constant 0 : i32
    return %c0_i32, %c0_i32_0, %c0_i32_1 : i32, i32, i32
  }
  func.func @transform_8(%arg0: i32) -> (i32, i32) {
    %c0_i32 = arith.constant 0 : i32
    %c0_i32_0 = arith.constant 0 : i32
    %c0_i32_1 = arith.constant 0 : i32
    return %c0_i32, %c0_i32_0 : i32, i32
  }
  func.func @transform_9(%arg0: i32) -> (i32, i32) {
    %c0_i32 = arith.constant 0 : i32
    %c0_i32_0 = arith.constant 0 : i32
    %c0_i32_1 = arith.constant 0 : i32
    return %c0_i32, %c0_i32_0 : i32, i32
  }
  func.func @transform_10(%arg0: i32) -> (i32, i32) {
    %c0_i32 = arith.constant 0 : i32
    %c0_i32_0 = arith.constant 0 : i32
    %c0_i32_1 = arith.constant 0 : i32
    return %c0_i32, %c0_i32_0 : i32, i32
  }
  func.func @transform_11(%arg0: i32) -> (i32, i32) {
    %c0_i32 = arith.constant 0 : i32
    %c0_i32_0 = arith.constant 0 : i32
    %c0_i32_1 = arith.constant 0 : i32
    return %c0_i32, %c0_i32_0 : i32, i32
  }
  func.func @transform_12(%arg0: i32) -> (i32, i32) {
    %c0_i32 = arith.constant 0 : i32
    %c0_i32_0 = arith.constant 0 : i32
    %c0_i32_1 = arith.constant 0 : i32
    return %c0_i32, %c0_i32_0 : i32, i32
  }
  func.func @transform_13(%arg0: i32) -> (i32, i32) {
    %c0_i32 = arith.constant 0 : i32
    %c0_i32_0 = arith.constant 0 : i32
    return %arg0, %c0_i32 : i32, i32
  }
}

</mosaic_0001>

<llo_original>
// kernel: lenet_forward.1
$region0: #{lenet_forward.1}
  #allocation0 [shape = 'u32[]', space=smem, size = 0x4, offset = 0x4, fixed_abs, tag = 'smem constant byte address 0x4 - core index']
  #allocation1 [shape = 'u32[144,128]{1,0:T(1,128)}', space=vmem, size = 0x12000, scoped, tag = 'internal scratch']
  #allocation2 [shape = 'f32[264,28]{1,0:T(8,128)}', space=vmem, size = 0x21000, scoped, tag = 'scratch operand']
  #allocation3 [shape = 'f32[256,84]{1,0:T(8,128)}', space=vmem, size = 0x20000, scoped, tag = 'scratch operand']
  #allocation4 [shape = 'f32[136,84]{1,0:T(8,128)}', space=vmem, size = 0x11000, scoped, tag = 'scratch operand']
  #allocation5 [shape = 'f32[128,80]{1,0:T(8,128)}', space=vmem, size = 0x10000, scoped, tag = 'scratch operand']
  #allocation6 [shape = 'f32[64,80]{1,0:T(8,128)}', space=vmem, size = 0x8000, scoped, tag = 'scratch operand']
  %s0 = inlined_call_operand.vmem [shape: f32[16,28,28], index: 0, kind: input, shape index: {}]
  %s1 = inlined_call_operand.vmem [shape: bf16[5,28,168], index: 1, kind: input, shape index: {}]
  %s2 = inlined_call_operand.vmem [shape: f32[1,168], index: 2, kind: input, shape index: {}]
  %s3 = inlined_call_operand.vmem [shape: bf16[168,84], index: 3, kind: input, shape index: {}]
  %s4 = inlined_call_operand.vmem [shape: bf16[5,84,160], index: 4, kind: input, shape index: {}]
  %s5 = inlined_call_operand.vmem [shape: f32[1,160], index: 5, kind: input, shape index: {}]
  %s6 = inlined_call_operand.vmem [shape: bf16[160,80], index: 6, kind: input, shape index: {}]
  %s7 = inlined_call_operand.vmem [shape: bf16[5,80,120], index: 7, kind: input, shape index: {}]
  %s8 = inlined_call_operand.vmem [shape: f32[1,120], index: 8, kind: input, shape index: {}]
  %s9 = inlined_call_operand.vmem [shape: bf16[120,84], index: 9, kind: input, shape index: {}]
  %s10 = inlined_call_operand.vmem [shape: f32[1,84], index: 10, kind: input, shape index: {}]
  %s11 = inlined_call_operand.vmem [shape: bf16[84,10], index: 11, kind: input, shape index: {}]
  %s12 = inlined_call_operand.vmem [shape: f32[1,10], index: 12, kind: input, shape index: {}]
  %s13 = inlined_call_operand.hbm [shape: f32[16,10], index: 13, kind: output, shape index: {}]
  %s14 = sld [smem:[#allocation0]]
  $region85: #{lenet_forward.1} parent=0
    _
  %s16 = ssub.s32 1, %s14
  %s17 = scalar_select 0, %s16, %s14
  $region1: #{lenet_forward.1} parent=0
    #allocation7 [shape = 'u8[8192]{0}', space=vmem, size = 0x2000, scoped, tag = 'output window, operand 0']
    #allocation8 [shape = 's32[2]{0}', space=sflag, size = 0x8, scoped, tag = 'scoped memory for lenet_forward.1']
    %18 = vsyncpa [#allocation8], 0
    %s19 = scalar_lea.sflag [#allocation8], 1
    %20 = vsyncpa %s19, 0
    loop: start=0, step=1, limit=4
    $region2: #{lenet_forward.1} parent=1 // loop_pre_header
      _
    $region3: #{lenet_forward.1} parent=1 // loop_header
      %s22 = sphi 0, %s26
      %p23 = scmp.ge.s32.totalorder %s22, 4
      %s32 = sphi 0, %s34
      %s35 = sphi 0, %s32
      %s36 = sphi 0, %s35
      %s52 = sphi 0, %s36
      %s56 = sphi 0, %s56
      %s58 = sphi 0, %s56
      %s59 = sphi 0, %s58
      %s73 = sphi 0, %s59
      %s77 = sphi 0, %s77
      %s79 = sphi 0, %s77
      %s80 = sphi 0, %s79
      %s94 = sphi 0, %s80
      %s98 = sphi 0, %s98
      %s100 = sphi 0, %s98
      %s101 = sphi 0, %s100
      %s115 = sphi 0, %s101
      %s119 = sphi 0, %s119
      %s121 = sphi 0, %s119
      %s122 = sphi 0, %s121
      %s136 = sphi 0, %s122
      %s140 = sphi 0, %s140
      %s142 = sphi 0, %s140
      %s143 = sphi 0, %s142
      %s157 = sphi 0, %s143
      %s161 = sphi 0, %s161
      %s163 = sphi 0, %s161
      %s164 = sphi 0, %s163
      %s178 = sphi 0, %s164
      %s182 = sphi 0, %s182
      %s184 = sphi 0, %s182
      %s185 = sphi 0, %s184
      %s199 = sphi 0, %s185
      %s203 = sphi 0, %s203
      %s205 = sphi 0, %s203
      %s206 = sphi 0, %s205
      %s220 = sphi 0, %s206
      %s224 = sphi 0, %s224
      %s226 = sphi 0, %s224
      %s227 = sphi 0, %s226
      %s241 = sphi 0, %s227
      %s245 = sphi 0, %s245
      %s247 = sphi 0, %s245
      %s248 = sphi 0, %s247
      %s262 = sphi 0, %s248
      %s266 = sphi 0, %s266
      %s268 = sphi 0, %s266
      %s269 = sphi 0, %s268
      %s283 = sphi 0, %s269
      %s287 = sphi 0, %s287
      %s289 = sphi 0, %s287
      %s290 = sphi 0, %s289
      %s304 = sphi 0, %s290
      %s310 = sphi 0, %s312
      %s313 = sphi 0, %s310
      %s314 = sphi 0, %s313
      %s330 = sphi 0, %s314
    $region4: #{lenet_forward.1} parent=1 // loop_header_branch
      %25 = sbr.rel (%p23) target = $region8
    $region5: #{lenet_forward.1} parent=1 // loop_body
      %s27 = ssub.s32 %s22, 1
      %s28 = ssub.s32 %s22, 2
      %s29 = sadd.s32 %s22, 1
      %s30 = ssub.s32 %s22, %s29
      %p31 = scmp.eq.s32.totalorder %s30, 0
      %s33 = sadd.s32 %s32, 1
      %s34 = scalar_select %p31, %s32, %s33
      %p37 = pneg %p31
      %p38 = scmp.eq.s32.totalorder %s22, 1
      %p39 = por %p37, %p38
      %p40 = scmp.ne.s32.totalorder %s32, %s35
      %p41 = scmp.eq.s32.totalorder %s22, 0
      %p42 = por %p40, %p41
      %p43 = scmp.ne.s32.totalorder %s32, %s35
      %p44 = scmp.eq.s32.totalorder %s27, 1
      %p45 = por %p43, %p44
      %p46 = scmp.ne.s32.totalorder %s35, %s36
      %p47 = scmp.eq.s32.totalorder %s27, 0
      %p48 = por %p46, %p47
      %p49 = scmp.ne.s32.totalorder %s35, %s36
      %p50 = scmp.eq.s32.totalorder %s28, 1
      %p51 = por %p49, %p50
      %p53 = scmp.ne.s32.totalorder %s36, %s52
      %p54 = scmp.eq.s32.totalorder %s28, 0
      %p55 = por %p53, %p54
      %s57 = sadd.s32 %s56, 1
      %p60 = scmp.eq.s32.totalorder %s22, 1
      %p61 = scmp.ne.s32.totalorder %s56, %s58
      %p62 = scmp.eq.s32.totalorder %s22, 0
      %p63 = por %p61, %p62
      %p64 = scmp.ne.s32.totalorder %s56, %s58
      %p65 = scmp.eq.s32.totalorder %s27, 1
      %p66 = por %p64, %p65
      %p67 = scmp.ne.s32.totalorder %s58, %s59
      %p68 = scmp.eq.s32.totalorder %s27, 0
      %p69 = por %p67, %p68
      %p70 = scmp.ne.s32.totalorder %s58, %s59
      %p71 = scmp.eq.s32.totalorder %s28, 1
      %p72 = por %p70, %p71
      %p74 = scmp.ne.s32.totalorder %s59, %s73
      %p75 = scmp.eq.s32.totalorder %s28, 0
      %p76 = por %p74, %p75
      %s78 = sadd.s32 %s77, 1
      %p81 = scmp.eq.s32.totalorder %s22, 1
      %p82 = scmp.ne.s32.totalorder %s77, %s79
      %p83 = scmp.eq.s32.totalorder %s22, 0
      %p84 = por %p82, %p83
      %p85 = scmp.ne.s32.totalorder %s77, %s79
      %p86 = scmp.eq.s32.totalorder %s27, 1
      %p87 = por %p85, %p86
      %p88 = scmp.ne.s32.totalorder %s79, %s80
      %p89 = scmp.eq.s32.totalorder %s27, 0
      %p90 = por %p88, %p89
      %p91 = scmp.ne.s32.totalorder %s79, %s80
      %p92 = scmp.eq.s32.totalorder %s28, 1
      %p93 = por %p91, %p92
      %p95 = scmp.ne.s32.totalorder %s80, %s94
      %p96 = scmp.eq.s32.totalorder %s28, 0
      %p97 = por %p95, %p96
      %s99 = sadd.s32 %s98, 1
      %p102 = scmp.eq.s32.totalorder %s22, 1
      %p103 = scmp.ne.s32.totalorder %s98, %s100
      %p104 = scmp.eq.s32.totalorder %s22, 0
      %p105 = por %p103, %p104
      %p106 = scmp.ne.s32.totalorder %s98, %s100
      %p107 = scmp.eq.s32.totalorder %s27, 1
      %p108 = por %p106, %p107
      %p109 = scmp.ne.s32.totalorder %s100, %s101
      %p110 = scmp.eq.s32.totalorder %s27, 0
      %p111 = por %p109, %p110
      %p112 = scmp.ne.s32.totalorder %s100, %s101
      %p113 = scmp.eq.s32.totalorder %s28, 1
      %p114 = por %p112, %p113
      %p116 = scmp.ne.s32.totalorder %s101, %s115
      %p117 = scmp.eq.s32.totalorder %s28, 0
      %p118 = por %p116, %p117
      %s120 = sadd.s32 %s119, 1
      %p123 = scmp.eq.s32.totalorder %s22, 1
      %p124 = scmp.ne.s32.totalorder %s119, %s121
      %p125 = scmp.eq.s32.totalorder %s22, 0
      %p126 = por %p124, %p125
      %p127 = scmp.ne.s32.totalorder %s119, %s121
      %p128 = scmp.eq.s32.totalorder %s27, 1
      %p129 = por %p127, %p128
      %p130 = scmp.ne.s32.totalorder %s121, %s122
      %p131 = scmp.eq.s32.totalorder %s27, 0
      %p132 = por %p130, %p131
      %p133 = scmp.ne.s32.totalorder %s121, %s122
      %p134 = scmp.eq.s32.totalorder %s28, 1
      %p135 = por %p133, %p134
      %p137 = scmp.ne.s32.totalorder %s122, %s136
      %p138 = scmp.eq.s32.totalorder %s28, 0
      %p139 = por %p137, %p138
      %s141 = sadd.s32 %s140, 1
      %p144 = scmp.eq.s32.totalorder %s22, 1
      %p145 = scmp.ne.s32.totalorder %s140, %s142
      %p146 = scmp.eq.s32.totalorder %s22, 0
      %p147 = por %p145, %p146
      %p148 = scmp.ne.s32.totalorder %s140, %s142
      %p149 = scmp.eq.s32.totalorder %s27, 1
      %p150 = por %p148, %p149
      %p151 = scmp.ne.s32.totalorder %s142, %s143
      %p152 = scmp.eq.s32.totalorder %s27, 0
      %p153 = por %p151, %p152
      %p154 = scmp.ne.s32.totalorder %s142, %s143
      %p155 = scmp.eq.s32.totalorder %s28, 1
      %p156 = por %p154, %p155
      %p158 = scmp.ne.s32.totalorder %s143, %s157
      %p159 = scmp.eq.s32.totalorder %s28, 0
      %p160 = por %p158, %p159
      %s162 = sadd.s32 %s161, 1
      %p165 = scmp.eq.s32.totalorder %s22, 1
      %p166 = scmp.ne.s32.totalorder %s161, %s163
      %p167 = scmp.eq.s32.totalorder %s22, 0
      %p168 = por %p166, %p167
      %p169 = scmp.ne.s32.totalorder %s161, %s163
      %p170 = scmp.eq.s32.totalorder %s27, 1
      %p171 = por %p169, %p170
      %p172 = scmp.ne.s32.totalorder %s163, %s164
      %p173 = scmp.eq.s32.totalorder %s27, 0
      %p174 = por %p172, %p173
      %p175 = scmp.ne.s32.totalorder %s163, %s164
      %p176 = scmp.eq.s32.totalorder %s28, 1
      %p177 = por %p175, %p176
      %p179 = scmp.ne.s32.totalorder %s164, %s178
      %p180 = scmp.eq.s32.totalorder %s28, 0
      %p181 = por %p179, %p180
      %s183 = sadd.s32 %s182, 1
      %p186 = scmp.eq.s32.totalorder %s22, 1
      %p187 = scmp.ne.s32.totalorder %s182, %s184
      %p188 = scmp.eq.s32.totalorder %s22, 0
      %p189 = por %p187, %p188
      %p190 = scmp.ne.s32.totalorder %s182, %s184
      %p191 = scmp.eq.s32.totalorder %s27, 1
      %p192 = por %p190, %p191
      %p193 = scmp.ne.s32.totalorder %s184, %s185
      %p194 = scmp.eq.s32.totalorder %s27, 0
      %p195 = por %p193, %p194
      %p196 = scmp.ne.s32.totalorder %s184, %s185
      %p197 = scmp.eq.s32.totalorder %s28, 1
      %p198 = por %p196, %p197
      %p200 = scmp.ne.s32.totalorder %s185, %s199
      %p201 = scmp.eq.s32.totalorder %s28, 0
      %p202 = por %p200, %p201
      %s204 = sadd.s32 %s203, 1
      %p207 = scmp.eq.s32.totalorder %s22, 1
      %p208 = scmp.ne.s32.totalorder %s203, %s205
      %p209 = scmp.eq.s32.totalorder %s22, 0
      %p210 = por %p208, %p209
      %p211 = scmp.ne.s32.totalorder %s203, %s205
      %p212 = scmp.eq.s32.totalorder %s27, 1
      %p213 = por %p211, %p212
      %p214 = scmp.ne.s32.totalorder %s205, %s206
      %p215 = scmp.eq.s32.totalorder %s27, 0
      %p216 = por %p214, %p215
      %p217 = scmp.ne.s32.totalorder %s205, %s206
      %p218 = scmp.eq.s32.totalorder %s28, 1
      %p219 = por %p217, %p218
      %p221 = scmp.ne.s32.totalorder %s206, %s220
      %p222 = scmp.eq.s32.totalorder %s28, 0
      %p223 = por %p221, %p222
      %s225 = sadd.s32 %s224, 1
      %p228 = scmp.eq.s32.totalorder %s22, 1
      %p229 = scmp.ne.s32.totalorder %s224, %s226
      %p230 = scmp.eq.s32.totalorder %s22, 0
      %p231 = por %p229, %p230
      %p232 = scmp.ne.s32.totalorder %s224, %s226
      %p233 = scmp.eq.s32.totalorder %s27, 1
      %p234 = por %p232, %p233
      %p235 = scmp.ne.s32.totalorder %s226, %s227
      %p236 = scmp.eq.s32.totalorder %s27, 0
      %p237 = por %p235, %p236
      %p238 = scmp.ne.s32.totalorder %s226, %s227
      %p239 = scmp.eq.s32.totalorder %s28, 1
      %p240 = por %p238, %p239
      %p242 = scmp.ne.s32.totalorder %s227, %s241
      %p243 = scmp.eq.s32.totalorder %s28, 0
      %p244 = por %p242, %p243
      %s246 = sadd.s32 %s245, 1
      %p249 = scmp.eq.s32.totalorder %s22, 1
      %p250 = scmp.ne.s32.totalorder %s245, %s247
      %p251 = scmp.eq.s32.totalorder %s22, 0
      %p252 = por %p250, %p251
      %p253 = scmp.ne.s32.totalorder %s245, %s247
      %p254 = scmp.eq.s32.totalorder %s27, 1
      %p255 = por %p253, %p254
      %p256 = scmp.ne.s32.totalorder %s247, %s248
      %p257 = scmp.eq.s32.totalorder %s27, 0
      %p258 = por %p256, %p257
      %p259 = scmp.ne.s32.totalorder %s247, %s248
      %p260 = scmp.eq.s32.totalorder %s28, 1
      %p261 = por %p259, %p260
      %p263 = scmp.ne.s32.totalorder %s248, %s262
      %p264 = scmp.eq.s32.totalorder %s28, 0
      %p265 = por %p263, %p264
      %s267 = sadd.s32 %s266, 1
      %p270 = scmp.eq.s32.totalorder %s22, 1
      %p271 = scmp.ne.s32.totalorder %s266, %s268
      %p272 = scmp.eq.s32.totalorder %s22, 0
      %p273 = por %p271, %p272
      %p274 = scmp.ne.s32.totalorder %s266, %s268
      %p275 = scmp.eq.s32.totalorder %s27, 1
      %p276 = por %p274, %p275
      %p277 = scmp.ne.s32.totalorder %s268, %s269
      %p278 = scmp.eq.s32.totalorder %s27, 0
      %p279 = por %p277, %p278
      %p280 = scmp.ne.s32.totalorder %s268, %s269
      %p281 = scmp.eq.s32.totalorder %s28, 1
      %p282 = por %p280, %p281
      %p284 = scmp.ne.s32.totalorder %s269, %s283
      %p285 = scmp.eq.s32.totalorder %s28, 0
      %p286 = por %p284, %p285
      %s288 = sadd.s32 %s287, 1
      %p291 = scmp.eq.s32.totalorder %s22, 1
      %p292 = scmp.ne.s32.totalorder %s287, %s289
      %p293 = scmp.eq.s32.totalorder %s22, 0
      %p294 = por %p292, %p293
      %p295 = scmp.ne.s32.totalorder %s287, %s289
      %p296 = scmp.eq.s32.totalorder %s27, 1
      %p297 = por %p295, %p296
      %p298 = scmp.ne.s32.totalorder %s289, %s290
      %p299 = scmp.eq.s32.totalorder %s27, 0
      %p300 = por %p298, %p299
      %p301 = scmp.ne.s32.totalorder %s289, %s290
      %p302 = scmp.eq.s32.totalorder %s28, 1
      %p303 = por %p301, %p302
      %p305 = scmp.ne.s32.totalorder %s290, %s304
      %p306 = scmp.eq.s32.totalorder %s28, 0
      %p307 = por %p305, %p306
      %s308 = ssub.s32 %s22, %s29
      %p309 = scmp.eq.s32.totalorder %s308, 0
      %s311 = sadd.s32 %s310, 1
      %s312 = scalar_select %p309, %s310, %s311
      %p315 = pneg %p309
      %p316 = scmp.eq.s32.totalorder %s22, 1
      %p317 = por %p315, %p316
      %p318 = scmp.ne.s32.totalorder %s310, %s313
      %p319 = scmp.eq.s32.totalorder %s22, 0
      %p320 = por %p318, %p319
      %p321 = scmp.ne.s32.totalorder %s310, %s313
      %p322 = scmp.eq.s32.totalorder %s27, 1
      %p323 = por %p321, %p322
      %p324 = scmp.ne.s32.totalorder %s313, %s314
      %p325 = scmp.eq.s32.totalorder %s27, 0
      %p326 = por %p324, %p325
      %p327 = scmp.ne.s32.totalorder %s313, %s314
      %p328 = scmp.eq.s32.totalorder %s28, 1
      %p329 = por %p327, %p328
      %p331 = scmp.ne.s32.totalorder %s314, %s330
      %p332 = scmp.eq.s32.totalorder %s28, 0
      %p333 = por %p331, %p332
      %p334 = scmp.le.s32.totalorder 1, %s22
      %p335 = scmp.lt.s32.totalorder %s22, 3
      %p336 = pnand %p334, %p335
      %p337 = pneg %p336
      // Predicated region
      $region9: #{lenet_forward.1} parent=5 // pred_check
        _
      $region10: #{lenet_forward.1} parent=5 // pred_check_branch
        %339 = sbr.rel (%p336) target = $region12
      $region11: #{lenet_forward.1} parent=5 // pred_region
        %s340 = ssub.s32 %s22, 1
        // Predicated region
        $region13: #{lenet_forward.1} parent=11 // pred_check
          %p341 = pneg %p69
        $region14: #{lenet_forward.1} parent=11 // pred_check_branch
          %343 = sbr.rel (%p341) target = $region16
        $region15: #{lenet_forward.1} parent=11 // pred_region
          _
        $region16: #{lenet_forward.1} parent=11 // pred_fallthru
          _
        // Predicated region
        $region17: #{lenet_forward.1} parent=11 // pred_check
          %p344 = pneg %p90
        $region18: #{lenet_forward.1} parent=11 // pred_check_branch
          %346 = sbr.rel (%p344) target = $region20
        $region19: #{lenet_forward.1} parent=11 // pred_region
          _
        $region20: #{lenet_forward.1} parent=11 // pred_fallthru
          _
        // Predicated region
        $region21: #{lenet_forward.1} parent=11 // pred_check
          %p347 = pneg %p111
        $region22: #{lenet_forward.1} parent=11 // pred_check_branch
          %349 = sbr.rel (%p347) target = $region24
        $region23: #{lenet_forward.1} parent=11 // pred_region
          _
        $region24: #{lenet_forward.1} parent=11 // pred_fallthru
          _
        // Predicated region
        $region25: #{lenet_forward.1} parent=11 // pred_check
          %p350 = pneg %p132
        $region26: #{lenet_forward.1} parent=11 // pred_check_branch
          %352 = sbr.rel (%p350) target = $region28
        $region27: #{lenet_forward.1} parent=11 // pred_region
          _
        $region28: #{lenet_forward.1} parent=11 // pred_fallthru
          _
        // Predicated region
        $region29: #{lenet_forward.1} parent=11 // pred_check
          %p353 = pneg %p153
        $region30: #{lenet_forward.1} parent=11 // pred_check_branch
          %355 = sbr.rel (%p353) target = $region32
        $region31: #{lenet_forward.1} parent=11 // pred_region
          _
        $region32: #{lenet_forward.1} parent=11 // pred_fallthru
          _
        // Predicated region
        $region33: #{lenet_forward.1} parent=11 // pred_check
          %p356 = pneg %p174
        $region34: #{lenet_forward.1} parent=11 // pred_check_branch
          %358 = sbr.rel (%p356) target = $region36
        $region35: #{lenet_forward.1} parent=11 // pred_region
          _
        $region36: #{lenet_forward.1} parent=11 // pred_fallthru
          _
        // Predicated region
        $region37: #{lenet_forward.1} parent=11 // pred_check
          %p359 = pneg %p195
        $region38: #{lenet_forward.1} parent=11 // pred_check_branch
          %361 = sbr.rel (%p359) target = $region40
        $region39: #{lenet_forward.1} parent=11 // pred_region
          _
        $region40: #{lenet_forward.1} parent=11 // pred_fallthru
          _
        // Predicated region
        $region41: #{lenet_forward.1} parent=11 // pred_check
          %p362 = pneg %p216
        $region42: #{lenet_forward.1} parent=11 // pred_check_branch
          %364 = sbr.rel (%p362) target = $region44
        $region43: #{lenet_forward.1} parent=11 // pred_region
          _
        $region44: #{lenet_forward.1} parent=11 // pred_fallthru
          _
        // Predicated region
        $region45: #{lenet_forward.1} parent=11 // pred_check
          %p365 = pneg %p237
        $region46: #{lenet_forward.1} parent=11 // pred_check_branch
          %367 = sbr.rel (%p365) target = $region48
        $region47: #{lenet_forward.1} parent=11 // pred_region
          _
        $region48: #{lenet_forward.1} parent=11 // pred_fallthru
          _
        // Predicated region
        $region49: #{lenet_forward.1} parent=11 // pred_check
          %p368 = pneg %p258
        $region50: #{lenet_forward.1} parent=11 // pred_check_branch
          %370 = sbr.rel (%p368) target = $region52
        $region51: #{lenet_forward.1} parent=11 // pred_region
          _
        $region52: #{lenet_forward.1} parent=11 // pred_fallthru
          _
        // Predicated region
        $region53: #{lenet_forward.1} parent=11 // pred_check
          %p371 = pneg %p279
        $region54: #{lenet_forward.1} parent=11 // pred_check_branch
          %373 = sbr.rel (%p371) target = $region56
        $region55: #{lenet_forward.1} parent=11 // pred_region
          _
        $region56: #{lenet_forward.1} parent=11 // pred_fallthru
          _
        // Predicated region
        $region57: #{lenet_forward.1} parent=11 // pred_check
          %p374 = pneg %p300
        $region58: #{lenet_forward.1} parent=11 // pred_check_branch
          %376 = sbr.rel (%p374) target = $region60
        $region59: #{lenet_forward.1} parent=11 // pred_region
          _
        $region60: #{lenet_forward.1} parent=11 // pred_fallthru
          _
      $region12: #{lenet_forward.1} parent=5 // pred_fallthru
        _
      %p377 = scmp.lt.s32.totalorder %s22, 2
      // Predicated region
      $region61: #{lenet_forward.1} parent=5 // pred_check
        %p378 = pneg %p377
      $region62: #{lenet_forward.1} parent=5 // pred_check_branch
        %380 = sbr.rel (%p378) target = $region64
      $region63: #{lenet_forward.1} parent=5 // pred_region
        // Predicated region
        $region65: #{lenet_forward.1} parent=63 // pred_check
          %p381 = pneg %p42
        $region66: #{lenet_forward.1} parent=63 // pred_check_branch
          %383 = sbr.rel (%p381) target = $region68
        $region67: #{lenet_forward.1} parent=63 // pred_region
          %s384 = smul.u32 8, %s22
          %p385 = scmp.lt.s32.totalorder %s384, 15
          %s386 = scalar_select %p385, %s384, 15
          %s387 = smul.addr %s386, 4
          %s388 = smul.addr %s387, 8
          %s389 = scalar_lea.vmem %s0, %s388
          %s390 = smul.u32 8, %s22
        $region68: #{lenet_forward.1} parent=63 // pred_fallthru
          _
      $region64: #{lenet_forward.1} parent=5 // pred_fallthru
        _
      %p391 = scmp.le.s32.totalorder 1, %s22
      %p392 = scmp.lt.s32.totalorder %s22, 3
      %p393 = pnand %p391, %p392
      %p394 = pneg %p393
      // Predicated region
      $region69: #{lenet_forward.1} parent=5 // pred_check
        _
      $region70: #{lenet_forward.1} parent=5 // pred_check_branch
        %396 = sbr.rel (%p393) target = $region72
      $region71: #{lenet_forward.1} parent=5 // pred_region
        %s397 = ssub.s32 %s22, 1
        %s398 = smul.u32 8, %s27
        %p399 = scmp.lt.s32.totalorder %s398, 15
        %s400 = scalar_select %p399, %s398, 15
        %s401 = smul.addr %s400, 4
        %s402 = smul.addr %s401, 8
        %s403 = scalar_lea.vmem %s0, %s402
        %p404 = pneg %p48
        %p405 = pneg %p45
        %p406 = pneg %p69
        %p407 = pneg %p66
        %p408 = pneg %p90
        %p409 = pneg %p87
        %p410 = pneg %p111
        %p411 = pneg %p108
        %p412 = pneg %p132
        %p413 = pneg %p129
        %p414 = pneg %p153
        %p415 = pneg %p150
        %p416 = pneg %p174
        %p417 = pneg %p171
        %p418 = pneg %p195
        %p419 = pneg %p192
        %p420 = pneg %p216
        %p421 = pneg %p213
        %p422 = pneg %p237
        %p423 = pneg %p234
        %p424 = pneg %p258
        %p425 = pneg %p255
        %p426 = pneg %p279
        %p427 = pneg %p276
        %p428 = pneg %p300
        %p429 = pneg %p297
        %p430 = pneg %p326
        %p431 = pneg %p323
        %s432 = sand.u32 %s313, 1
        %s433 = scalar_lea.sflag [#allocation8], %s432
        %s434 = sand.u32 %s313, 1
        %s435 = smul.addr %s434, 8
        %s436 = scalar_lea.vmem [#allocation7], %s435
        %s437 = smul.u32 8, %s27
        %p438 = scmp.lt.s32.totalorder %s437, 15
        %s439 = scalar_select %p438, %s437, 15
        %s440 = smul.addr %s439, 4
        %s441 = smul.addr %s440, 8
        %s442 = scalar_lea.vmem %s0, %s441
        %s443 = smul.u32 8, %s27
        %vm445 = vcmask 228352
        %446 = vst.msk [vmem:[#allocation2] sm:$0xff] %vm445, 0.0
        %447 = vst.msk [vmem:[#allocation2 + $0x8] sm:$0xff] %vm445, 0.0
        %448 = vst.msk [vmem:[#allocation2 + $0x10] sm:$0xff] %vm445, 0.0
        %449 = vst.msk [vmem:[#allocation2 + $0x18] sm:$0xff] %vm445, 0.0
        %450 = vst.msk [vmem:[#allocation2 + $0x20] sm:$0xff] %vm445, 0.0
        %451 = vst.msk [vmem:[#allocation2 + $0x28] sm:$0xff] %vm445, 0.0
        %452 = vst.msk [vmem:[#allocation2 + $0x30] sm:$0xff] %vm445, 0.0
        %453 = vst.msk [vmem:[#allocation2 + $0x38] sm:$0xff] %vm445, 0.0
        %454 = vst.msk [vmem:[#allocation2 + $0x40] sm:$0xff] %vm445, 0.0
        %455 = vst.msk [vmem:[#allocation2 + $0x48] sm:$0xff] %vm445, 0.0
        %456 = vst.msk [vmem:[#allocation2 + $0x50] sm:$0xff] %vm445, 0.0
        %457 = vst.msk [vmem:[#allocation2 + $0x58] sm:$0xff] %vm445, 0.0
        %458 = vst.msk [vmem:[#allocation2 + $0x60] sm:$0xff] %vm445, 0.0
        %459 = vst.msk [vmem:[#allocation2 + $0x68] sm:$0xff] %vm445, 0.0
        %460 = vst.msk [vmem:[#allocation2 + $0x70] sm:$0xff] %vm445, 0.0
        %461 = vst.msk [vmem:[#allocation2 + $0x78] sm:$0xff] %vm445, 0.0
        %462 = vst.msk [vmem:[#allocation2 + $0x80] sm:$0xff] %vm445, 0.0
        %463 = vst.msk [vmem:[#allocation2 + $0x88] sm:$0xff] %vm445, 0.0
        %464 = vst.msk [vmem:[#allocation2 + $0x90] sm:$0xff] %vm445, 0.0
        %465 = vst.msk [vmem:[#allocation2 + $0x98] sm:$0xff] %vm445, 0.0
        %466 = vst.msk [vmem:[#allocation2 + $0xa0] sm:$0xff] %vm445, 0.0
        %467 = vst.msk [vmem:[#allocation2 + $0xa8] sm:$0xff] %vm445, 0.0
        %468 = vst.msk [vmem:[#allocation2 + $0xb0] sm:$0xff] %vm445, 0.0
        %469 = vst.msk [vmem:[#allocation2 + $0xb8] sm:$0xff] %vm445, 0.0
        %470 = vst.msk [vmem:[#allocation2 + $0xc0] sm:$0xff] %vm445, 0.0
        %471 = vst.msk [vmem:[#allocation2 + $0xc8] sm:$0xff] %vm445, 0.0
        %472 = vst.msk [vmem:[#allocation2 + $0xd0] sm:$0xff] %vm445, 0.0
        %473 = vst.msk [vmem:[#allocation2 + $0xd8] sm:$0xff] %vm445, 0.0
        %474 = vst.msk [vmem:[#allocation2 + $0xe0] sm:$0xff] %vm445, 0.0
        %475 = vst.msk [vmem:[#allocation2 + $0xe8] sm:$0xff] %vm445, 0.0
        %476 = vst.msk [vmem:[#allocation2 + $0xf0] sm:$0xff] %vm445, 0.0
        %477 = vst.msk [vmem:[#allocation2 + $0xf8] sm:$0xff] %vm445, 0.0
        %478 = vst.msk [vmem:[#allocation2 + $0x100] sm:$0xff] %vm445, 0.0
        %v479 = vld [vmem:[%s442] sm:$0xff]
        %v480 = vld [vmem:[%s442 + $0x8] sm:$0xff]
        %v481 = vld [vmem:[%s442 + $0x10] sm:$0xff]
        %v482 = vld [vmem:[%s442 + $0x18] sm:$0xf]
        %483 = vst.msk [vmem:[#allocation2 + $0x2] sm:$0xff] %vm445, %v479
        %484 = vst.msk [vmem:[#allocation2 + $0xa] sm:$0xff] %vm445, %v480
        %485 = vst.msk [vmem:[#allocation2 + $0x12] sm:$0xff] %vm445, %v481
        %vm486 = vcmask 224256
        %487 = vst.msk [vmem:[#allocation2 + $0x1a] sm:$0xf] %vm486, %v482
        %s488 = scalar_lea.vmem %s442, 32
        %v489 = vld [vmem:[%s488] sm:$0xff]
        %v490 = vld [vmem:[%s488 + $0x8] sm:$0xff]
        %v491 = vld [vmem:[%s488 + $0x10] sm:$0xff]
        %v492 = vld [vmem:[%s488 + $0x18] sm:$0xf]
        %493 = vst.msk [vmem:[#allocation2 + $0x22] sm:$0xff] %vm445, %v489
        %494 = vst.msk [vmem:[#allocation2 + $0x2a] sm:$0xff] %vm445, %v490
        %495 = vst.msk [vmem:[#allocation2 + $0x32] sm:$0xff] %vm445, %v491
        %496 = vst.msk [vmem:[#allocation2 + $0x3a] sm:$0xf] %vm486, %v492
        %s497 = scalar_lea.vmem %s442, 64
        %v498 = vld [vmem:[%s497] sm:$0xff]
        %v499 = vld [vmem:[%s497 + $0x8] sm:$0xff]
        %v500 = vld [vmem:[%s497 + $0x10] sm:$0xff]
        %v501 = vld [vmem:[%s497 + $0x18] sm:$0xf]
        %502 = vst.msk [vmem:[#allocation2 + $0x42] sm:$0xff] %vm445, %v498
        %503 = vst.msk [vmem:[#allocation2 + $0x4a] sm:$0xff] %vm445, %v499
        %504 = vst.msk [vmem:[#allocation2 + $0x52] sm:$0xff] %vm445, %v500
        %505 = vst.msk [vmem:[#allocation2 + $0x5a] sm:$0xf] %vm486, %v501
        %s506 = scalar_lea.vmem %s442, 96
        %v507 = vld [vmem:[%s506] sm:$0xff]
        %v508 = vld [vmem:[%s506 + $0x8] sm:$0xff]
        %v509 = vld [vmem:[%s506 + $0x10] sm:$0xff]
        %v510 = vld [vmem:[%s506 + $0x18] sm:$0xf]
        %511 = vst.msk [vmem:[#allocation2 + $0x62] sm:$0xff] %vm445, %v507
        %512 = vst.msk [vmem:[#allocation2 + $0x6a] sm:$0xff] %vm445, %v508
        %513 = vst.msk [vmem:[#allocation2 + $0x72] sm:$0xff] %vm445, %v509
        %514 = vst.msk [vmem:[#allocation2 + $0x7a] sm:$0xf] %vm486, %v510
        %s515 = scalar_lea.vmem %s442, 128
        %v516 = vld [vmem:[%s515] sm:$0xff]
        %v517 = vld [vmem:[%s515 + $0x8] sm:$0xff]
        %v518 = vld [vmem:[%s515 + $0x10] sm:$0xff]
        %v519 = vld [vmem:[%s515 + $0x18] sm:$0xf]
        %520 = vst.msk [vmem:[#allocation2 + $0x82] sm:$0xff] %vm445, %v516
        %521 = vst.msk [vmem:[#allocation2 + $0x8a] sm:$0xff] %vm445, %v517
        %522 = vst.msk [vmem:[#allocation2 + $0x92] sm:$0xff] %vm445, %v518
        %523 = vst.msk [vmem:[#allocation2 + $0x9a] sm:$0xf] %vm486, %v519
        %s524 = scalar_lea.vmem %s442, 160
        %v525 = vld [vmem:[%s524] sm:$0xff]
        %v526 = vld [vmem:[%s524 + $0x8] sm:$0xff]
        %v527 = vld [vmem:[%s524 + $0x10] sm:$0xff]
        %v528 = vld [vmem:[%s524 + $0x18] sm:$0xf]
        %529 = vst.msk [vmem:[#allocation2 + $0xa2] sm:$0xff] %vm445, %v525
        %530 = vst.msk [vmem:[#allocation2 + $0xaa] sm:$0xff] %vm445, %v526
        %531 = vst.msk [vmem:[#allocation2 + $0xb2] sm:$0xff] %vm445, %v527
        %532 = vst.msk [vmem:[#allocation2 + $0xba] sm:$0xf] %vm486, %v528
        %s533 = scalar_lea.vmem %s442, 192
        %v534 = vld [vmem:[%s533] sm:$0xff]
        %v535 = vld [vmem:[%s533 + $0x8] sm:$0xff]
        %v536 = vld [vmem:[%s533 + $0x10] sm:$0xff]
        %v537 = vld [vmem:[%s533 + $0x18] sm:$0xf]
        %538 = vst.msk [vmem:[#allocation2 + $0xc2] sm:$0xff] %vm445, %v534
        %539 = vst.msk [vmem:[#allocation2 + $0xca] sm:$0xff] %vm445, %v535
        %540 = vst.msk [vmem:[#allocation2 + $0xd2] sm:$0xff] %vm445, %v536
        %541 = vst.msk [vmem:[#allocation2 + $0xda] sm:$0xf] %vm486, %v537
        %s542 = scalar_lea.vmem %s442, 224
        %v543 = vld [vmem:[%s542] sm:$0xff]
        %v544 = vld [vmem:[%s542 + $0x8] sm:$0xff]
        %v545 = vld [vmem:[%s542 + $0x10] sm:$0xff]
        %v546 = vld [vmem:[%s542 + $0x18] sm:$0xf]
        %547 = vst.msk [vmem:[#allocation2 + $0xe2] sm:$0xff] %vm445, %v543
        %548 = vst.msk [vmem:[#allocation2 + $0xea] sm:$0xff] %vm445, %v544
        %549 = vst.msk [vmem:[#allocation2 + $0xf2] sm:$0xff] %vm445, %v545
        %550 = vst.msk [vmem:[#allocation2 + $0xfa] sm:$0xf] %vm486, %v546
        %v551 = vld [vmem:[#allocation2] sm:$0xff]
        %v552 = vld [vmem:[#allocation2 + $0x8] sm:$0xff]
        %v553 = vld [vmem:[#allocation2 + $0x10] sm:$0xff]
        %v554 = vld [vmem:[#allocation2 + $0x18] sm:$0xff]
        %v555 = vld [vmem:[#allocation2 + $0x20] sm:$0xff]
        %v556 = vld [vmem:[#allocation2 + $0x28] sm:$0xff]
        %v557 = vld [vmem:[#allocation2 + $0x30] sm:$0xff]
        %v558 = vld [vmem:[#allocation2 + $0x38] sm:$0xff]
        %v559 = vld [vmem:[#allocation2 + $0x40] sm:$0xff]
        %v560 = vld [vmem:[#allocation2 + $0x48] sm:$0xff]
        %v561 = vld [vmem:[#allocation2 + $0x50] sm:$0xff]
        %v562 = vld [vmem:[#allocation2 + $0x58] sm:$0xff]
        %v563 = vld [vmem:[#allocation2 + $0x60] sm:$0xff]
        %v564 = vld [vmem:[#allocation2 + $0x68] sm:$0xff]
        %v565 = vld [vmem:[#allocation2 + $0x70] sm:$0xff]
        %v566 = vld [vmem:[#allocation2 + $0x78] sm:$0xff]
        %v567 = vld [vmem:[#allocation2 + $0x80] sm:$0xff]
        %v568 = vld [vmem:[#allocation2 + $0x88] sm:$0xff]
        %v569 = vld [vmem:[#allocation2 + $0x90] sm:$0xff]
        %v570 = vld [vmem:[#allocation2 + $0x98] sm:$0xff]
        %v571 = vld [vmem:[#allocation2 + $0xa0] sm:$0xff]
        %v572 = vld [vmem:[#allocation2 + $0xa8] sm:$0xff]
        %v573 = vld [vmem:[#allocation2 + $0xb0] sm:$0xff]
        %v574 = vld [vmem:[#allocation2 + $0xb8] sm:$0xff]
        %v575 = vld [vmem:[#allocation2 + $0xc0] sm:$0xff]
        %v576 = vld [vmem:[#allocation2 + $0xc8] sm:$0xff]
        %v577 = vld [vmem:[#allocation2 + $0xd0] sm:$0xff]
        %v578 = vld [vmem:[#allocation2 + $0xd8] sm:$0xff]
        %v579 = vld [vmem:[#allocation2 + $0xe0] sm:$0xff]
        %v580 = vld [vmem:[#allocation2 + $0xe8] sm:$0xff]
        %v581 = vld [vmem:[#allocation2 + $0xf0] sm:$0xff]
        %v582 = vld [vmem:[#allocation2 + $0xf8] sm:$0xff]
        %v583 = vpack.c.bf16 %v552, %v551
        %v584 = vpack.c.bf16 %v554, %v553
        %v585 = vpack.c.bf16 %v556, %v555
        %v586 = vpack.c.bf16 %v558, %v557
        %v587 = vpack.c.bf16 %v560, %v559
        %v588 = vpack.c.bf16 %v562, %v561
        %v589 = vpack.c.bf16 %v564, %v563
        %v590 = vpack.c.bf16 %v566, %v565
        %v591 = vpack.c.bf16 %v568, %v567
        %v592 = vpack.c.bf16 %v570, %v569
        %v593 = vpack.c.bf16 %v572, %v571
        %v594 = vpack.c.bf16 %v574, %v573
        %v595 = vpack.c.bf16 %v576, %v575
        %v596 = vpack.c.bf16 %v578, %v577
        %v597 = vpack.c.bf16 %v580, %v579
        %v598 = vpack.c.bf16 %v582, %v581
        %v599 = vld [vmem:[%s1] sm:$0xff]
        %v600 = vld [vmem:[%s1 + $0x8] sm:$0xff]
        %v601 = vld [vmem:[%s1 + $0x10] sm:$0xff]
        %v602 = vld [vmem:[%s1 + $0x18] sm:$0x33]
        %v603 = vld [vmem:[#allocation2 + $0x1] sm:$0xff]
        %v604 = vld [vmem:[#allocation2 + $0x9] sm:$0xff]
        %v605 = vld [vmem:[#allocation2 + $0x11] sm:$0xff]
        %v606 = vld [vmem:[#allocation2 + $0x19] sm:$0xff]
        %v607 = vld [vmem:[#allocation2 + $0x21] sm:$0xff]
        %v608 = vld [vmem:[#allocation2 + $0x29] sm:$0xff]
        %v609 = vld [vmem:[#allocation2 + $0x31] sm:$0xff]
        %v610 = vld [vmem:[#allocation2 + $0x39] sm:$0xff]
        %v611 = vld [vmem:[#allocation2 + $0x41] sm:$0xff]
        %v612 = vld [vmem:[#allocation2 + $0x49] sm:$0xff]
        %v613 = vld [vmem:[#allocation2 + $0x51] sm:$0xff]
        %v614 = vld [vmem:[#allocation2 + $0x59] sm:$0xff]
        %v615 = vld [vmem:[#allocation2 + $0x61] sm:$0xff]
        %v616 = vld [vmem:[#allocation2 + $0x69] sm:$0xff]
        %v617 = vld [vmem:[#allocation2 + $0x71] sm:$0xff]
        %v618 = vld [vmem:[#allocation2 + $0x79] sm:$0xff]
        %v619 = vld [vmem:[#allocation2 + $0x81] sm:$0xff]
        %v620 = vld [vmem:[#allocation2 + $0x89] sm:$0xff]
        %v621 = vld [vmem:[#allocation2 + $0x91] sm:$0xff]
        %v622 = vld [vmem:[#allocation2 + $0x99] sm:$0xff]
        %v623 = vld [vmem:[#allocation2 + $0xa1] sm:$0xff]
        %v624 = vld [vmem:[#allocation2 + $0xa9] sm:$0xff]
        %v625 = vld [vmem:[#allocation2 + $0xb1] sm:$0xff]
        %v626 = vld [vmem:[#allocation2 + $0xb9] sm:$0xff]
        %v627 = vld [vmem:[#allocation2 + $0xc1] sm:$0xff]
        %v628 = vld [vmem:[#allocation2 + $0xc9] sm:$0xff]
        %v629 = vld [vmem:[#allocation2 + $0xd1] sm:$0xff]
        %v630 = vld [vmem:[#allocation2 + $0xd9] sm:$0xff]
        %v631 = vld [vmem:[#allocation2 + $0xe1] sm:$0xff]
        %v632 = vld [vmem:[#allocation2 + $0xe9] sm:$0xff]
        %v633 = vld [vmem:[#allocation2 + $0xf1] sm:$0xff]
        %v634 = vld [vmem:[#allocation2 + $0xf9] sm:$0xff]
        %v635 = vpack.c.bf16 %v604, %v603
        %v636 = vpack.c.bf16 %v606, %v605
        %v637 = vpack.c.bf16 %v608, %v607
        %v638 = vpack.c.bf16 %v610, %v609
        %v639 = vpack.c.bf16 %v612, %v611
        %v640 = vpack.c.bf16 %v614, %v613
        %v641 = vpack.c.bf16 %v616, %v615
        %v642 = vpack.c.bf16 %v618, %v617
        %v643 = vpack.c.bf16 %v620, %v619
        %v644 = vpack.c.bf16 %v622, %v621
        %v645 = vpack.c.bf16 %v624, %v623
        %v646 = vpack.c.bf16 %v626, %v625
        %v647 = vpack.c.bf16 %v628, %v627
        %v648 = vpack.c.bf16 %v630, %v629
        %v649 = vpack.c.bf16 %v632, %v631
        %v650 = vpack.c.bf16 %v634, %v633
        %s651 = scalar_lea.vmem %s1, 32
        %v652 = vld [vmem:[%s651] sm:$0xff]
        %v653 = vld [vmem:[%s651 + $0x8] sm:$0xff]
        %v654 = vld [vmem:[%s651 + $0x10] sm:$0xff]
        %v655 = vld [vmem:[%s651 + $0x18] sm:$0x33]
        %v660 = vunpack.c.l.b16 %v652
        %v661 = vunpack.c.h.b16 %v652
        %v662 = vunpack.c.l.b16 %v653
        %v663 = vunpack.c.h.b16 %v653
        %v664 = vunpack.c.l.b16 %v654
        %v665 = vunpack.c.h.b16 %v654
        %v666 = vunpack.c.l.b16 %v655
        %v667 = vunpack.c.h.b16 %v655
        %v668 = vpack.c.b16 %v662, %v660
        %v669 = vpack.c.b16 %v663, %v661
        %v670 = vpack.c.b16 %v666, %v664
        %v671 = vpack.c.b16 %v667, %v665
        %v675 = vsel %vm445, %v635, 0
        %v678 = vsel %vm445, %v636, 0
        %v681 = vsel %vm445, %v637, 0
        %v684 = vsel %vm445, %v638, 0
        %v687 = vsel %vm445, %v639, 0
        %v690 = vsel %vm445, %v640, 0
        %v693 = vsel %vm445, %v641, 0
        %v696 = vsel %vm445, %v642, 0
        %v699 = vsel %vm445, %v643, 0
        %v702 = vsel %vm445, %v644, 0
        %v705 = vsel %vm445, %v645, 0
        %v708 = vsel %vm445, %v646, 0
        %v711 = vsel %vm445, %v647, 0
        %v714 = vsel %vm445, %v648, 0
        %v717 = vsel %vm445, %v649, 0
        %v720 = vsel %vm445, %v650, 0
        %vm722 = vcmask 1045504
        %v724 = vsel %vm722, %v670, 0
        %v727 = vsel %vm722, %v671, 0
        %729 = vmatprep.subr.bf16.mxu0 %v669
        %730 = vmatpush1.bf16.msra.mxu0 %v668
        %731 = vmatprep.subr.bf16.mxu0 %v727
        %732 = vmatpush1.bf16.msra.mxu0 %v724
        %733 = vmatprep.subr.bf16.mxu0 0
        %734 = vmatpush1.bf16.msra.mxu0 0
        %735 = vmatprep.subr.bf16.mxu0 0
        %736 = vmatpush1.bf16.msra.mxu0 0
        %737 = vmatprep.subr.bf16.mxu0 0
        %738 = vmatpush1.bf16.msra.mxu0 0
        %739 = vmatprep.subr.bf16.mxu0 0
        %740 = vmatpush1.bf16.msra.mxu0 0
        %741 = vmatprep.subr.bf16.mxu0 0
        %742 = vmatpush1.bf16.msra.mxu0 0
        %743 = vmatprep.subr.bf16.mxu0 0
        %744 = vmatpush1.bf16.msra.mxu0 0
        %745 = vmatprep.subr.bf16.mxu0 0
        %746 = vmatpush1.bf16.msra.mxu0 0
        %747 = vmatprep.subr.bf16.mxu0 0
        %748 = vmatpush1.bf16.msra.mxu0 0
        %749 = vmatprep.subr.bf16.mxu0 0
        %750 = vmatpush1.bf16.msra.mxu0 0
        %751 = vmatprep.subr.bf16.mxu0 0
        %752 = vmatpush1.bf16.msra.mxu0 0
        %753 = vmatprep.subr.bf16.mxu0 0
        %754 = vmatpush1.bf16.msra.mxu0 0
        %755 = vmatprep.subr.bf16.mxu0 0
        %756 = vmatpush1.bf16.msra.mxu0 0
        %757 = vmatprep.subr.bf16.mxu0 0
        %758 = vmatpush1.bf16.msra.mxu0 0
        %759 = vmatprep.subr.bf16.mxu0 0
        %760 = vmatpush1.bf16.msra.mxu0 0
        %761 = vmatprep.mubr.bf16.mxu0 0
        %762 = vmatmul.mubr.bf16.gmra.mrb[0].mxu0 %v675
        %v763 = vpop.f32.mrb[0].mxu0
        %v764 = vadd.f32 0.0, %v763
        %v765 = vpop.f32.mrb[0].mxu0
        %v766 = vadd.f32 0.0, %v765
        %v767 = vpop.f32.mrb[0].mxu0
        %v768 = vadd.f32 0.0, %v767
        %v769 = vpop.f32.mrb[0].mxu0
        %v770 = vadd.f32 0.0, %v769
        %771 = vmatprep.mubr.bf16.mxu0 0
        %772 = vmatmul.mubr.bf16.gmra.mrb[0].mxu0 %v678
        %v773 = vpop.f32.mrb[0].mxu0
        %v774 = vadd.f32 0.0, %v773
        %v775 = vpop.f32.mrb[0].mxu0
        %v776 = vadd.f32 0.0, %v775
        %v777 = vpop.f32.mrb[0].mxu0
        %v778 = vadd.f32 0.0, %v777
        %v779 = vpop.f32.mrb[0].mxu0
        %v780 = vadd.f32 0.0, %v779
        %781 = vmatprep.mubr.bf16.mxu0 0
        %782 = vmatmul.mubr.bf16.gmra.mrb[0].mxu0 %v681
        %v783 = vpop.f32.mrb[0].mxu0
        %v784 = vadd.f32 0.0, %v783
        %v785 = vpop.f32.mrb[0].mxu0
        %v786 = vadd.f32 0.0, %v785
        %v787 = vpop.f32.mrb[0].mxu0
        %v788 = vadd.f32 0.0, %v787
        %v789 = vpop.f32.mrb[0].mxu0
        %v790 = vadd.f32 0.0, %v789
        %791 = vmatprep.mubr.bf16.mxu0 0
        %792 = vmatmul.mubr.bf16.gmra.mrb[0].mxu0 %v684
        %v793 = vpop.f32.mrb[0].mxu0
        %v794 = vadd.f32 0.0, %v793
        %v795 = vpop.f32.mrb[0].mxu0
        %v796 = vadd.f32 0.0, %v795
        %v797 = vpop.f32.mrb[0].mxu0
        %v798 = vadd.f32 0.0, %v797
        %v799 = vpop.f32.mrb[0].mxu0
        %v800 = vadd.f32 0.0, %v799
        %801 = vmatprep.mubr.bf16.mxu0 0
        %802 = vmatmul.mubr.bf16.gmra.mrb[0].mxu0 %v687
        %v803 = vpop.f32.mrb[0].mxu0
        %v804 = vadd.f32 0.0, %v803
        %v805 = vpop.f32.mrb[0].mxu0
        %v806 = vadd.f32 0.0, %v805
        %v807 = vpop.f32.mrb[0].mxu0
        %v808 = vadd.f32 0.0, %v807
        %v809 = vpop.f32.mrb[0].mxu0
        %v810 = vadd.f32 0.0, %v809
        %811 = vmatprep.mubr.bf16.mxu0 0
        %812 = vmatmul.mubr.bf16.gmra.mrb[0].mxu0 %v690
        %v813 = vpop.f32.mrb[0].mxu0
        %v814 = vadd.f32 0.0, %v813
        %v815 = vpop.f32.mrb[0].mxu0
        %v816 = vadd.f32 0.0, %v815
        %v817 = vpop.f32.mrb[0].mxu0
        %v818 = vadd.f32 0.0, %v817
        %v819 = vpop.f32.mrb[0].mxu0
        %v820 = vadd.f32 0.0, %v819
        %821 = vmatprep.mubr.bf16.mxu0 0
        %822 = vmatmul.mubr.bf16.gmra.mrb[0].mxu0 %v693
        %v823 = vpop.f32.mrb[0].mxu0
        %v824 = vadd.f32 0.0, %v823
        %v825 = vpop.f32.mrb[0].mxu0
        %v826 = vadd.f32 0.0, %v825
        %v827 = vpop.f32.mrb[0].mxu0
        %v828 = vadd.f32 0.0, %v827
        %v829 = vpop.f32.mrb[0].mxu0
        %v830 = vadd.f32 0.0, %v829
        %831 = vmatprep.mubr.bf16.mxu0 0
        %832 = vmatmul.mubr.bf16.gmra.mrb[0].mxu0 %v696
        %v833 = vpop.f32.mrb[0].mxu0
        %v834 = vadd.f32 0.0, %v833
        %v835 = vpop.f32.mrb[0].mxu0
        %v836 = vadd.f32 0.0, %v835
        %v837 = vpop.f32.mrb[0].mxu0
        %v838 = vadd.f32 0.0, %v837
        %v839 = vpop.f32.mrb[0].mxu0
        %v840 = vadd.f32 0.0, %v839
        %841 = vmatprep.mubr.bf16.mxu0 0
        %842 = vmatmul.mubr.bf16.gmra.mrb[0].mxu0 %v699
        %v843 = vpop.f32.mrb[0].mxu0
        %v844 = vadd.f32 0.0, %v843
        %v845 = vpop.f32.mrb[0].mxu0
        %v846 = vadd.f32 0.0, %v845
        %v847 = vpop.f32.mrb[0].mxu0
        %v848 = vadd.f32 0.0, %v847
        %v849 = vpop.f32.mrb[0].mxu0
        %v850 = vadd.f32 0.0, %v849
        %851 = vmatprep.mubr.bf16.mxu0 0
        %852 = vmatmul.mubr.bf16.gmra.mrb[0].mxu0 %v702
        %v853 = vpop.f32.mrb[0].mxu0
        %v854 = vadd.f32 0.0, %v853
        %v855 = vpop.f32.mrb[0].mxu0
        %v856 = vadd.f32 0.0, %v855
        %v857 = vpop.f32.mrb[0].mxu0
        %v858 = vadd.f32 0.0, %v857
        %v859 = vpop.f32.mrb[0].mxu0
        %v860 = vadd.f32 0.0, %v859
        %861 = vmatprep.mubr.bf16.mxu0 0
        %862 = vmatmul.mubr.bf16.gmra.mrb[0].mxu0 %v705
        %v863 = vpop.f32.mrb[0].mxu0
        %v864 = vadd.f32 0.0, %v863
        %v865 = vpop.f32.mrb[0].mxu0
        %v866 = vadd.f32 0.0, %v865
        %v867 = vpop.f32.mrb[0].mxu0
        %v868 = vadd.f32 0.0, %v867
        %v869 = vpop.f32.mrb[0].mxu0
        %v870 = vadd.f32 0.0, %v869
        %871 = vmatprep.mubr.bf16.mxu0 0
        %872 = vmatmul.mubr.bf16.gmra.mrb[0].mxu0 %v708
        %v873 = vpop.f32.mrb[0].mxu0
        %v874 = vadd.f32 0.0, %v873
        %v875 = vpop.f32.mrb[0].mxu0
        %v876 = vadd.f32 0.0, %v875
        %v877 = vpop.f32.mrb[0].mxu0
        %v878 = vadd.f32 0.0, %v877
        %v879 = vpop.f32.mrb[0].mxu0
        %v880 = vadd.f32 0.0, %v879
        %881 = vmatprep.mubr.bf16.mxu0 0
        %882 = vmatmul.mubr.bf16.gmra.mrb[0].mxu0 %v711
        %v883 = vpop.f32.mrb[0].mxu0
        %v884 = vadd.f32 0.0, %v883
        %v885 = vpop.f32.mrb[0].mxu0
        %v886 = vadd.f32 0.0, %v885
        %v887 = vpop.f32.mrb[0].mxu0
        %v888 = vadd.f32 0.0, %v887
        %v889 = vpop.f32.mrb[0].mxu0
        %v890 = vadd.f32 0.0, %v889
        %891 = vmatprep.mubr.bf16.mxu0 0
        %892 = vmatmul.mubr.bf16.gmra.mrb[0].mxu0 %v714
        %v893 = vpop.f32.mrb[0].mxu0
        %v894 = vadd.f32 0.0, %v893
        %v895 = vpop.f32.mrb[0].mxu0
        %v896 = vadd.f32 0.0, %v895
        %v897 = vpop.f32.mrb[0].mxu0
        %v898 = vadd.f32 0.0, %v897
        %v899 = vpop.f32.mrb[0].mxu0
        %v900 = vadd.f32 0.0, %v899
        %901 = vmatprep.mubr.bf16.mxu0 0
        %902 = vmatmul.mubr.bf16.gmra.mrb[0].mxu0 %v717
        %v903 = vpop.f32.mrb[0].mxu0
        %v904 = vadd.f32 0.0, %v903
        %v905 = vpop.f32.mrb[0].mxu0
        %v906 = vadd.f32 0.0, %v905
        %v907 = vpop.f32.mrb[0].mxu0
        %v908 = vadd.f32 0.0, %v907
        %v909 = vpop.f32.mrb[0].mxu0
        %v910 = vadd.f32 0.0, %v909
        %911 = vmatprep.mubr.bf16.mxu0 0
        %912 = vmatmul.mubr.bf16.gmra.mrb[0].mxu0 %v720
        %v913 = vpop.f32.mrb[0].mxu0
        %v914 = vadd.f32 0.0, %v913
        %v915 = vpop.f32.mrb[0].mxu0
        %v916 = vadd.f32 0.0, %v915
        %v917 = vpop.f32.mrb[0].mxu0
        %v918 = vadd.f32 0.0, %v917
        %v919 = vpop.f32.mrb[0].mxu0
        %v920 = vadd.f32 0.0, %v919
        %921 = vdwg.mxu0
        %v926 = vunpack.c.l.b16 %v599
        %v927 = vunpack.c.h.b16 %v599
        %v928 = vunpack.c.l.b16 %v600
        %v929 = vunpack.c.h.b16 %v600
        %v930 = vunpack.c.l.b16 %v601
        %v931 = vunpack.c.h.b16 %v601
        %v932 = vunpack.c.l.b16 %v602
        %v933 = vunpack.c.h.b16 %v602
        %v934 = vpack.c.b16 %v928, %v926
        %v935 = vpack.c.b16 %v929, %v927
        %v936 = vpack.c.b16 %v932, %v930
        %v937 = vpack.c.b16 %v933, %v931
        %v941 = vsel %vm445, %v583, 0
        %v944 = vsel %vm445, %v584, 0
        %v947 = vsel %vm445, %v585, 0
        %v950 = vsel %vm445, %v586, 0
        %v953 = vsel %vm445, %v587, 0
        %v956 = vsel %vm445, %v588, 0
        %v959 = vsel %vm445, %v589, 0
        %v962 = vsel %vm445, %v590, 0
        %v965 = vsel %vm445, %v591, 0
        %v968 = vsel %vm445, %v592, 0
        %v971 = vsel %vm445, %v593, 0
        %v974 = vsel %vm445, %v594, 0
        %v977 = vsel %vm445, %v595, 0
        %v980 = vsel %vm445, %v596, 0
        %v983 = vsel %vm445, %v597, 0
        %v986 = vsel %vm445, %v598, 0
        %v989 = vsel %vm722, %v936, 0
        %v992 = vsel %vm722, %v937, 0
        %994 = vmatprep.subr.bf16.mxu0 %v935
        %995 = vmatpush1.bf16.msra.mxu0 %v934
        %996 = vmatprep.subr.bf16.mxu0 %v992
        %997 = vmatpush1.bf16.msra.mxu0 %v989
        %998 = vmatprep.subr.bf16.mxu0 0
        %999 = vmatpush1.bf16.msra.mxu0 0
        %1000 = vmatprep.subr.bf16.mxu0 0
        %1001 = vmatpush1.bf16.msra.mxu0 0
        %1002 = vmatprep.subr.bf16.mxu0 0
        %1003 = vmatpush1.bf16.msra.mxu0 0
        %1004 = vmatprep.subr.bf16.mxu0 0
        %1005 = vmatpush1.bf16.msra.mxu0 0
        %1006 = vmatprep.subr.bf16.mxu0 0
        %1007 = vmatpush1.bf16.msra.mxu0 0
        %1008 = vmatprep.subr.bf16.mxu0 0
        %1009 = vmatpush1.bf16.msra.mxu0 0
        %1010 = vmatprep.subr.bf16.mxu0 0
        %1011 = vmatpush1.bf16.msra.mxu0 0
        %1012 = vmatprep.subr.bf16.mxu0 0
        %1013 = vmatpush1.bf16.msra.mxu0 0
        %1014 = vmatprep.subr.bf16.mxu0 0
        %1015 = vmatpush1.bf16.msra.mxu0 0
        %1016 = vmatprep.subr.bf16.mxu0 0
        %1017 = vmatpush1.bf16.msra.mxu0 0
        %1018 = vmatprep.subr.bf16.mxu0 0
        %1019 = vmatpush1.bf16.msra.mxu0 0
        %1020 = vmatprep.subr.bf16.mxu0 0
        %1021 = vmatpush1.bf16.msra.mxu0 0
        %1022 = vmatprep.subr.bf16.mxu0 0
        %1023 = vmatpush1.bf16.msra.mxu0 0
        %1024 = vmatprep.subr.bf16.mxu0 0
        %1025 = vmatpush1.bf16.msra.mxu0 0
        %1026 = vmatprep.mubr.bf16.mxu0 0
        %1027 = vmatmul.mubr.bf16.gmra.mrb[0].mxu0 %v941
        %v1028 = vpop.f32.mrb[0].mxu0
        %v1029 = vadd.f32 %v764, %v1028
        %v1030 = vpop.f32.mrb[0].mxu0
        %v1031 = vadd.f32 %v766, %v1030
        %v1032 = vpop.f32.mrb[0].mxu0
        %v1033 = vadd.f32 %v768, %v1032
        %v1034 = vpop.f32.mrb[0].mxu0
        %v1035 = vadd.f32 %v770, %v1034
        %1036 = vmatprep.mubr.bf16.mxu0 0
        %1037 = vmatmul.mubr.bf16.gmra.mrb[0].mxu0 %v944
        %v1038 = vpop.f32.mrb[0].mxu0
        %v1039 = vadd.f32 %v774, %v1038
        %v1040 = vpop.f32.mrb[0].mxu0
        %v1041 = vadd.f32 %v776, %v1040
        %v1042 = vpop.f32.mrb[0].mxu0
        %v1043 = vadd.f32 %v778, %v1042
        %v1044 = vpop.f32.mrb[0].mxu0
        %v1045 = vadd.f32 %v780, %v1044
        %1046 = vmatprep.mubr.bf16.mxu0 0
        %1047 = vmatmul.mubr.bf16.gmra.mrb[0].mxu0 %v947
        %v1048 = vpop.f32.mrb[0].mxu0
        %v1049 = vadd.f32 %v784, %v1048
        %v1050 = vpop.f32.mrb[0].mxu0
        %v1051 = vadd.f32 %v786, %v1050
        %v1052 = vpop.f32.mrb[0].mxu0
        %v1053 = vadd.f32 %v788, %v1052
        %v1054 = vpop.f32.mrb[0].mxu0
        %v1055 = vadd.f32 %v790, %v1054
        %1056 = vmatprep.mubr.bf16.mxu0 0
        %1057 = vmatmul.mubr.bf16.gmra.mrb[0].mxu0 %v950
        %v1058 = vpop.f32.mrb[0].mxu0
        %v1059 = vadd.f32 %v794, %v1058
        %v1060 = vpop.f32.mrb[0].mxu0
        %v1061 = vadd.f32 %v796, %v1060
        %v1062 = vpop.f32.mrb[0].mxu0
        %v1063 = vadd.f32 %v798, %v1062
        %v1064 = vpop.f32.mrb[0].mxu0
        %v1065 = vadd.f32 %v800, %v1064
        %1066 = vmatprep.mubr.bf16.mxu0 0
        %1067 = vmatmul.mubr.bf16.gmra.mrb[0].mxu0 %v953
        %v1068 = vpop.f32.mrb[0].mxu0
        %v1069 = vadd.f32 %v804, %v1068
        %v1070 = vpop.f32.mrb[0].mxu0
        %v1071 = vadd.f32 %v806, %v1070
        %v1072 = vpop.f32.mrb[0].mxu0
        %v1073 = vadd.f32 %v808, %v1072
        %v1074 = vpop.f32.mrb[0].mxu0
        %v1075 = vadd.f32 %v810, %v1074
        %1076 = vmatprep.mubr.bf16.mxu0 0
        %1077 = vmatmul.mubr.bf16.gmra.mrb[0].mxu0 %v956
        %v1078 = vpop.f32.mrb[0].mxu0
        %v1079 = vadd.f32 %v814, %v1078
        %v1080 = vpop.f32.mrb[0].mxu0
        %v1081 = vadd.f32 %v816, %v1080
        %v1082 = vpop.f32.mrb[0].mxu0
        %v1083 = vadd.f32 %v818, %v1082
        %v1084 = vpop.f32.mrb[0].mxu0
        %v1085 = vadd.f32 %v820, %v1084
        %1086 = vmatprep.mubr.bf16.mxu0 0
        %1087 = vmatmul.mubr.bf16.gmra.mrb[0].mxu0 %v959
        %v1088 = vpop.f32.mrb[0].mxu0
        %v1089 = vadd.f32 %v824, %v1088
        %v1090 = vpop.f32.mrb[0].mxu0
        %v1091 = vadd.f32 %v826, %v1090
        %v1092 = vpop.f32.mrb[0].mxu0
        %v1093 = vadd.f32 %v828, %v1092
        %v1094 = vpop.f32.mrb[0].mxu0
        %v1095 = vadd.f32 %v830, %v1094
        %1096 = vmatprep.mubr.bf16.mxu0 0
        %1097 = vmatmul.mubr.bf16.gmra.mrb[0].mxu0 %v962
        %v1098 = vpop.f32.mrb[0].mxu0
        %v1099 = vadd.f32 %v834, %v1098
        %v1100 = vpop.f32.mrb[0].mxu0
        %v1101 = vadd.f32 %v836, %v1100
        %v1102 = vpop.f32.mrb[0].mxu0
        %v1103 = vadd.f32 %v838, %v1102
        %v1104 = vpop.f32.mrb[0].mxu0
        %v1105 = vadd.f32 %v840, %v1104
        %1106 = vmatprep.mubr.bf16.mxu0 0
        %1107 = vmatmul.mubr.bf16.gmra.mrb[0].mxu0 %v965
        %v1108 = vpop.f32.mrb[0].mxu0
        %v1109 = vadd.f32 %v844, %v1108
        %v1110 = vpop.f32.mrb[0].mxu0
        %v1111 = vadd.f32 %v846, %v1110
        %v1112 = vpop.f32.mrb[0].mxu0
        %v1113 = vadd.f32 %v848, %v1112
        %v1114 = vpop.f32.mrb[0].mxu0
        %v1115 = vadd.f32 %v850, %v1114
        %1116 = vmatprep.mubr.bf16.mxu0 0
        %1117 = vmatmul.mubr.bf16.gmra.mrb[0].mxu0 %v968
        %v1118 = vpop.f32.mrb[0].mxu0
        %v1119 = vadd.f32 %v854, %v1118
        %v1120 = vpop.f32.mrb[0].mxu0
        %v1121 = vadd.f32 %v856, %v1120
        %v1122 = vpop.f32.mrb[0].mxu0
        %v1123 = vadd.f32 %v858, %v1122
        %v1124 = vpop.f32.mrb[0].mxu0
        %v1125 = vadd.f32 %v860, %v1124
        %1126 = vmatprep.mubr.bf16.mxu0 0
        %1127 = vmatmul.mubr.bf16.gmra.mrb[0].mxu0 %v971
        %v1128 = vpop.f32.mrb[0].mxu0
        %v1129 = vadd.f32 %v864, %v1128
        %v1130 = vpop.f32.mrb[0].mxu0
        %v1131 = vadd.f32 %v866, %v1130
        %v1132 = vpop.f32.mrb[0].mxu0
        %v1133 = vadd.f32 %v868, %v1132
        %v1134 = vpop.f32.mrb[0].mxu0
        %v1135 = vadd.f32 %v870, %v1134
        %1136 = vmatprep.mubr.bf16.mxu0 0
        %1137 = vmatmul.mubr.bf16.gmra.mrb[0].mxu0 %v974
        %v1138 = vpop.f32.mrb[0].mxu0
        %v1139 = vadd.f32 %v874, %v1138
        %v1140 = vpop.f32.mrb[0].mxu0
        %v1141 = vadd.f32 %v876, %v1140
        %v1142 = vpop.f32.mrb[0].mxu0
        %v1143 = vadd.f32 %v878, %v1142
        %v1144 = vpop.f32.mrb[0].mxu0
        %v1145 = vadd.f32 %v880, %v1144
        %1146 = vmatprep.mubr.bf16.mxu0 0
        %1147 = vmatmul.mubr.bf16.gmra.mrb[0].mxu0 %v977
        %v1148 = vpop.f32.mrb[0].mxu0
        %v1149 = vadd.f32 %v884, %v1148
        %v1150 = vpop.f32.mrb[0].mxu0
        %v1151 = vadd.f32 %v886, %v1150
        %v1152 = vpop.f32.mrb[0].mxu0
        %v1153 = vadd.f32 %v888, %v1152
        %v1154 = vpop.f32.mrb[0].mxu0
        %v1155 = vadd.f32 %v890, %v1154
        %1156 = vmatprep.mubr.bf16.mxu0 0
        %1157 = vmatmul.mubr.bf16.gmra.mrb[0].mxu0 %v980
        %v1158 = vpop.f32.mrb[0].mxu0
        %v1159 = vadd.f32 %v894, %v1158
        %v1160 = vpop.f32.mrb[0].mxu0
        %v1161 = vadd.f32 %v896, %v1160
        %v1162 = vpop.f32.mrb[0].mxu0
        %v1163 = vadd.f32 %v898, %v1162
        %v1164 = vpop.f32.mrb[0].mxu0
        %v1165 = vadd.f32 %v900, %v1164
        %1166 = vmatprep.mubr.bf16.mxu0 0
        %1167 = vmatmul.mubr.bf16.gmra.mrb[0].mxu0 %v983
        %v1168 = vpop.f32.mrb[0].mxu0
        %v1169 = vadd.f32 %v904, %v1168
        %v1170 = vpop.f32.mrb[0].mxu0
        %v1171 = vadd.f32 %v906, %v1170
        %v1172 = vpop.f32.mrb[0].mxu0
        %v1173 = vadd.f32 %v908, %v1172
        %v1174 = vpop.f32.mrb[0].mxu0
        %v1175 = vadd.f32 %v910, %v1174
        %1176 = vmatprep.mubr.bf16.mxu0 0
        %1177 = vmatmul.mubr.bf16.gmra.mrb[0].mxu0 %v986
        %v1178 = vpop.f32.mrb[0].mxu0
        %v1179 = vadd.f32 %v914, %v1178
        %v1180 = vpop.f32.mrb[0].mxu0
        %v1181 = vadd.f32 %v916, %v1180
        %v1182 = vpop.f32.mrb[0].mxu0
        %v1183 = vadd.f32 %v918, %v1182
        %v1184 = vpop.f32.mrb[0].mxu0
        %v1185 = vadd.f32 %v920, %v1184
        %1186 = vdwg.mxu0
        %v1187 = vld [vmem:[#allocation2 + $0x2] sm:$0xff]
        %v1188 = vld [vmem:[#allocation2 + $0xa] sm:$0xff]
        %v1189 = vld [vmem:[#allocation2 + $0x12] sm:$0xff]
        %v1190 = vld [vmem:[#allocation2 + $0x1a] sm:$0xff]
        %v1191 = vld [vmem:[#allocation2 + $0x22] sm:$0xff]
        %v1192 = vld [vmem:[#allocation2 + $0x2a] sm:$0xff]
        %v1193 = vld [vmem:[#allocation2 + $0x32] sm:$0xff]
        %v1194 = vld [vmem:[#allocation2 + $0x3a] sm:$0xff]
        %v1195 = vld [vmem:[#allocation2 + $0x42] sm:$0xff]
        %v1196 = vld [vmem:[#allocation2 + $0x4a] sm:$0xff]
        %v1197 = vld [vmem:[#allocation2 + $0x52] sm:$0xff]
        %v1198 = vld [vmem:[#allocation2 + $0x5a] sm:$0xff]
        %v1199 = vld [vmem:[#allocation2 + $0x62] sm:$0xff]
        %v1200 = vld [vmem:[#allocation2 + $0x6a] sm:$0xff]
        %v1201 = vld [vmem:[#allocation2 + $0x72] sm:$0xff]
        %v1202 = vld [vmem:[#allocation2 + $0x7a] sm:$0xff]
        %v1203 = vld [vmem:[#allocation2 + $0x82] sm:$0xff]
        %v1204 = vld [vmem:[#allocation2 + $0x8a] sm:$0xff]
        %v1205 = vld [vmem:[#allocation2 + $0x92] sm:$0xff]
        %v1206 = vld [vmem:[#allocation2 + $0x9a] sm:$0xff]
        %v1207 = vld [vmem:[#allocation2 + $0xa2] sm:$0xff]
        %v1208 = vld [vmem:[#allocation2 + $0xaa] sm:$0xff]
        %v1209 = vld [vmem:[#allocation2 + $0xb2] sm:$0xff]
        %v1210 = vld [vmem:[#allocation2 + $0xba] sm:$0xff]
        %v1211 = vld [vmem:[#allocation2 + $0xc2] sm:$0xff]
        %v1212 = vld [vmem:[#allocation2 + $0xca] sm:$0xff]
        %v1213 = vld [vmem:[#allocation2 + $0xd2] sm:$0xff]
        %v1214 = vld [vmem:[#allocation2 + $0xda] sm:$0xff]
        %v1215 = vld [vmem:[#allocation2 + $0xe2] sm:$0xff]
        %v1216 = vld [vmem:[#allocation2 + $0xea] sm:$0xff]
        %v1217 = vld [vmem:[#allocation2 + $0xf2] sm:$0xff]
        %v1218 = vld [vmem:[#allocation2 + $0xfa] sm:$0xff]
        %v1219 = vpack.c.bf16 %v1188, %v1187
        %v1220 = vpack.c.bf16 %v1190, %v1189
        %v1221 = vpack.c.bf16 %v1192, %v1191
        %v1222 = vpack.c.bf16 %v1194, %v1193
        %v1223 = vpack.c.bf16 %v1196, %v1195
        %v1224 = vpack.c.bf16 %v1198, %v1197
        %v1225 = vpack.c.bf16 %v1200, %v1199
        %v1226 = vpack.c.bf16 %v1202, %v1201
        %v1227 = vpack.c.bf16 %v1204, %v1203
        %v1228 = vpack.c.bf16 %v1206, %v1205
        %v1229 = vpack.c.bf16 %v1208, %v1207
        %v1230 = vpack.c.bf16 %v1210, %v1209
        %v1231 = vpack.c.bf16 %v1212, %v1211
        %v1232 = vpack.c.bf16 %v1214, %v1213
        %v1233 = vpack.c.bf16 %v1216, %v1215
        %v1234 = vpack.c.bf16 %v1218, %v1217
        %s1235 = scalar_lea.vmem %s1, 64
        %v1236 = vld [vmem:[%s1235] sm:$0xff]
        %v1237 = vld [vmem:[%s1235 + $0x8] sm:$0xff]
        %v1238 = vld [vmem:[%s1235 + $0x10] sm:$0xff]
        %v1239 = vld [vmem:[%s1235 + $0x18] sm:$0x33]
        %v1244 = vunpack.c.l.b16 %v1236
        %v1245 = vunpack.c.h.b16 %v1236
        %v1246 = vunpack.c.l.b16 %v1237
        %v1247 = vunpack.c.h.b16 %v1237
        %v1248 = vunpack.c.l.b16 %v1238
        %v1249 = vunpack.c.h.b16 %v1238
        %v1250 = vunpack.c.l.b16 %v1239
        %v1251 = vunpack.c.h.b16 %v1239
        %v1252 = vpack.c.b16 %v1246, %v1244
        %v1253 = vpack.c.b16 %v1247, %v1245
        %v1254 = vpack.c.b16 %v1250, %v1248
        %v1255 = vpack.c.b16 %v1251, %v1249
        %v1259 = vsel %vm445, %v1219, 0
        %v1262 = vsel %vm445, %v1220, 0
        %v1265 = vsel %vm445, %v1221, 0
        %v1268 = vsel %vm445, %v1222, 0
        %v1271 = vsel %vm445, %v1223, 0
        %v1274 = vsel %vm445, %v1224, 0
        %v1277 = vsel %vm445, %v1225, 0
        %v1280 = vsel %vm445, %v1226, 0
        %v1283 = vsel %vm445, %v1227, 0
        %v1286 = vsel %vm445, %v1228, 0
        %v1289 = vsel %vm445, %v1229, 0
        %v1292 = vsel %vm445, %v1230, 0
        %v1295 = vsel %vm445, %v1231, 0
        %v1298 = vsel %vm445, %v1232, 0
        %v1301 = vsel %vm445, %v1233, 0
        %v1304 = vsel %vm445, %v1234, 0
        %v1307 = vsel %vm722, %v1254, 0
        %v1310 = vsel %vm722, %v1255, 0
        %1312 = vmatprep.subr.bf16.mxu0 %v1253
        %1313 = vmatpush1.bf16.msra.mxu0 %v1252
        %1314 = vmatprep.subr.bf16.mxu0 %v1310
        %1315 = vmatpush1.bf16.msra.mxu0 %v1307
        %1316 = vmatprep.subr.bf16.mxu0 0
        %1317 = vmatpush1.bf16.msra.mxu0 0
        %1318 = vmatprep.subr.bf16.mxu0 0
        %1319 = vmatpush1.bf16.msra.mxu0 0
        %1320 = vmatprep.subr.bf16.mxu0 0
        %1321 = vmatpush1.bf16.msra.mxu0 0
        %1322 = vmatprep.subr.bf16.mxu0 0
        %1323 = vmatpush1.bf16.msra.mxu0 0
        %1324 = vmatprep.subr.bf16.mxu0 0
        %1325 = vmatpush1.bf16.msra.mxu0 0
        %1326 = vmatprep.subr.bf16.mxu0 0
        %1327 = vmatpush1.bf16.msra.mxu0 0
        %1328 = vmatprep.subr.bf16.mxu0 0
        %1329 = vmatpush1.bf16.msra.mxu0 0
        %1330 = vmatprep.subr.bf16.mxu0 0
        %1331 = vmatpush1.bf16.msra.mxu0 0
        %1332 = vmatprep.subr.bf16.mxu0 0
        %1333 = vmatpush1.bf16.msra.mxu0 0
        %1334 = vmatprep.subr.bf16.mxu0 0
        %1335 = vmatpush1.bf16.msra.mxu0 0
        %1336 = vmatprep.subr.bf16.mxu0 0
        %1337 = vmatpush1.bf16.msra.mxu0 0
        %1338 = vmatprep.subr.bf16.mxu0 0
        %1339 = vmatpush1.bf16.msra.mxu0 0
        %1340 = vmatprep.subr.bf16.mxu0 0
        %1341 = vmatpush1.bf16.msra.mxu0 0
        %1342 = vmatprep.subr.bf16.mxu0 0
        %1343 = vmatpush1.bf16.msra.mxu0 0
        %1344 = vmatprep.mubr.bf16.mxu0 0
        %1345 = vmatmul.mubr.bf16.gmra.mrb[0].mxu0 %v1259
        %v1346 = vpop.f32.mrb[0].mxu0
        %v1347 = vadd.f32 0.0, %v1346
        %v1348 = vpop.f32.mrb[0].mxu0
        %v1349 = vadd.f32 0.0, %v1348
        %v1350 = vpop.f32.mrb[0].mxu0
        %v1351 = vadd.f32 0.0, %v1350
        %v1352 = vpop.f32.mrb[0].mxu0
        %v1353 = vadd.f32 0.0, %v1352
        %1354 = vmatprep.mubr.bf16.mxu0 0
        %1355 = vmatmul.mubr.bf16.gmra.mrb[0].mxu0 %v1262
        %v1356 = vpop.f32.mrb[0].mxu0
        %v1357 = vadd.f32 0.0, %v1356
        %v1358 = vpop.f32.mrb[0].mxu0
        %v1359 = vadd.f32 0.0, %v1358
        %v1360 = vpop.f32.mrb[0].mxu0
        %v1361 = vadd.f32 0.0, %v1360
        %v1362 = vpop.f32.mrb[0].mxu0
        %v1363 = vadd.f32 0.0, %v1362
        %1364 = vmatprep.mubr.bf16.mxu0 0
        %1365 = vmatmul.mubr.bf16.gmra.mrb[0].mxu0 %v1265
        %v1366 = vpop.f32.mrb[0].mxu0
        %v1367 = vadd.f32 0.0, %v1366
        %v1368 = vpop.f32.mrb[0].mxu0
        %v1369 = vadd.f32 0.0, %v1368
        %v1370 = vpop.f32.mrb[0].mxu0
        %v1371 = vadd.f32 0.0, %v1370
        %v1372 = vpop.f32.mrb[0].mxu0
        %v1373 = vadd.f32 0.0, %v1372
        %1374 = vmatprep.mubr.bf16.mxu0 0
        %1375 = vmatmul.mubr.bf16.gmra.mrb[0].mxu0 %v1268
        %v1376 = vpop.f32.mrb[0].mxu0
        %v1377 = vadd.f32 0.0, %v1376
        %v1378 = vpop.f32.mrb[0].mxu0
        %v1379 = vadd.f32 0.0, %v1378
        %v1380 = vpop.f32.mrb[0].mxu0
        %v1381 = vadd.f32 0.0, %v1380
        %v1382 = vpop.f32.mrb[0].mxu0
        %v1383 = vadd.f32 0.0, %v1382
        %1384 = vmatprep.mubr.bf16.mxu0 0
        %1385 = vmatmul.mubr.bf16.gmra.mrb[0].mxu0 %v1271
        %v1386 = vpop.f32.mrb[0].mxu0
        %v1387 = vadd.f32 0.0, %v1386
        %v1388 = vpop.f32.mrb[0].mxu0
        %v1389 = vadd.f32 0.0, %v1388
        %v1390 = vpop.f32.mrb[0].mxu0
        %v1391 = vadd.f32 0.0, %v1390
        %v1392 = vpop.f32.mrb[0].mxu0
        %v1393 = vadd.f32 0.0, %v1392
        %1394 = vmatprep.mubr.bf16.mxu0 0
        %1395 = vmatmul.mubr.bf16.gmra.mrb[0].mxu0 %v1274
        %v1396 = vpop.f32.mrb[0].mxu0
        %v1397 = vadd.f32 0.0, %v1396
        %v1398 = vpop.f32.mrb[0].mxu0
        %v1399 = vadd.f32 0.0, %v1398
        %v1400 = vpop.f32.mrb[0].mxu0
        %v1401 = vadd.f32 0.0, %v1400
        %v1402 = vpop.f32.mrb[0].mxu0
        %v1403 = vadd.f32 0.0, %v1402
        %1404 = vmatprep.mubr.bf16.mxu0 0
        %1405 = vmatmul.mubr.bf16.gmra.mrb[0].mxu0 %v1277
        %v1406 = vpop.f32.mrb[0].mxu0
        %v1407 = vadd.f32 0.0, %v1406
        %v1408 = vpop.f32.mrb[0].mxu0
        %v1409 = vadd.f32 0.0, %v1408
        %v1410 = vpop.f32.mrb[0].mxu0
        %v1411 = vadd.f32 0.0, %v1410
        %v1412 = vpop.f32.mrb[0].mxu0
        %v1413 = vadd.f32 0.0, %v1412
        %1414 = vmatprep.mubr.bf16.mxu0 0
        %1415 = vmatmul.mubr.bf16.gmra.mrb[0].mxu0 %v1280
        %v1416 = vpop.f32.mrb[0].mxu0
        %v1417 = vadd.f32 0.0, %v1416
        %v1418 = vpop.f32.mrb[0].mxu0
        %v1419 = vadd.f32 0.0, %v1418
        %v1420 = vpop.f32.mrb[0].mxu0
        %v1421 = vadd.f32 0.0, %v1420
        %v1422 = vpop.f32.mrb[0].mxu0
        %v1423 = vadd.f32 0.0, %v1422
        %1424 = vmatprep.mubr.bf16.mxu0 0
        %1425 = vmatmul.mubr.bf16.gmra.mrb[0].mxu0 %v1283
        %v1426 = vpop.f32.mrb[0].mxu0
        %v1427 = vadd.f32 0.0, %v1426
        %v1428 = vpop.f32.mrb[0].mxu0
        %v1429 = vadd.f32 0.0, %v1428
        %v1430 = vpop.f32.mrb[0].mxu0
        %v1431 = vadd.f32 0.0, %v1430
        %v1432 = vpop.f32.mrb[0].mxu0
        %v1433 = vadd.f32 0.0, %v1432
        %1434 = vmatprep.mubr.bf16.mxu0 0
        %1435 = vmatmul.mubr.bf16.gmra.mrb[0].mxu0 %v1286
        %v1436 = vpop.f32.mrb[0].mxu0
        %v1437 = vadd.f32 0.0, %v1436
        %v1438 = vpop.f32.mrb[0].mxu0
        %v1439 = vadd.f32 0.0, %v1438
        %v1440 = vpop.f32.mrb[0].mxu0
        %v1441 = vadd.f32 0.0, %v1440
        %v1442 = vpop.f32.mrb[0].mxu0
        %v1443 = vadd.f32 0.0, %v1442
        %1444 = vmatprep.mubr.bf16.mxu0 0
        %1445 = vmatmul.mubr.bf16.gmra.mrb[0].mxu0 %v1289
        %v1446 = vpop.f32.mrb[0].mxu0
        %v1447 = vadd.f32 0.0, %v1446
        %v1448 = vpop.f32.mrb[0].mxu0
        %v1449 = vadd.f32 0.0, %v1448
        %v1450 = vpop.f32.mrb[0].mxu0
        %v1451 = vadd.f32 0.0, %v1450
        %v1452 = vpop.f32.mrb[0].mxu0
        %v1453 = vadd.f32 0.0, %v1452
        %1454 = vmatprep.mubr.bf16.mxu0 0
        %1455 = vmatmul.mubr.bf16.gmra.mrb[0].mxu0 %v1292
        %v1456 = vpop.f32.mrb[0].mxu0
        %v1457 = vadd.f32 0.0, %v1456
        %v1458 = vpop.f32.mrb[0].mxu0
        %v1459 = vadd.f32 0.0, %v1458
        %v1460 = vpop.f32.mrb[0].mxu0
        %v1461 = vadd.f32 0.0, %v1460
        %v1462 = vpop.f32.mrb[0].mxu0
        %v1463 = vadd.f32 0.0, %v1462
        %1464 = vmatprep.mubr.bf16.mxu0 0
        %1465 = vmatmul.mubr.bf16.gmra.mrb[0].mxu0 %v1295
        %v1466 = vpop.f32.mrb[0].mxu0
        %v1467 = vadd.f32 0.0, %v1466
        %v1468 = vpop.f32.mrb[0].mxu0
        %v1469 = vadd.f32 0.0, %v1468
        %v1470 = vpop.f32.mrb[0].mxu0
        %v1471 = vadd.f32 0.0, %v1470
        %v1472 = vpop.f32.mrb[0].mxu0
        %v1473 = vadd.f32 0.0, %v1472
        %1474 = vmatprep.mubr.bf16.mxu0 0
        %1475 = vmatmul.mubr.bf16.gmra.mrb[0].mxu0 %v1298
        %v1476 = vpop.f32.mrb[0].mxu0
        %v1477 = vadd.f32 0.0, %v1476
        %v1478 = vpop.f32.mrb[0].mxu0
        %v1479 = vadd.f32 0.0, %v1478
        %v1480 = vpop.f32.mrb[0].mxu0
        %v1481 = vadd.f32 0.0, %v1480
        %v1482 = vpop.f32.mrb[0].mxu0
        %v1483 = vadd.f32 0.0, %v1482
        %1484 = vmatprep.mubr.bf16.mxu0 0
        %1485 = vmatmul.mubr.bf16.gmra.mrb[0].mxu0 %v1301
        %v1486 = vpop.f32.mrb[0].mxu0
        %v1487 = vadd.f32 0.0, %v1486
        %v1488 = vpop.f32.mrb[0].mxu0
        %v1489 = vadd.f32 0.0, %v1488
        %v1490 = vpop.f32.mrb[0].mxu0
        %v1491 = vadd.f32 0.0, %v1490
        %v1492 = vpop.f32.mrb[0].mxu0
        %v1493 = vadd.f32 0.0, %v1492
        %1494 = vmatprep.mubr.bf16.mxu0 0
        %1495 = vmatmul.mubr.bf16.gmra.mrb[0].mxu0 %v1304
        %v1496 = vpop.f32.mrb[0].mxu0
        %v1497 = vadd.f32 0.0, %v1496
        %v1498 = vpop.f32.mrb[0].mxu0
        %v1499 = vadd.f32 0.0, %v1498
        %v1500 = vpop.f32.mrb[0].mxu0
        %v1501 = vadd.f32 0.0, %v1500
        %v1502 = vpop.f32.mrb[0].mxu0
        %v1503 = vadd.f32 0.0, %v1502
        %1504 = vdwg.mxu0
        %v1505 = vadd.f32 %v1029, %v1347
        %v1506 = vadd.f32 %v1031, %v1349
        %v1507 = vadd.f32 %v1033, %v1351
        %v1508 = vadd.f32 %v1035, %v1353
        %v1509 = vadd.f32 %v1039, %v1357
        %v1510 = vadd.f32 %v1041, %v1359
        %v1511 = vadd.f32 %v1043, %v1361
        %v1512 = vadd.f32 %v1045, %v1363
        %v1513 = vadd.f32 %v1049, %v1367
        %v1514 = vadd.f32 %v1051, %v1369
        %v1515 = vadd.f32 %v1053, %v1371
        %v1516 = vadd.f32 %v1055, %v1373
        %v1517 = vadd.f32 %v1059, %v1377
        %v1518 = vadd.f32 %v1061, %v1379
        %v1519 = vadd.f32 %v1063, %v1381
        %v1520 = vadd.f32 %v1065, %v1383
        %v1521 = vadd.f32 %v1069, %v1387
        %v1522 = vadd.f32 %v1071, %v1389
        %v1523 = vadd.f32 %v1073, %v1391
        %v1524 = vadd.f32 %v1075, %v1393
        %v1525 = vadd.f32 %v1079, %v1397
        %v1526 = vadd.f32 %v1081, %v1399
        %v1527 = vadd.f32 %v1083, %v1401
        %v1528 = vadd.f32 %v1085, %v1403
        %v1529 = vadd.f32 %v1089, %v1407
        %v1530 = vadd.f32 %v1091, %v1409
        %v1531 = vadd.f32 %v1093, %v1411
        %v1532 = vadd.f32 %v1095, %v1413
        %v1533 = vadd.f32 %v1099, %v1417
        %v1534 = vadd.f32 %v1101, %v1419
        %v1535 = vadd.f32 %v1103, %v1421
        %v1536 = vadd.f32 %v1105, %v1423
        %v1537 = vadd.f32 %v1109, %v1427
        %v1538 = vadd.f32 %v1111, %v1429
        %v1539 = vadd.f32 %v1113, %v1431
        %v1540 = vadd.f32 %v1115, %v1433
        %v1541 = vadd.f32 %v1119, %v1437
        %v1542 = vadd.f32 %v1121, %v1439
        %v1543 = vadd.f32 %v1123, %v1441
        %v1544 = vadd.f32 %v1125, %v1443
        %v1545 = vadd.f32 %v1129, %v1447
        %v1546 = vadd.f32 %v1131, %v1449
        %v1547 = vadd.f32 %v1133, %v1451
        %v1548 = vadd.f32 %v1135, %v1453
        %v1549 = vadd.f32 %v1139, %v1457
        %v1550 = vadd.f32 %v1141, %v1459
        %v1551 = vadd.f32 %v1143, %v1461
        %v1552 = vadd.f32 %v1145, %v1463
        %v1553 = vadd.f32 %v1149, %v1467
        %v1554 = vadd.f32 %v1151, %v1469
        %v1555 = vadd.f32 %v1153, %v1471
        %v1556 = vadd.f32 %v1155, %v1473
        %v1557 = vadd.f32 %v1159, %v1477
        %v1558 = vadd.f32 %v1161, %v1479
        %v1559 = vadd.f32 %v1163, %v1481
        %v1560 = vadd.f32 %v1165, %v1483
        %v1561 = vadd.f32 %v1169, %v1487
        %v1562 = vadd.f32 %v1171, %v1489
        %v1563 = vadd.f32 %v1173, %v1491
        %v1564 = vadd.f32 %v1175, %v1493
        %v1565 = vadd.f32 %v1179, %v1497
        %v1566 = vadd.f32 %v1181, %v1499
        %v1567 = vadd.f32 %v1183, %v1501
        %v1568 = vadd.f32 %v1185, %v1503
        %v1569 = vld [vmem:[#allocation2 + $0x3] sm:$0xff]
        %v1570 = vld [vmem:[#allocation2 + $0xb] sm:$0xff]
        %v1571 = vld [vmem:[#allocation2 + $0x13] sm:$0xff]
        %v1572 = vld [vmem:[#allocation2 + $0x1b] sm:$0xff]
        %v1573 = vld [vmem:[#allocation2 + $0x23] sm:$0xff]
        %v1574 = vld [vmem:[#allocation2 + $0x2b] sm:$0xff]
        %v1575 = vld [vmem:[#allocation2 + $0x33] sm:$0xff]
        %v1576 = vld [vmem:[#allocation2 + $0x3b] sm:$0xff]
        %v1577 = vld [vmem:[#allocation2 + $0x43] sm:$0xff]
        %v1578 = vld [vmem:[#allocation2 + $0x4b] sm:$0xff]
        %v1579 = vld [vmem:[#allocation2 + $0x53] sm:$0xff]
        %v1580 = vld [vmem:[#allocation2 + $0x5b] sm:$0xff]
        %v1581 = vld [vmem:[#allocation2 + $0x63] sm:$0xff]
        %v1582 = vld [vmem:[#allocation2 + $0x6b] sm:$0xff]
        %v1583 = vld [vmem:[#allocation2 + $0x73] sm:$0xff]
        %v1584 = vld [vmem:[#allocation2 + $0x7b] sm:$0xff]
        %v1585 = vld [vmem:[#allocation2 + $0x83] sm:$0xff]
        %v1586 = vld [vmem:[#allocation2 + $0x8b] sm:$0xff]
        %v1587 = vld [vmem:[#allocation2 + $0x93] sm:$0xff]
        %v1588 = vld [vmem:[#allocation2 + $0x9b] sm:$0xff]
        %v1589 = vld [vmem:[#allocation2 + $0xa3] sm:$0xff]
        %v1590 = vld [vmem:[#allocation2 + $0xab] sm:$0xff]
        %v1591 = vld [vmem:[#allocation2 + $0xb3] sm:$0xff]
        %v1592 = vld [vmem:[#allocation2 + $0xbb] sm:$0xff]
        %v1593 = vld [vmem:[#allocation2 + $0xc3] sm:$0xff]
        %v1594 = vld [vmem:[#allocation2 + $0xcb] sm:$0xff]
        %v1595 = vld [vmem:[#allocation2 + $0xd3] sm:$0xff]
        %v1596 = vld [vmem:[#allocation2 + $0xdb] sm:$0xff]
        %v1597 = vld [vmem:[#allocation2 + $0xe3] sm:$0xff]
        %v1598 = vld [vmem:[#allocation2 + $0xeb] sm:$0xff]
        %v1599 = vld [vmem:[#allocation2 + $0xf3] sm:$0xff]
        %v1600 = vld [vmem:[#allocation2 + $0xfb] sm:$0xff]
        %v1601 = vpack.c.bf16 %v1570, %v1569
        %v1602 = vpack.c.bf16 %v1572, %v1571
        %v1603 = vpack.c.bf16 %v1574, %v1573
        %v1604 = vpack.c.bf16 %v1576, %v1575
        %v1605 = vpack.c.bf16 %v1578, %v1577
        %v1606 = vpack.c.bf16 %v1580, %v1579
        %v1607 = vpack.c.bf16 %v1582, %v1581
        %v1608 = vpack.c.bf16 %v1584, %v1583
        %v1609 = vpack.c.bf16 %v1586, %v1585
        %v1610 = vpack.c.bf16 %v1588, %v1587
        %v1611 = vpack.c.bf16 %v1590, %v1589
        %v1612 = vpack.c.bf16 %v1592, %v1591
        %v1613 = vpack.c.bf16 %v1594, %v1593
        %v1614 = vpack.c.bf16 %v1596, %v1595
        %v1615 = vpack.c.bf16 %v1598, %v1597
        %v1616 = vpack.c.bf16 %v1600, %v1599
        %s1617 = scalar_lea.vmem %s1, 96
        %v1618 = vld [vmem:[%s1617] sm:$0xff]
        %v1619 = vld [vmem:[%s1617 + $0x8] sm:$0xff]
        %v1620 = vld [vmem:[%s1617 + $0x10] sm:$0xff]
        %v1621 = vld [vmem:[%s1617 + $0x18] sm:$0x33]
        %v1626 = vunpack.c.l.b16 %v1618
        %v1627 = vunpack.c.h.b16 %v1618
        %v1628 = vunpack.c.l.b16 %v1619
        %v1629 = vunpack.c.h.b16 %v1619
        %v1630 = vunpack.c.l.b16 %v1620
        %v1631 = vunpack.c.h.b16 %v1620
        %v1632 = vunpack.c.l.b16 %v1621
        %v1633 = vunpack.c.h.b16 %v1621
        %v1634 = vpack.c.b16 %v1628, %v1626
        %v1635 = vpack.c.b16 %v1629, %v1627
        %v1636 = vpack.c.b16 %v1632, %v1630
        %v1637 = vpack.c.b16 %v1633, %v1631
        %v1641 = vsel %vm445, %v1601, 0
        %v1644 = vsel %vm445, %v1602, 0
        %v1647 = vsel %vm445, %v1603, 0
        %v1650 = vsel %vm445, %v1604, 0
        %v1653 = vsel %vm445, %v1605, 0
        %v1656 = vsel %vm445, %v1606, 0
        %v1659 = vsel %vm445, %v1607, 0
        %v1662 = vsel %vm445, %v1608, 0
        %v1665 = vsel %vm445, %v1609, 0
        %v1668 = vsel %vm445, %v1610, 0
        %v1671 = vsel %vm445, %v1611, 0
        %v1674 = vsel %vm445, %v1612, 0
        %v1677 = vsel %vm445, %v1613, 0
        %v1680 = vsel %vm445, %v1614, 0
        %v1683 = vsel %vm445, %v1615, 0
        %v1686 = vsel %vm445, %v1616, 0
        %v1689 = vsel %vm722, %v1636, 0
        %v1692 = vsel %vm722, %v1637, 0
        %1694 = vmatprep.subr.bf16.mxu0 %v1635
        %1695 = vmatpush1.bf16.msra.mxu0 %v1634
        %1696 = vmatprep.subr.bf16.mxu0 %v1692
        %1697 = vmatpush1.bf16.msra.mxu0 %v1689
        %1698 = vmatprep.subr.bf16.mxu0 0
        %1699 = vmatpush1.bf16.msra.mxu0 0
        %1700 = vmatprep.subr.bf16.mxu0 0
        %1701 = vmatpush1.bf16.msra.mxu0 0
        %1702 = vmatprep.subr.bf16.mxu0 0
        %1703 = vmatpush1.bf16.msra.mxu0 0
        %1704 = vmatprep.subr.bf16.mxu0 0
        %1705 = vmatpush1.bf16.msra.mxu0 0
        %1706 = vmatprep.subr.bf16.mxu0 0
        %1707 = vmatpush1.bf16.msra.mxu0 0
        %1708 = vmatprep.subr.bf16.mxu0 0
        %1709 = vmatpush1.bf16.msra.mxu0 0
        %1710 = vmatprep.subr.bf16.mxu0 0
        %1711 = vmatpush1.bf16.msra.mxu0 0
        %1712 = vmatprep.subr.bf16.mxu0 0
        %1713 = vmatpush1.bf16.msra.mxu0 0
        %1714 = vmatprep.subr.bf16.mxu0 0
        %1715 = vmatpush1.bf16.msra.mxu0 0
        %1716 = vmatprep.subr.bf16.mxu0 0
        %1717 = vmatpush1.bf16.msra.mxu0 0
        %1718 = vmatprep.subr.bf16.mxu0 0
        %1719 = vmatpush1.bf16.msra.mxu0 0
        %1720 = vmatprep.subr.bf16.mxu0 0
        %1721 = vmatpush1.bf16.msra.mxu0 0
        %1722 = vmatprep.subr.bf16.mxu0 0
        %1723 = vmatpush1.bf16.msra.mxu0 0
        %1724 = vmatprep.subr.bf16.mxu0 0
        %1725 = vmatpush1.bf16.msra.mxu0 0
        %1726 = vmatprep.mubr.bf16.mxu0 0
        %1727 = vmatmul.mubr.bf16.gmra.mrb[0].mxu0 %v1641
        %v1728 = vpop.f32.mrb[0].mxu0
        %v1729 = vadd.f32 0.0, %v1728
        %v1730 = vpop.f32.mrb[0].mxu0
        %v1731 = vadd.f32 0.0, %v1730
        %v1732 = vpop.f32.mrb[0].mxu0
        %v1733 = vadd.f32 0.0, %v1732
        %v1734 = vpop.f32.mrb[0].mxu0
        %v1735 = vadd.f32 0.0, %v1734
        %1736 = vmatprep.mubr.bf16.mxu0 0
        %1737 = vmatmul.mubr.bf16.gmra.mrb[0].mxu0 %v1644
        %v1738 = vpop.f32.mrb[0].mxu0
        %v1739 = vadd.f32 0.0, %v1738
        %v1740 = vpop.f32.mrb[0].mxu0
        %v1741 = vadd.f32 0.0, %v1740
        %v1742 = vpop.f32.mrb[0].mxu0
        %v1743 = vadd.f32 0.0, %v1742
        %v1744 = vpop.f32.mrb[0].mxu0
        %v1745 = vadd.f32 0.0, %v1744
        %1746 = vmatprep.mubr.bf16.mxu0 0
        %1747 = vmatmul.mubr.bf16.gmra.mrb[0].mxu0 %v1647
        %v1748 = vpop.f32.mrb[0].mxu0
        %v1749 = vadd.f32 0.0, %v1748
        %v1750 = vpop.f32.mrb[0].mxu0
        %v1751 = vadd.f32 0.0, %v1750
        %v1752 = vpop.f32.mrb[0].mxu0
        %v1753 = vadd.f32 0.0, %v1752
        %v1754 = vpop.f32.mrb[0].mxu0
        %v1755 = vadd.f32 0.0, %v1754
        %1756 = vmatprep.mubr.bf16.mxu0 0
        %1757 = vmatmul.mubr.bf16.gmra.mrb[0].mxu0 %v1650
        %v1758 = vpop.f32.mrb[0].mxu0
        %v1759 = vadd.f32 0.0, %v1758
        %v1760 = vpop.f32.mrb[0].mxu0
        %v1761 = vadd.f32 0.0, %v1760
        %v1762 = vpop.f32.mrb[0].mxu0
        %v1763 = vadd.f32 0.0, %v1762
        %v1764 = vpop.f32.mrb[0].mxu0
        %v1765 = vadd.f32 0.0, %v1764
        %1766 = vmatprep.mubr.bf16.mxu0 0
        %1767 = vmatmul.mubr.bf16.gmra.mrb[0].mxu0 %v1653
        %v1768 = vpop.f32.mrb[0].mxu0
        %v1769 = vadd.f32 0.0, %v1768
        %v1770 = vpop.f32.mrb[0].mxu0
        %v1771 = vadd.f32 0.0, %v1770
        %v1772 = vpop.f32.mrb[0].mxu0
        %v1773 = vadd.f32 0.0, %v1772
        %v1774 = vpop.f32.mrb[0].mxu0
        %v1775 = vadd.f32 0.0, %v1774
        %1776 = vmatprep.mubr.bf16.mxu0 0
        %1777 = vmatmul.mubr.bf16.gmra.mrb[0].mxu0 %v1656
        %v1778 = vpop.f32.mrb[0].mxu0
        %v1779 = vadd.f32 0.0, %v1778
        %v1780 = vpop.f32.mrb[0].mxu0
        %v1781 = vadd.f32 0.0, %v1780
        %v1782 = vpop.f32.mrb[0].mxu0
        %v1783 = vadd.f32 0.0, %v1782
        %v1784 = vpop.f32.mrb[0].mxu0
        %v1785 = vadd.f32 0.0, %v1784
        %1786 = vmatprep.mubr.bf16.mxu0 0
        %1787 = vmatmul.mubr.bf16.gmra.mrb[0].mxu0 %v1659
        %v1788 = vpop.f32.mrb[0].mxu0
        %v1789 = vadd.f32 0.0, %v1788
        %v1790 = vpop.f32.mrb[0].mxu0
        %v1791 = vadd.f32 0.0, %v1790
        %v1792 = vpop.f32.mrb[0].mxu0
        %v1793 = vadd.f32 0.0, %v1792
        %v1794 = vpop.f32.mrb[0].mxu0
        %v1795 = vadd.f32 0.0, %v1794
        %1796 = vmatprep.mubr.bf16.mxu0 0
        %1797 = vmatmul.mubr.bf16.gmra.mrb[0].mxu0 %v1662
        %v1798 = vpop.f32.mrb[0].mxu0
        %v1799 = vadd.f32 0.0, %v1798
        %v1800 = vpop.f32.mrb[0].mxu0
        %v1801 = vadd.f32 0.0, %v1800
        %v1802 = vpop.f32.mrb[0].mxu0
        %v1803 = vadd.f32 0.0, %v1802
        %v1804 = vpop.f32.mrb[0].mxu0
        %v1805 = vadd.f32 0.0, %v1804
        %1806 = vmatprep.mubr.bf16.mxu0 0
        %1807 = vmatmul.mubr.bf16.gmra.mrb[0].mxu0 %v1665
        %v1808 = vpop.f32.mrb[0].mxu0
        %v1809 = vadd.f32 0.0, %v1808
        %v1810 = vpop.f32.mrb[0].mxu0
        %v1811 = vadd.f32 0.0, %v1810
        %v1812 = vpop.f32.mrb[0].mxu0
        %v1813 = vadd.f32 0.0, %v1812
        %v1814 = vpop.f32.mrb[0].mxu0
        %v1815 = vadd.f32 0.0, %v1814
        %1816 = vmatprep.mubr.bf16.mxu0 0
        %1817 = vmatmul.mubr.bf16.gmra.mrb[0].mxu0 %v1668
        %v1818 = vpop.f32.mrb[0].mxu0
        %v1819 = vadd.f32 0.0, %v1818
        %v1820 = vpop.f32.mrb[0].mxu0
        %v1821 = vadd.f32 0.0, %v1820
        %v1822 = vpop.f32.mrb[0].mxu0
        %v1823 = vadd.f32 0.0, %v1822
        %v1824 = vpop.f32.mrb[0].mxu0
        %v1825 = vadd.f32 0.0, %v1824
        %1826 = vmatprep.mubr.bf16.mxu0 0
        %1827 = vmatmul.mubr.bf16.gmra.mrb[0].mxu0 %v1671
        %v1828 = vpop.f32.mrb[0].mxu0
        %v1829 = vadd.f32 0.0, %v1828
        %v1830 = vpop.f32.mrb[0].mxu0
        %v1831 = vadd.f32 0.0, %v1830
        %v1832 = vpop.f32.mrb[0].mxu0
        %v1833 = vadd.f32 0.0, %v1832
        %v1834 = vpop.f32.mrb[0].mxu0
        %v1835 = vadd.f32 0.0, %v1834
        %1836 = vmatprep.mubr.bf16.mxu0 0
        %1837 = vmatmul.mubr.bf16.gmra.mrb[0].mxu0 %v1674
        %v1838 = vpop.f32.mrb[0].mxu0
        %v1839 = vadd.f32 0.0, %v1838
        %v1840 = vpop.f32.mrb[0].mxu0
        %v1841 = vadd.f32 0.0, %v1840
        %v1842 = vpop.f32.mrb[0].mxu0
        %v1843 = vadd.f32 0.0, %v1842
        %v1844 = vpop.f32.mrb[0].mxu0
        %v1845 = vadd.f32 0.0, %v1844
        %1846 = vmatprep.mubr.bf16.mxu0 0
        %1847 = vmatmul.mubr.bf16.gmra.mrb[0].mxu0 %v1677
        %v1848 = vpop.f32.mrb[0].mxu0
        %v1849 = vadd.f32 0.0, %v1848
        %v1850 = vpop.f32.mrb[0].mxu0
        %v1851 = vadd.f32 0.0, %v1850
        %v1852 = vpop.f32.mrb[0].mxu0
        %v1853 = vadd.f32 0.0, %v1852
        %v1854 = vpop.f32.mrb[0].mxu0
        %v1855 = vadd.f32 0.0, %v1854
        %1856 = vmatprep.mubr.bf16.mxu0 0
        %1857 = vmatmul.mubr.bf16.gmra.mrb[0].mxu0 %v1680
        %v1858 = vpop.f32.mrb[0].mxu0
        %v1859 = vadd.f32 0.0, %v1858
        %v1860 = vpop.f32.mrb[0].mxu0
        %v1861 = vadd.f32 0.0, %v1860
        %v1862 = vpop.f32.mrb[0].mxu0
        %v1863 = vadd.f32 0.0, %v1862
        %v1864 = vpop.f32.mrb[0].mxu0
        %v1865 = vadd.f32 0.0, %v1864
        %1866 = vmatprep.mubr.bf16.mxu0 0
        %1867 = vmatmul.mubr.bf16.gmra.mrb[0].mxu0 %v1683
        %v1868 = vpop.f32.mrb[0].mxu0
        %v1869 = vadd.f32 0.0, %v1868
        %v1870 = vpop.f32.mrb[0].mxu0
        %v1871 = vadd.f32 0.0, %v1870
        %v1872 = vpop.f32.mrb[0].mxu0
        %v1873 = vadd.f32 0.0, %v1872
        %v1874 = vpop.f32.mrb[0].mxu0
        %v1875 = vadd.f32 0.0, %v1874
        %1876 = vmatprep.mubr.bf16.mxu0 0
        %1877 = vmatmul.mubr.bf16.gmra.mrb[0].mxu0 %v1686
        %v1878 = vpop.f32.mrb[0].mxu0
        %v1879 = vadd.f32 0.0, %v1878
        %v1880 = vpop.f32.mrb[0].mxu0
        %v1881 = vadd.f32 0.0, %v1880
        %v1882 = vpop.f32.mrb[0].mxu0
        %v1883 = vadd.f32 0.0, %v1882
        %v1884 = vpop.f32.mrb[0].mxu0
        %v1885 = vadd.f32 0.0, %v1884
        %1886 = vdwg.mxu0
        %v1887 = vadd.f32 %v1505, %v1729
        %v1888 = vadd.f32 %v1506, %v1731
        %v1889 = vadd.f32 %v1507, %v1733
        %v1890 = vadd.f32 %v1508, %v1735
        %v1891 = vadd.f32 %v1509, %v1739
        %v1892 = vadd.f32 %v1510, %v1741
        %v1893 = vadd.f32 %v1511, %v1743
        %v1894 = vadd.f32 %v1512, %v1745
        %v1895 = vadd.f32 %v1513, %v1749
        %v1896 = vadd.f32 %v1514, %v1751
        %v1897 = vadd.f32 %v1515, %v1753
        %v1898 = vadd.f32 %v1516, %v1755
        %v1899 = vadd.f32 %v1517, %v1759
        %v1900 = vadd.f32 %v1518, %v1761
        %v1901 = vadd.f32 %v1519, %v1763
        %v1902 = vadd.f32 %v1520, %v1765
        %v1903 = vadd.f32 %v1521, %v1769
        %v1904 = vadd.f32 %v1522, %v1771
        %v1905 = vadd.f32 %v1523, %v1773
        %v1906 = vadd.f32 %v1524, %v1775
        %v1907 = vadd.f32 %v1525, %v1779
        %v1908 = vadd.f32 %v1526, %v1781
        %v1909 = vadd.f32 %v1527, %v1783
        %v1910 = vadd.f32 %v1528, %v1785
        %v1911 = vadd.f32 %v1529, %v1789
        %v1912 = vadd.f32 %v1530, %v1791
        %v1913 = vadd.f32 %v1531, %v1793
        %v1914 = vadd.f32 %v1532, %v1795
        %v1915 = vadd.f32 %v1533, %v1799
        %v1916 = vadd.f32 %v1534, %v1801
        %v1917 = vadd.f32 %v1535, %v1803
        %v1918 = vadd.f32 %v1536, %v1805
        %v1919 = vadd.f32 %v1537, %v1809
        %v1920 = vadd.f32 %v1538, %v1811
        %v1921 = vadd.f32 %v1539, %v1813
        %v1922 = vadd.f32 %v1540, %v1815
        %v1923 = vadd.f32 %v1541, %v1819
        %v1924 = vadd.f32 %v1542, %v1821
        %v1925 = vadd.f32 %v1543, %v1823
        %v1926 = vadd.f32 %v1544, %v1825
        %v1927 = vadd.f32 %v1545, %v1829
        %v1928 = vadd.f32 %v1546, %v1831
        %v1929 = vadd.f32 %v1547, %v1833
        %v1930 = vadd.f32 %v1548, %v1835
        %v1931 = vadd.f32 %v1549, %v1839
        %v1932 = vadd.f32 %v1550, %v1841
        %v1933 = vadd.f32 %v1551, %v1843
        %v1934 = vadd.f32 %v1552, %v1845
        %v1935 = vadd.f32 %v1553, %v1849
        %v1936 = vadd.f32 %v1554, %v1851
        %v1937 = vadd.f32 %v1555, %v1853
        %v1938 = vadd.f32 %v1556, %v1855
        %v1939 = vadd.f32 %v1557, %v1859
        %v1940 = vadd.f32 %v1558, %v1861
        %v1941 = vadd.f32 %v1559, %v1863
        %v1942 = vadd.f32 %v1560, %v1865
        %v1943 = vadd.f32 %v1561, %v1869
        %v1944 = vadd.f32 %v1562, %v1871
        %v1945 = vadd.f32 %v1563, %v1873
        %v1946 = vadd.f32 %v1564, %v1875
        %v1947 = vadd.f32 %v1565, %v1879
        %v1948 = vadd.f32 %v1566, %v1881
        %v1949 = vadd.f32 %v1567, %v1883
        %v1950 = vadd.f32 %v1568, %v1885
        %v1951 = vld [vmem:[#allocation2 + $0x4] sm:$0xff]
        %v1952 = vld [vmem:[#allocation2 + $0xc] sm:$0xff]
        %v1953 = vld [vmem:[#allocation2 + $0x14] sm:$0xff]
        %v1954 = vld [vmem:[#allocation2 + $0x1c] sm:$0xff]
        %v1955 = vld [vmem:[#allocation2 + $0x24] sm:$0xff]
        %v1956 = vld [vmem:[#allocation2 + $0x2c] sm:$0xff]
        %v1957 = vld [vmem:[#allocation2 + $0x34] sm:$0xff]
        %v1958 = vld [vmem:[#allocation2 + $0x3c] sm:$0xff]
        %v1959 = vld [vmem:[#allocation2 + $0x44] sm:$0xff]
        %v1960 = vld [vmem:[#allocation2 + $0x4c] sm:$0xff]
        %v1961 = vld [vmem:[#allocation2 + $0x54] sm:$0xff]
        %v1962 = vld [vmem:[#allocation2 + $0x5c] sm:$0xff]
        %v1963 = vld [vmem:[#allocation2 + $0x64] sm:$0xff]
        %v1964 = vld [vmem:[#allocation2 + $0x6c] sm:$0xff]
        %v1965 = vld [vmem:[#allocation2 + $0x74] sm:$0xff]
        %v1966 = vld [vmem:[#allocation2 + $0x7c] sm:$0xff]
        %v1967 = vld [vmem:[#allocation2 + $0x84] sm:$0xff]
        %v1968 = vld [vmem:[#allocation2 + $0x8c] sm:$0xff]
        %v1969 = vld [vmem:[#allocation2 + $0x94] sm:$0xff]
        %v1970 = vld [vmem:[#allocation2 + $0x9c] sm:$0xff]
        %v1971 = vld [vmem:[#allocation2 + $0xa4] sm:$0xff]
        %v1972 = vld [vmem:[#allocation2 + $0xac] sm:$0xff]
        %v1973 = vld [vmem:[#allocation2 + $0xb4] sm:$0xff]
        %v1974 = vld [vmem:[#allocation2 + $0xbc] sm:$0xff]
        %v1975 = vld [vmem:[#allocation2 + $0xc4] sm:$0xff]
        %v1976 = vld [vmem:[#allocation2 + $0xcc] sm:$0xff]
        %v1977 = vld [vmem:[#allocation2 + $0xd4] sm:$0xff]
        %v1978 = vld [vmem:[#allocation2 + $0xdc] sm:$0xff]
        %v1979 = vld [vmem:[#allocation2 + $0xe4] sm:$0xff]
        %v1980 = vld [vmem:[#allocation2 + $0xec] sm:$0xff]
        %v1981 = vld [vmem:[#allocation2 + $0xf4] sm:$0xff]
        %v1982 = vld [vmem:[#allocation2 + $0xfc] sm:$0xff]
        %v1983 = vpack.c.bf16 %v1952, %v1951
        %v1984 = vpack.c.bf16 %v1954, %v1953
        %v1985 = vpack.c.bf16 %v1956, %v1955
        %v1986 = vpack.c.bf16 %v1958, %v1957
        %v1987 = vpack.c.bf16 %v1960, %v1959
        %v1988 = vpack.c.bf16 %v1962, %v1961
        %v1989 = vpack.c.bf16 %v1964, %v1963
        %v1990 = vpack.c.bf16 %v1966, %v1965
        %v1991 = vpack.c.bf16 %v1968, %v1967
        %v1992 = vpack.c.bf16 %v1970, %v1969
        %v1993 = vpack.c.bf16 %v1972, %v1971
        %v1994 = vpack.c.bf16 %v1974, %v1973
        %v1995 = vpack.c.bf16 %v1976, %v1975
        %v1996 = vpack.c.bf16 %v1978, %v1977
        %v1997 = vpack.c.bf16 %v1980, %v1979
        %v1998 = vpack.c.bf16 %v1982, %v1981
        %s1999 = scalar_lea.vmem %s1, 128
        %v2000 = vld [vmem:[%s1999] sm:$0xff]
        %v2001 = vld [vmem:[%s1999 + $0x8] sm:$0xff]
        %v2002 = vld [vmem:[%s1999 + $0x10] sm:$0xff]
        %v2003 = vld [vmem:[%s1999 + $0x18] sm:$0x33]
        %v2008 = vunpack.c.l.b16 %v2000
        %v2009 = vunpack.c.h.b16 %v2000
        %v2010 = vunpack.c.l.b16 %v2001
        %v2011 = vunpack.c.h.b16 %v2001
        %v2012 = vunpack.c.l.b16 %v2002
        %v2013 = vunpack.c.h.b16 %v2002
        %v2014 = vunpack.c.l.b16 %v2003
        %v2015 = vunpack.c.h.b16 %v2003
        %v2016 = vpack.c.b16 %v2010, %v2008
        %v2017 = vpack.c.b16 %v2011, %v2009
        %v2018 = vpack.c.b16 %v2014, %v2012
        %v2019 = vpack.c.b16 %v2015, %v2013
        %v2023 = vsel %vm445, %v1983, 0
        %v2026 = vsel %vm445, %v1984, 0
        %v2029 = vsel %vm445, %v1985, 0
        %v2032 = vsel %vm445, %v1986, 0
        %v2035 = vsel %vm445, %v1987, 0
        %v2038 = vsel %vm445, %v1988, 0
        %v2041 = vsel %vm445, %v1989, 0
        %v2044 = vsel %vm445, %v1990, 0
        %v2047 = vsel %vm445, %v1991, 0
        %v2050 = vsel %vm445, %v1992, 0
        %v2053 = vsel %vm445, %v1993, 0
        %v2056 = vsel %vm445, %v1994, 0
        %v2059 = vsel %vm445, %v1995, 0
        %v2062 = vsel %vm445, %v1996, 0
        %v2065 = vsel %vm445, %v1997, 0
        %v2068 = vsel %vm445, %v1998, 0
        %v2071 = vsel %vm722, %v2018, 0
        %v2074 = vsel %vm722, %v2019, 0
        %2076 = vmatprep.subr.bf16.mxu0 %v2017
        %2077 = vmatpush1.bf16.msra.mxu0 %v2016
        %2078 = vmatprep.subr.bf16.mxu0 %v2074
        %2079 = vmatpush1.bf16.msra.mxu0 %v2071
        %2080 = vmatprep.subr.bf16.mxu0 0
        %2081 = vmatpush1.bf16.msra.mxu0 0
        %2082 = vmatprep.subr.bf16.mxu0 0
        %2083 = vmatpush1.bf16.msra.mxu0 0
        %2084 = vmatprep.subr.bf16.mxu0 0
        %2085 = vmatpush1.bf16.msra.mxu0 0
        %2086 = vmatprep.subr.bf16.mxu0 0
        %2087 = vmatpush1.bf16.msra.mxu0 0
        %2088 = vmatprep.subr.bf16.mxu0 0
        %2089 = vmatpush1.bf16.msra.mxu0 0
        %2090 = vmatprep.subr.bf16.mxu0 0
        %2091 = vmatpush1.bf16.msra.mxu0 0
        %2092 = vmatprep.subr.bf16.mxu0 0
        %2093 = vmatpush1.bf16.msra.mxu0 0
        %2094 = vmatprep.subr.bf16.mxu0 0
        %2095 = vmatpush1.bf16.msra.mxu0 0
        %2096 = vmatprep.subr.bf16.mxu0 0
        %2097 = vmatpush1.bf16.msra.mxu0 0
        %2098 = vmatprep.subr.bf16.mxu0 0
        %2099 = vmatpush1.bf16.msra.mxu0 0
        %2100 = vmatprep.subr.bf16.mxu0 0
        %2101 = vmatpush1.bf16.msra.mxu0 0
        %2102 = vmatprep.subr.bf16.mxu0 0
        %2103 = vmatpush1.bf16.msra.mxu0 0
        %2104 = vmatprep.subr.bf16.mxu0 0
        %2105 = vmatpush1.bf16.msra.mxu0 0
        %2106 = vmatprep.subr.bf16.mxu0 0
        %2107 = vmatpush1.bf16.msra.mxu0 0
        %2108 = vmatprep.mubr.bf16.mxu0 0
        %2109 = vmatmul.mubr.bf16.gmra.mrb[0].mxu0 %v2023
        %v2110 = vpop.f32.mrb[0].mxu0
        %v2111 = vadd.f32 0.0, %v2110
        %v2112 = vpop.f32.mrb[0].mxu0
        %v2113 = vadd.f32 0.0, %v2112
        %v2114 = vpop.f32.mrb[0].mxu0
        %v2115 = vadd.f32 0.0, %v2114
        %v2116 = vpop.f32.mrb[0].mxu0
        %v2117 = vadd.f32 0.0, %v2116
        %2118 = vmatprep.mubr.bf16.mxu0 0
        %2119 = vmatmul.mubr.bf16.gmra.mrb[0].mxu0 %v2026
        %v2120 = vpop.f32.mrb[0].mxu0
        %v2121 = vadd.f32 0.0, %v2120
        %v2122 = vpop.f32.mrb[0].mxu0
        %v2123 = vadd.f32 0.0, %v2122
        %v2124 = vpop.f32.mrb[0].mxu0
        %v2125 = vadd.f32 0.0, %v2124
        %v2126 = vpop.f32.mrb[0].mxu0
        %v2127 = vadd.f32 0.0, %v2126
        %2128 = vmatprep.mubr.bf16.mxu0 0
        %2129 = vmatmul.mubr.bf16.gmra.mrb[0].mxu0 %v2029
        %v2130 = vpop.f32.mrb[0].mxu0
        %v2131 = vadd.f32 0.0, %v2130
        %v2132 = vpop.f32.mrb[0].mxu0
        %v2133 = vadd.f32 0.0, %v2132
        %v2134 = vpop.f32.mrb[0].mxu0
        %v2135 = vadd.f32 0.0, %v2134
        %v2136 = vpop.f32.mrb[0].mxu0
        %v2137 = vadd.f32 0.0, %v2136
        %2138 = vmatprep.mubr.bf16.mxu0 0
        %2139 = vmatmul.mubr.bf16.gmra.mrb[0].mxu0 %v2032
        %v2140 = vpop.f32.mrb[0].mxu0
        %v2141 = vadd.f32 0.0, %v2140
        %v2142 = vpop.f32.mrb[0].mxu0
        %v2143 = vadd.f32 0.0, %v2142
        %v2144 = vpop.f32.mrb[0].mxu0
        %v2145 = vadd.f32 0.0, %v2144
        %v2146 = vpop.f32.mrb[0].mxu0
        %v2147 = vadd.f32 0.0, %v2146
        %2148 = vmatprep.mubr.bf16.mxu0 0
        %2149 = vmatmul.mubr.bf16.gmra.mrb[0].mxu0 %v2035
        %v2150 = vpop.f32.mrb[0].mxu0
        %v2151 = vadd.f32 0.0, %v2150
        %v2152 = vpop.f32.mrb[0].mxu0
        %v2153 = vadd.f32 0.0, %v2152
        %v2154 = vpop.f32.mrb[0].mxu0
        %v2155 = vadd.f32 0.0, %v2154
        %v2156 = vpop.f32.mrb[0].mxu0
        %v2157 = vadd.f32 0.0, %v2156
        %2158 = vmatprep.mubr.bf16.mxu0 0
        %2159 = vmatmul.mubr.bf16.gmra.mrb[0].mxu0 %v2038
        %v2160 = vpop.f32.mrb[0].mxu0
        %v2161 = vadd.f32 0.0, %v2160
        %v2162 = vpop.f32.mrb[0].mxu0
        %v2163 = vadd.f32 0.0, %v2162
        %v2164 = vpop.f32.mrb[0].mxu0
        %v2165 = vadd.f32 0.0, %v2164
        %v2166 = vpop.f32.mrb[0].mxu0
        %v2167 = vadd.f32 0.0, %v2166
        %2168 = vmatprep.mubr.bf16.mxu0 0
        %2169 = vmatmul.mubr.bf16.gmra.mrb[0].mxu0 %v2041
        %v2170 = vpop.f32.mrb[0].mxu0
        %v2171 = vadd.f32 0.0, %v2170
        %v2172 = vpop.f32.mrb[0].mxu0
        %v2173 = vadd.f32 0.0, %v2172
        %v2174 = vpop.f32.mrb[0].mxu0
        %v2175 = vadd.f32 0.0, %v2174
        %v2176 = vpop.f32.mrb[0].mxu0
        %v2177 = vadd.f32 0.0, %v2176
        %2178 = vmatprep.mubr.bf16.mxu0 0
        %2179 = vmatmul.mubr.bf16.gmra.mrb[0].mxu0 %v2044
        %v2180 = vpop.f32.mrb[0].mxu0
        %v2181 = vadd.f32 0.0, %v2180
        %v2182 = vpop.f32.mrb[0].mxu0
        %v2183 = vadd.f32 0.0, %v2182
        %v2184 = vpop.f32.mrb[0].mxu0
        %v2185 = vadd.f32 0.0, %v2184
        %v2186 = vpop.f32.mrb[0].mxu0
        %v2187 = vadd.f32 0.0, %v2186
        %2188 = vmatprep.mubr.bf16.mxu0 0
        %2189 = vmatmul.mubr.bf16.gmra.mrb[0].mxu0 %v2047
        %v2190 = vpop.f32.mrb[0].mxu0
        %v2191 = vadd.f32 0.0, %v2190
        %v2192 = vpop.f32.mrb[0].mxu0
        %v2193 = vadd.f32 0.0, %v2192
        %v2194 = vpop.f32.mrb[0].mxu0
        %v2195 = vadd.f32 0.0, %v2194
        %v2196 = vpop.f32.mrb[0].mxu0
        %v2197 = vadd.f32 0.0, %v2196
        %2198 = vmatprep.mubr.bf16.mxu0 0
        %2199 = vmatmul.mubr.bf16.gmra.mrb[0].mxu0 %v2050
        %v2200 = vpop.f32.mrb[0].mxu0
        %v2201 = vadd.f32 0.0, %v2200
        %v2202 = vpop.f32.mrb[0].mxu0
        %v2203 = vadd.f32 0.0, %v2202
        %v2204 = vpop.f32.mrb[0].mxu0
        %v2205 = vadd.f32 0.0, %v2204
        %v2206 = vpop.f32.mrb[0].mxu0
        %v2207 = vadd.f32 0.0, %v2206
        %2208 = vmatprep.mubr.bf16.mxu0 0
        %2209 = vmatmul.mubr.bf16.gmra.mrb[0].mxu0 %v2053
        %v2210 = vpop.f32.mrb[0].mxu0
        %v2211 = vadd.f32 0.0, %v2210
        %v2212 = vpop.f32.mrb[0].mxu0
        %v2213 = vadd.f32 0.0, %v2212
        %v2214 = vpop.f32.mrb[0].mxu0
        %v2215 = vadd.f32 0.0, %v2214
        %v2216 = vpop.f32.mrb[0].mxu0
        %v2217 = vadd.f32 0.0, %v2216
        %2218 = vmatprep.mubr.bf16.mxu0 0
        %2219 = vmatmul.mubr.bf16.gmra.mrb[0].mxu0 %v2056
        %v2220 = vpop.f32.mrb[0].mxu0
        %v2221 = vadd.f32 0.0, %v2220
        %v2222 = vpop.f32.mrb[0].mxu0
        %v2223 = vadd.f32 0.0, %v2222
        %v2224 = vpop.f32.mrb[0].mxu0
        %v2225 = vadd.f32 0.0, %v2224
        %v2226 = vpop.f32.mrb[0].mxu0
        %v2227 = vadd.f32 0.0, %v2226
        %2228 = vmatprep.mubr.bf16.mxu0 0
        %2229 = vmatmul.mubr.bf16.gmra.mrb[0].mxu0 %v2059
        %v2230 = vpop.f32.mrb[0].mxu0
        %v2231 = vadd.f32 0.0, %v2230
        %v2232 = vpop.f32.mrb[0].mxu0
        %v2233 = vadd.f32 0.0, %v2232
        %v2234 = vpop.f32.mrb[0].mxu0
        %v2235 = vadd.f32 0.0, %v2234
        %v2236 = vpop.f32.mrb[0].mxu0
        %v2237 = vadd.f32 0.0, %v2236
        %2238 = vmatprep.mubr.bf16.mxu0 0
        %2239 = vmatmul.mubr.bf16.gmra.mrb[0].mxu0 %v2062
        %v2240 = vpop.f32.mrb[0].mxu0
        %v2241 = vadd.f32 0.0, %v2240
        %v2242 = vpop.f32.mrb[0].mxu0
        %v2243 = vadd.f32 0.0, %v2242
        %v2244 = vpop.f32.mrb[0].mxu0
        %v2245 = vadd.f32 0.0, %v2244
        %v2246 = vpop.f32.mrb[0].mxu0
        %v2247 = vadd.f32 0.0, %v2246
        %2248 = vmatprep.mubr.bf16.mxu0 0
        %2249 = vmatmul.mubr.bf16.gmra.mrb[0].mxu0 %v2065
        %v2250 = vpop.f32.mrb[0].mxu0
        %v2251 = vadd.f32 0.0, %v2250
        %v2252 = vpop.f32.mrb[0].mxu0
        %v2253 = vadd.f32 0.0, %v2252
        %v2254 = vpop.f32.mrb[0].mxu0
        %v2255 = vadd.f32 0.0, %v2254
        %v2256 = vpop.f32.mrb[0].mxu0
        %v2257 = vadd.f32 0.0, %v2256
        %2258 = vmatprep.mubr.bf16.mxu0 0
        %2259 = vmatmul.mubr.bf16.gmra.mrb[0].mxu0 %v2068
        %v2260 = vpop.f32.mrb[0].mxu0
        %v2261 = vadd.f32 0.0, %v2260
        %v2262 = vpop.f32.mrb[0].mxu0
        %v2263 = vadd.f32 0.0, %v2262
        %v2264 = vpop.f32.mrb[0].mxu0
        %v2265 = vadd.f32 0.0, %v2264
        %v2266 = vpop.f32.mrb[0].mxu0
        %v2267 = vadd.f32 0.0, %v2266
        %2268 = vdwg.mxu0
        %v2269 = vadd.f32 %v1887, %v2111
        %v2270 = vadd.f32 %v1888, %v2113
        %v2271 = vadd.f32 %v1889, %v2115
        %v2272 = vadd.f32 %v1890, %v2117
        %v2273 = vadd.f32 %v1891, %v2121
        %v2274 = vadd.f32 %v1892, %v2123
        %v2275 = vadd.f32 %v1893, %v2125
        %v2276 = vadd.f32 %v1894, %v2127
        %v2277 = vadd.f32 %v1895, %v2131
        %v2278 = vadd.f32 %v1896, %v2133
        %v2279 = vadd.f32 %v1897, %v2135
        %v2280 = vadd.f32 %v1898, %v2137
        %v2281 = vadd.f32 %v1899, %v2141
        %v2282 = vadd.f32 %v1900, %v2143
        %v2283 = vadd.f32 %v1901, %v2145
        %v2284 = vadd.f32 %v1902, %v2147
        %v2285 = vadd.f32 %v1903, %v2151
        %v2286 = vadd.f32 %v1904, %v2153
        %v2287 = vadd.f32 %v1905, %v2155
        %v2288 = vadd.f32 %v1906, %v2157
        %v2289 = vadd.f32 %v1907, %v2161
        %v2290 = vadd.f32 %v1908, %v2163
        %v2291 = vadd.f32 %v1909, %v2165
        %v2292 = vadd.f32 %v1910, %v2167
        %v2293 = vadd.f32 %v1911, %v2171
        %v2294 = vadd.f32 %v1912, %v2173
        %v2295 = vadd.f32 %v1913, %v2175
        %v2296 = vadd.f32 %v1914, %v2177
        %v2297 = vadd.f32 %v1915, %v2181
        %v2298 = vadd.f32 %v1916, %v2183
        %v2299 = vadd.f32 %v1917, %v2185
        %v2300 = vadd.f32 %v1918, %v2187
        %v2301 = vadd.f32 %v1919, %v2191
        %v2302 = vadd.f32 %v1920, %v2193
        %v2303 = vadd.f32 %v1921, %v2195
        %v2304 = vadd.f32 %v1922, %v2197
        %v2305 = vadd.f32 %v1923, %v2201
        %v2306 = vadd.f32 %v1924, %v2203
        %v2307 = vadd.f32 %v1925, %v2205
        %v2308 = vadd.f32 %v1926, %v2207
        %v2309 = vadd.f32 %v1927, %v2211
        %v2310 = vadd.f32 %v1928, %v2213
        %v2311 = vadd.f32 %v1929, %v2215
        %v2312 = vadd.f32 %v1930, %v2217
        %v2313 = vadd.f32 %v1931, %v2221
        %v2314 = vadd.f32 %v1932, %v2223
        %v2315 = vadd.f32 %v1933, %v2225
        %v2316 = vadd.f32 %v1934, %v2227
        %v2317 = vadd.f32 %v1935, %v2231
        %v2318 = vadd.f32 %v1936, %v2233
        %v2319 = vadd.f32 %v1937, %v2235
        %v2320 = vadd.f32 %v1938, %v2237
        %v2321 = vadd.f32 %v1939, %v2241
        %v2322 = vadd.f32 %v1940, %v2243
        %v2323 = vadd.f32 %v1941, %v2245
        %v2324 = vadd.f32 %v1942, %v2247
        %v2325 = vadd.f32 %v1943, %v2251
        %v2326 = vadd.f32 %v1944, %v2253
        %v2327 = vadd.f32 %v1945, %v2255
        %v2328 = vadd.f32 %v1946, %v2257
        %v2329 = vadd.f32 %v1947, %v2261
        %v2330 = vadd.f32 %v1948, %v2263
        %v2331 = vadd.f32 %v1949, %v2265
        %v2332 = vadd.f32 %v1950, %v2267
        %v2333 = vld [vmem:[%s2] sm:$0x3]
        %v2335 = vlaneseq
        %v2336 = vshrl.u32 %v2335, 7
        %v2337 = vsub.s32 0, %v2336
        %v2338 = vrot.slane %v2333, %v2337
        %v2339 = vlaneseq
        %v2340 = vshrl.u32 %v2339, 7
        %v2341 = vsub.s32 1, %v2340
        %v2342 = vrot.slane %v2333, %v2341
        %v2345 = vadd.f32 %v2269, %v2338
        %v2346 = vadd.f32 %v2270, %v2342
        %v2347 = vadd.f32 %v2271, %v2338
        %v2348 = vadd.f32 %v2272, %v2342
        %v2349 = vadd.f32 %v2273, %v2338
        %v2350 = vadd.f32 %v2274, %v2342
        %v2351 = vadd.f32 %v2275, %v2338
        %v2352 = vadd.f32 %v2276, %v2342
        %v2353 = vadd.f32 %v2277, %v2338
        %v2354 = vadd.f32 %v2278, %v2342
        %v2355 = vadd.f32 %v2279, %v2338
        %v2356 = vadd.f32 %v2280, %v2342
        %v2357 = vadd.f32 %v2281, %v2338
        %v2358 = vadd.f32 %v2282, %v2342
        %v2359 = vadd.f32 %v2283, %v2338
        %v2360 = vadd.f32 %v2284, %v2342
        %v2361 = vadd.f32 %v2285, %v2338
        %v2362 = vadd.f32 %v2286, %v2342
        %v2363 = vadd.f32 %v2287, %v2338
        %v2364 = vadd.f32 %v2288, %v2342
        %v2365 = vadd.f32 %v2289, %v2338
        %v2366 = vadd.f32 %v2290, %v2342
        %v2367 = vadd.f32 %v2291, %v2338
        %v2368 = vadd.f32 %v2292, %v2342
        %v2369 = vadd.f32 %v2293, %v2338
        %v2370 = vadd.f32 %v2294, %v2342
        %v2371 = vadd.f32 %v2295, %v2338
        %v2372 = vadd.f32 %v2296, %v2342
        %v2373 = vadd.f32 %v2297, %v2338
        %v2374 = vadd.f32 %v2298, %v2342
        %v2375 = vadd.f32 %v2299, %v2338
        %v2376 = vadd.f32 %v2300, %v2342
        %v2377 = vadd.f32 %v2301, %v2338
        %v2378 = vadd.f32 %v2302, %v2342
        %v2379 = vadd.f32 %v2303, %v2338
        %v2380 = vadd.f32 %v2304, %v2342
        %v2381 = vadd.f32 %v2305, %v2338
        %v2382 = vadd.f32 %v2306, %v2342
        %v2383 = vadd.f32 %v2307, %v2338
        %v2384 = vadd.f32 %v2308, %v2342
        %v2385 = vadd.f32 %v2309, %v2338
        %v2386 = vadd.f32 %v2310, %v2342
        %v2387 = vadd.f32 %v2311, %v2338
        %v2388 = vadd.f32 %v2312, %v2342
        %v2389 = vadd.f32 %v2313, %v2338
        %v2390 = vadd.f32 %v2314, %v2342
        %v2391 = vadd.f32 %v2315, %v2338
        %v2392 = vadd.f32 %v2316, %v2342
        %v2393 = vadd.f32 %v2317, %v2338
        %v2394 = vadd.f32 %v2318, %v2342
        %v2395 = vadd.f32 %v2319, %v2338
        %v2396 = vadd.f32 %v2320, %v2342
        %v2397 = vadd.f32 %v2321, %v2338
        %v2398 = vadd.f32 %v2322, %v2342
        %v2399 = vadd.f32 %v2323, %v2338
        %v2400 = vadd.f32 %v2324, %v2342
        %v2401 = vadd.f32 %v2325, %v2338
        %v2402 = vadd.f32 %v2326, %v2342
        %v2403 = vadd.f32 %v2327, %v2338
        %v2404 = vadd.f32 %v2328, %v2342
        %v2405 = vadd.f32 %v2329, %v2338
        %v2406 = vadd.f32 %v2330, %v2342
        %v2407 = vadd.f32 %v2331, %v2338
        %v2408 = vadd.f32 %v2332, %v2342
        %v2409 = vtanh.pop %v2345
        %v2410 = vtanh.pop %v2346
        %v2411 = vtanh.pop %v2347
        %v2412 = vtanh.pop %v2348
        %v2413 = vtanh.pop %v2349
        %v2414 = vtanh.pop %v2350
        %v2415 = vtanh.pop %v2351
        %v2416 = vtanh.pop %v2352
        %v2417 = vtanh.pop %v2353
        %v2418 = vtanh.pop %v2354
        %v2419 = vtanh.pop %v2355
        %v2420 = vtanh.pop %v2356
        %v2421 = vtanh.pop %v2357
        %v2422 = vtanh.pop %v2358
        %v2423 = vtanh.pop %v2359
        %v2424 = vtanh.pop %v2360
        %v2425 = vtanh.pop %v2361
        %v2426 = vtanh.pop %v2362
        %v2427 = vtanh.pop %v2363
        %v2428 = vtanh.pop %v2364
        %v2429 = vtanh.pop %v2365
        %v2430 = vtanh.pop %v2366
        %v2431 = vtanh.pop %v2367
        %v2432 = vtanh.pop %v2368
        %v2433 = vtanh.pop %v2369
        %v2434 = vtanh.pop %v2370
        %v2435 = vtanh.pop %v2371
        %v2436 = vtanh.pop %v2372
        %v2437 = vtanh.pop %v2373
        %v2438 = vtanh.pop %v2374
        %v2439 = vtanh.pop %v2375
        %v2440 = vtanh.pop %v2376
        %v2441 = vtanh.pop %v2377
        %v2442 = vtanh.pop %v2378
        %v2443 = vtanh.pop %v2379
        %v2444 = vtanh.pop %v2380
        %v2445 = vtanh.pop %v2381
        %v2446 = vtanh.pop %v2382
        %v2447 = vtanh.pop %v2383
        %v2448 = vtanh.pop %v2384
        %v2449 = vtanh.pop %v2385
        %v2450 = vtanh.pop %v2386
        %v2451 = vtanh.pop %v2387
        %v2452 = vtanh.pop %v2388
        %v2453 = vtanh.pop %v2389
        %v2454 = vtanh.pop %v2390
        %v2455 = vtanh.pop %v2391
        %v2456 = vtanh.pop %v2392
        %v2457 = vtanh.pop %v2393
        %v2458 = vtanh.pop %v2394
        %v2459 = vtanh.pop %v2395
        %v2460 = vtanh.pop %v2396
        %v2461 = vtanh.pop %v2397
        %v2462 = vtanh.pop %v2398
        %v2463 = vtanh.pop %v2399
        %v2464 = vtanh.pop %v2400
        %v2465 = vtanh.pop %v2401
        %v2466 = vtanh.pop %v2402
        %v2467 = vtanh.pop %v2403
        %v2468 = vtanh.pop %v2404
        %v2469 = vtanh.pop %v2405
        %v2470 = vtanh.pop %v2406
        %v2471 = vtanh.pop %v2407
        %v2472 = vtanh.pop %v2408
        %v2473 = vpack.c.bf16 %v2411, %v2409
        %v2474 = vpack.c.bf16 %v2412, %v2410
        %v2475 = vpack.c.bf16 %v2415, %v2413
        %v2476 = vpack.c.bf16 %v2416, %v2414
        %v2477 = vpack.c.bf16 %v2419, %v2417
        %v2478 = vpack.c.bf16 %v2420, %v2418
        %v2479 = vpack.c.bf16 %v2423, %v2421
        %v2480 = vpack.c.bf16 %v2424, %v2422
        %v2481 = vpack.c.bf16 %v2427, %v2425
        %v2482 = vpack.c.bf16 %v2428, %v2426
        %v2483 = vpack.c.bf16 %v2431, %v2429
        %v2484 = vpack.c.bf16 %v2432, %v2430
        %v2485 = vpack.c.bf16 %v2435, %v2433
        %v2486 = vpack.c.bf16 %v2436, %v2434
        %v2487 = vpack.c.bf16 %v2439, %v2437
        %v2488 = vpack.c.bf16 %v2440, %v2438
        %v2489 = vpack.c.bf16 %v2443, %v2441
        %v2490 = vpack.c.bf16 %v2444, %v2442
        %v2491 = vpack.c.bf16 %v2447, %v2445
        %v2492 = vpack.c.bf16 %v2448, %v2446
        %v2493 = vpack.c.bf16 %v2451, %v2449
        %v2494 = vpack.c.bf16 %v2452, %v2450
        %v2495 = vpack.c.bf16 %v2455, %v2453
        %v2496 = vpack.c.bf16 %v2456, %v2454
        %v2497 = vpack.c.bf16 %v2459, %v2457
        %v2498 = vpack.c.bf16 %v2460, %v2458
        %v2499 = vpack.c.bf16 %v2463, %v2461
        %v2500 = vpack.c.bf16 %v2464, %v2462
        %v2501 = vpack.c.bf16 %v2467, %v2465
        %v2502 = vpack.c.bf16 %v2468, %v2466
        %v2503 = vpack.c.bf16 %v2471, %v2469
        %v2504 = vpack.c.bf16 %v2472, %v2470
        %v2505 = vld [vmem:[%s3] sm:$0xf]
        %v2506 = vld [vmem:[%s3 + $0x4] sm:$0xf]
        %v2507 = vld [vmem:[%s3 + $0x8] sm:$0xf]
        %v2508 = vld [vmem:[%s3 + $0xc] sm:$0xf]
        %v2509 = vld [vmem:[%s3 + $0x10] sm:$0xf]
        %v2510 = vld [vmem:[%s3 + $0x14] sm:$0xf]
        %v2511 = vld [vmem:[%s3 + $0x18] sm:$0xf]
        %v2512 = vld [vmem:[%s3 + $0x1c] sm:$0xf]
        %v2513 = vld [vmem:[%s3 + $0x20] sm:$0xf]
        %v2514 = vld [vmem:[%s3 + $0x24] sm:$0xf]
        %v2515 = vld [vmem:[%s3 + $0x28] sm:$0xf]
        %v2516 = vld [vmem:[%s3 + $0x2c] sm:$0xf]
        %v2517 = vld [vmem:[%s3 + $0x30] sm:$0xf]
        %v2518 = vld [vmem:[%s3 + $0x34] sm:$0xf]
        %v2519 = vld [vmem:[%s3 + $0x38] sm:$0xf]
        %v2520 = vld [vmem:[%s3 + $0x3c] sm:$0xf]
        %v2521 = vld [vmem:[%s3 + $0x40] sm:$0xf]
        %v2522 = vld [vmem:[%s3 + $0x44] sm:$0xf]
        %v2523 = vld [vmem:[%s3 + $0x48] sm:$0xf]
        %v2524 = vld [vmem:[%s3 + $0x4c] sm:$0xf]
        %v2525 = vld [vmem:[%s3 + $0x50] sm:$0xf]
        %v2547 = vunpack.c.l.b16 %v2505
        %v2548 = vunpack.c.l.b16 %v2506
        %v2549 = vunpack.c.l.b16 %v2507
        %v2550 = vunpack.c.l.b16 %v2508
        %v2551 = vunpack.c.l.b16 %v2509
        %v2552 = vunpack.c.l.b16 %v2510
        %v2553 = vunpack.c.l.b16 %v2511
        %v2554 = vunpack.c.l.b16 %v2512
        %v2555 = vunpack.c.l.b16 %v2513
        %v2556 = vunpack.c.l.b16 %v2514
        %v2557 = vunpack.c.l.b16 %v2515
        %v2558 = vunpack.c.l.b16 %v2516
        %v2559 = vunpack.c.l.b16 %v2517
        %v2560 = vunpack.c.l.b16 %v2518
        %v2561 = vunpack.c.l.b16 %v2519
        %v2562 = vunpack.c.l.b16 %v2520
        %v2563 = vunpack.c.l.b16 %v2521
        %v2564 = vunpack.c.l.b16 %v2522
        %v2565 = vunpack.c.l.b16 %v2523
        %v2566 = vunpack.c.l.b16 %v2524
        %v2567 = vunpack.c.l.b16 %v2525
        %v2568 = vpack.c.b16 %v2548, %v2547
        %v2569 = vpack.c.b16 %v2550, %v2549
        %v2570 = vpack.c.b16 %v2552, %v2551
        %v2571 = vpack.c.b16 %v2554, %v2553
        %v2572 = vpack.c.b16 %v2556, %v2555
        %v2573 = vpack.c.b16 %v2558, %v2557
        %v2574 = vpack.c.b16 %v2560, %v2559
        %v2575 = vpack.c.b16 %v2562, %v2561
        %v2576 = vpack.c.b16 %v2564, %v2563
        %v2577 = vpack.c.b16 %v2566, %v2565
        %v2578 = vpack.c.b16 %v2567, %v2567
        %vm2589 = vcmask 326656
        %v2591 = vsel %vm2589, %v2474, 0
        %v2594 = vsel %vm2589, %v2476, 0
        %v2597 = vsel %vm2589, %v2478, 0
        %v2600 = vsel %vm2589, %v2480, 0
        %v2603 = vsel %vm2589, %v2482, 0
        %v2606 = vsel %vm2589, %v2484, 0
        %v2609 = vsel %vm2589, %v2486, 0
        %v2612 = vsel %vm2589, %v2488, 0
        %v2615 = vsel %vm2589, %v2490, 0
        %v2618 = vsel %vm2589, %v2492, 0
        %v2621 = vsel %vm2589, %v2494, 0
        %v2624 = vsel %vm2589, %v2496, 0
        %v2627 = vsel %vm2589, %v2498, 0
        %v2630 = vsel %vm2589, %v2500, 0
        %v2633 = vsel %vm2589, %v2502, 0
        %v2636 = vsel %vm2589, %v2504, 0
        %vm2638 = vcmask 1043456
        %v2640 = vsel %vm2638, %v2578, 0
        %2642 = vmatprep.subr.bf16.mxu0 0
        %2643 = vmatpush1.bf16.msra.mxu0 %v2568
        %2644 = vmatprep.subr.bf16.mxu0 0
        %2645 = vmatpush1.bf16.msra.mxu0 %v2569
        %2646 = vmatprep.subr.bf16.mxu0 0
        %2647 = vmatpush1.bf16.msra.mxu0 %v2570
        %2648 = vmatprep.subr.bf16.mxu0 0
        %2649 = vmatpush1.bf16.msra.mxu0 %v2571
        %2650 = vmatprep.subr.bf16.mxu0 0
        %2651 = vmatpush1.bf16.msra.mxu0 %v2572
        %2652 = vmatprep.subr.bf16.mxu0 0
        %2653 = vmatpush1.bf16.msra.mxu0 %v2573
        %2654 = vmatprep.subr.bf16.mxu0 0
        %2655 = vmatpush1.bf16.msra.mxu0 %v2574
        %2656 = vmatprep.subr.bf16.mxu0 0
        %2657 = vmatpush1.bf16.msra.mxu0 %v2575
        %2658 = vmatprep.subr.bf16.mxu0 0
        %2659 = vmatpush1.bf16.msra.mxu0 %v2576
        %2660 = vmatprep.subr.bf16.mxu0 0
        %2661 = vmatpush1.bf16.msra.mxu0 %v2577
        %2662 = vmatprep.subr.bf16.mxu0 0
        %2663 = vmatpush1.bf16.msra.mxu0 %v2640
        %2664 = vmatprep.subr.bf16.mxu0 0
        %2665 = vmatpush1.bf16.msra.mxu0 0
        %2666 = vmatprep.subr.bf16.mxu0 0
        %2667 = vmatpush1.bf16.msra.mxu0 0
        %2668 = vmatprep.subr.bf16.mxu0 0
        %2669 = vmatpush1.bf16.msra.mxu0 0
        %2670 = vmatprep.subr.bf16.mxu0 0
        %2671 = vmatpush1.bf16.msra.mxu0 0
        %2672 = vmatprep.subr.bf16.mxu0 0
        %2673 = vmatpush1.bf16.msra.mxu0 0
        %2674 = vmatprep.mubr.bf16.mxu0 %v2591
        %2675 = vmatmul.mubr.bf16.gmra.mrb[0].mxu0 %v2473
        %v2676 = vpop.f32.mrb[0].mxu0
        %v2677 = vadd.f32 0.0, %v2676
        %v2678 = vpop.f32.mrb[0].mxu0
        %v2679 = vpop.f32.mrb[0].mxu0
        %v2680 = vadd.f32 0.0, %v2679
        %v2681 = vpop.f32.mrb[0].mxu0
        %2682 = vmatprep.mubr.bf16.mxu0 %v2594
        %2683 = vmatmul.mubr.bf16.gmra.mrb[0].mxu0 %v2475
        %v2684 = vpop.f32.mrb[0].mxu0
        %v2685 = vadd.f32 0.0, %v2684
        %v2686 = vpop.f32.mrb[0].mxu0
        %v2687 = vpop.f32.mrb[0].mxu0
        %v2688 = vadd.f32 0.0, %v2687
        %v2689 = vpop.f32.mrb[0].mxu0
        %2690 = vmatprep.mubr.bf16.mxu0 %v2597
        %2691 = vmatmul.mubr.bf16.gmra.mrb[0].mxu0 %v2477
        %v2692 = vpop.f32.mrb[0].mxu0
        %v2693 = vadd.f32 0.0, %v2692
        %v2694 = vpop.f32.mrb[0].mxu0
        %v2695 = vpop.f32.mrb[0].mxu0
        %v2696 = vadd.f32 0.0, %v2695
        %v2697 = vpop.f32.mrb[0].mxu0
        %2698 = vmatprep.mubr.bf16.mxu0 %v2600
        %2699 = vmatmul.mubr.bf16.gmra.mrb[0].mxu0 %v2479
        %v2700 = vpop.f32.mrb[0].mxu0
        %v2701 = vadd.f32 0.0, %v2700
        %v2702 = vpop.f32.mrb[0].mxu0
        %v2703 = vpop.f32.mrb[0].mxu0
        %v2704 = vadd.f32 0.0, %v2703
        %v2705 = vpop.f32.mrb[0].mxu0
        %2706 = vmatprep.mubr.bf16.mxu0 %v2603
        %2707 = vmatmul.mubr.bf16.gmra.mrb[0].mxu0 %v2481
        %v2708 = vpop.f32.mrb[0].mxu0
        %v2709 = vadd.f32 0.0, %v2708
        %v2710 = vpop.f32.mrb[0].mxu0
        %v2711 = vpop.f32.mrb[0].mxu0
        %v2712 = vadd.f32 0.0, %v2711
        %v2713 = vpop.f32.mrb[0].mxu0
        %2714 = vmatprep.mubr.bf16.mxu0 %v2606
        %2715 = vmatmul.mubr.bf16.gmra.mrb[0].mxu0 %v2483
        %v2716 = vpop.f32.mrb[0].mxu0
        %v2717 = vadd.f32 0.0, %v2716
        %v2718 = vpop.f32.mrb[0].mxu0
        %v2719 = vpop.f32.mrb[0].mxu0
        %v2720 = vadd.f32 0.0, %v2719
        %v2721 = vpop.f32.mrb[0].mxu0
        %2722 = vmatprep.mubr.bf16.mxu0 %v2609
        %2723 = vmatmul.mubr.bf16.gmra.mrb[0].mxu0 %v2485
        %v2724 = vpop.f32.mrb[0].mxu0
        %v2725 = vadd.f32 0.0, %v2724
        %v2726 = vpop.f32.mrb[0].mxu0
        %v2727 = vpop.f32.mrb[0].mxu0
        %v2728 = vadd.f32 0.0, %v2727
        %v2729 = vpop.f32.mrb[0].mxu0
        %2730 = vmatprep.mubr.bf16.mxu0 %v2612
        %2731 = vmatmul.mubr.bf16.gmra.mrb[0].mxu0 %v2487
        %v2732 = vpop.f32.mrb[0].mxu0
        %v2733 = vadd.f32 0.0, %v2732
        %v2734 = vpop.f32.mrb[0].mxu0
        %v2735 = vpop.f32.mrb[0].mxu0
        %v2736 = vadd.f32 0.0, %v2735
        %v2737 = vpop.f32.mrb[0].mxu0
        %2738 = vmatprep.mubr.bf16.mxu0 %v2615
        %2739 = vmatmul.mubr.bf16.gmra.mrb[0].mxu0 %v2489
        %v2740 = vpop.f32.mrb[0].mxu0
        %v2741 = vadd.f32 0.0, %v2740
        %v2742 = vpop.f32.mrb[0].mxu0
        %v2743 = vpop.f32.mrb[0].mxu0
        %v2744 = vadd.f32 0.0, %v2743
        %v2745 = vpop.f32.mrb[0].mxu0
        %2746 = vmatprep.mubr.bf16.mxu0 %v2618
        %2747 = vmatmul.mubr.bf16.gmra.mrb[0].mxu0 %v2491
        %v2748 = vpop.f32.mrb[0].mxu0
        %v2749 = vadd.f32 0.0, %v2748
        %v2750 = vpop.f32.mrb[0].mxu0
        %v2751 = vpop.f32.mrb[0].mxu0
        %v2752 = vadd.f32 0.0, %v2751
        %v2753 = vpop.f32.mrb[0].mxu0
        %2754 = vmatprep.mubr.bf16.mxu0 %v2621
        %2755 = vmatmul.mubr.bf16.gmra.mrb[0].mxu0 %v2493
        %v2756 = vpop.f32.mrb[0].mxu0
        %v2757 = vadd.f32 0.0, %v2756
        %v2758 = vpop.f32.mrb[0].mxu0
        %v2759 = vpop.f32.mrb[0].mxu0
        %v2760 = vadd.f32 0.0, %v2759
        %v2761 = vpop.f32.mrb[0].mxu0
        %2762 = vmatprep.mubr.bf16.mxu0 %v2624
        %2763 = vmatmul.mubr.bf16.gmra.mrb[0].mxu0 %v2495
        %v2764 = vpop.f32.mrb[0].mxu0
        %v2765 = vadd.f32 0.0, %v2764
        %v2766 = vpop.f32.mrb[0].mxu0
        %v2767 = vpop.f32.mrb[0].mxu0
        %v2768 = vadd.f32 0.0, %v2767
        %v2769 = vpop.f32.mrb[0].mxu0
        %2770 = vmatprep.mubr.bf16.mxu0 %v2627
        %2771 = vmatmul.mubr.bf16.gmra.mrb[0].mxu0 %v2497
        %v2772 = vpop.f32.mrb[0].mxu0
        %v2773 = vadd.f32 0.0, %v2772
        %v2774 = vpop.f32.mrb[0].mxu0
        %v2775 = vpop.f32.mrb[0].mxu0
        %v2776 = vadd.f32 0.0, %v2775
        %v2777 = vpop.f32.mrb[0].mxu0
        %2778 = vmatprep.mubr.bf16.mxu0 %v2630
        %2779 = vmatmul.mubr.bf16.gmra.mrb[0].mxu0 %v2499
        %v2780 = vpop.f32.mrb[0].mxu0
        %v2781 = vadd.f32 0.0, %v2780
        %v2782 = vpop.f32.mrb[0].mxu0
        %v2783 = vpop.f32.mrb[0].mxu0
        %v2784 = vadd.f32 0.0, %v2783
        %v2785 = vpop.f32.mrb[0].mxu0
        %2786 = vmatprep.mubr.bf16.mxu0 %v2633
        %2787 = vmatmul.mubr.bf16.gmra.mrb[0].mxu0 %v2501
        %v2788 = vpop.f32.mrb[0].mxu0
        %v2789 = vadd.f32 0.0, %v2788
        %v2790 = vpop.f32.mrb[0].mxu0
        %v2791 = vpop.f32.mrb[0].mxu0
        %v2792 = vadd.f32 0.0, %v2791
        %v2793 = vpop.f32.mrb[0].mxu0
        %2794 = vmatprep.mubr.bf16.mxu0 %v2636
        %2795 = vmatmul.mubr.bf16.gmra.mrb[0].mxu0 %v2503
        %v2796 = vpop.f32.mrb[0].mxu0
        %v2797 = vadd.f32 0.0, %v2796
        %v2798 = vpop.f32.mrb[0].mxu0
        %v2799 = vpop.f32.mrb[0].mxu0
        %v2800 = vadd.f32 0.0, %v2799
        %v2801 = vpop.f32.mrb[0].mxu0
        %2802 = vdwg.mxu0
        %vm2803 = vcmask 687104
        %2804 = vst.msk [vmem:[#allocation3] sm:$0xff] %vm2803, %v2677
        %2805 = vst.msk [vmem:[#allocation3 + $0x8] sm:$0xff] %vm2803, %v2680
        %2806 = vst.msk [vmem:[#allocation3 + $0x10] sm:$0xff] %vm2803, %v2685
        %2807 = vst.msk [vmem:[#allocation3 + $0x18] sm:$0xff] %vm2803, %v2688
        %2808 = vst.msk [vmem:[#allocation3 + $0x20] sm:$0xff] %vm2803, %v2693
        %2809 = vst.msk [vmem:[#allocation3 + $0x28] sm:$0xff] %vm2803, %v2696
        %2810 = vst.msk [vmem:[#allocation3 + $0x30] sm:$0xff] %vm2803, %v2701
        %2811 = vst.msk [vmem:[#allocation3 + $0x38] sm:$0xff] %vm2803, %v2704
        %2812 = vst.msk [vmem:[#allocation3 + $0x40] sm:$0xff] %vm2803, %v2709
        %2813 = vst.msk [vmem:[#allocation3 + $0x48] sm:$0xff] %vm2803, %v2712
        %2814 = vst.msk [vmem:[#allocation3 + $0x50] sm:$0xff] %vm2803, %v2717
        %2815 = vst.msk [vmem:[#allocation3 + $0x58] sm:$0xff] %vm2803, %v2720
        %2816 = vst.msk [vmem:[#allocation3 + $0x60] sm:$0xff] %vm2803, %v2725
        %2817 = vst.msk [vmem:[#allocation3 + $0x68] sm:$0xff] %vm2803, %v2728
        %2818 = vst.msk [vmem:[#allocation3 + $0x70] sm:$0xff] %vm2803, %v2733
        %2819 = vst.msk [vmem:[#allocation3 + $0x78] sm:$0xff] %vm2803, %v2736
        %2820 = vst.msk [vmem:[#allocation3 + $0x80] sm:$0xff] %vm2803, %v2741
        %2821 = vst.msk [vmem:[#allocation3 + $0x88] sm:$0xff] %vm2803, %v2744
        %2822 = vst.msk [vmem:[#allocation3 + $0x90] sm:$0xff] %vm2803, %v2749
        %2823 = vst.msk [vmem:[#allocation3 + $0x98] sm:$0xff] %vm2803, %v2752
        %2824 = vst.msk [vmem:[#allocation3 + $0xa0] sm:$0xff] %vm2803, %v2757
        %2825 = vst.msk [vmem:[#allocation3 + $0xa8] sm:$0xff] %vm2803, %v2760
        %2826 = vst.msk [vmem:[#allocation3 + $0xb0] sm:$0xff] %vm2803, %v2765
        %2827 = vst.msk [vmem:[#allocation3 + $0xb8] sm:$0xff] %vm2803, %v2768
        %2828 = vst.msk [vmem:[#allocation3 + $0xc0] sm:$0xff] %vm2803, %v2773
        %2829 = vst.msk [vmem:[#allocation3 + $0xc8] sm:$0xff] %vm2803, %v2776
        %2830 = vst.msk [vmem:[#allocation3 + $0xd0] sm:$0xff] %vm2803, %v2781
        %2831 = vst.msk [vmem:[#allocation3 + $0xd8] sm:$0xff] %vm2803, %v2784
        %2832 = vst.msk [vmem:[#allocation3 + $0xe0] sm:$0xff] %vm2803, %v2789
        %2833 = vst.msk [vmem:[#allocation3 + $0xe8] sm:$0xff] %vm2803, %v2792
        %2834 = vst.msk [vmem:[#allocation3 + $0xf0] sm:$0xff] %vm2803, %v2797
        %2835 = vst.msk [vmem:[#allocation3 + $0xf8] sm:$0xff] %vm2803, %v2800
        %v2836 = vld [vmem:[#allocation3] ss:$2 sm:$0xff]
        %s2837 = scalar_lea.vmem [#allocation3], 16
        %v2838 = vld [vmem:[%s2837] ss:$2 sm:$0xff]
        %s2839 = scalar_lea.vmem [#allocation3], 32
        %v2840 = vld [vmem:[%s2839] ss:$2 sm:$0xff]
        %s2841 = scalar_lea.vmem [#allocation3], 48
        %v2842 = vld [vmem:[%s2841] ss:$2 sm:$0xff]
        %s2843 = scalar_lea.vmem [#allocation3], 64
        %v2844 = vld [vmem:[%s2843] ss:$2 sm:$0xff]
        %s2845 = scalar_lea.vmem [#allocation3], 80
        %v2846 = vld [vmem:[%s2845] ss:$2 sm:$0xff]
        %s2847 = scalar_lea.vmem [#allocation3], 96
        %v2848 = vld [vmem:[%s2847] ss:$2 sm:$0xff]
        %s2849 = scalar_lea.vmem [#allocation3], 112
        %v2850 = vld [vmem:[%s2849] ss:$2 sm:$0xff]
        %s2851 = scalar_lea.vmem [#allocation3], 128
        %v2852 = vld [vmem:[%s2851] ss:$2 sm:$0xff]
        %s2853 = scalar_lea.vmem [#allocation3], 144
        %v2854 = vld [vmem:[%s2853] ss:$2 sm:$0xff]
        %s2855 = scalar_lea.vmem [#allocation3], 160
        %v2856 = vld [vmem:[%s2855] ss:$2 sm:$0xff]
        %s2857 = scalar_lea.vmem [#allocation3], 176
        %v2858 = vld [vmem:[%s2857] ss:$2 sm:$0xff]
        %s2859 = scalar_lea.vmem [#allocation3], 192
        %v2860 = vld [vmem:[%s2859] ss:$2 sm:$0xff]
        %s2861 = scalar_lea.vmem [#allocation3], 208
        %v2862 = vld [vmem:[%s2861] ss:$2 sm:$0xff]
        %s2863 = scalar_lea.vmem [#allocation3], 224
        %v2864 = vld [vmem:[%s2863] ss:$2 sm:$0xff]
        %s2865 = scalar_lea.vmem [#allocation3], 240
        %v2866 = vld [vmem:[%s2865] ss:$2 sm:$0xff]
        %s2867 = scalar_lea.vmem [#allocation3], 1
        %v2868 = vld [vmem:[%s2867] ss:$2 sm:$0xff]
        %s2869 = scalar_lea.vmem [#allocation3], 17
        %v2870 = vld [vmem:[%s2869] ss:$2 sm:$0xff]
        %s2871 = scalar_lea.vmem [#allocation3], 33
        %v2872 = vld [vmem:[%s2871] ss:$2 sm:$0xff]
        %s2873 = scalar_lea.vmem [#allocation3], 49
        %v2874 = vld [vmem:[%s2873] ss:$2 sm:$0xff]
        %s2875 = scalar_lea.vmem [#allocation3], 65
        %v2876 = vld [vmem:[%s2875] ss:$2 sm:$0xff]
        %s2877 = scalar_lea.vmem [#allocation3], 81
        %v2878 = vld [vmem:[%s2877] ss:$2 sm:$0xff]
        %s2879 = scalar_lea.vmem [#allocation3], 97
        %v2880 = vld [vmem:[%s2879] ss:$2 sm:$0xff]
        %s2881 = scalar_lea.vmem [#allocation3], 113
        %v2882 = vld [vmem:[%s2881] ss:$2 sm:$0xff]
        %s2883 = scalar_lea.vmem [#allocation3], 129
        %v2884 = vld [vmem:[%s2883] ss:$2 sm:$0xff]
        %s2885 = scalar_lea.vmem [#allocation3], 145
        %v2886 = vld [vmem:[%s2885] ss:$2 sm:$0xff]
        %s2887 = scalar_lea.vmem [#allocation3], 161
        %v2888 = vld [vmem:[%s2887] ss:$2 sm:$0xff]
        %s2889 = scalar_lea.vmem [#allocation3], 177
        %v2890 = vld [vmem:[%s2889] ss:$2 sm:$0xff]
        %s2891 = scalar_lea.vmem [#allocation3], 193
        %v2892 = vld [vmem:[%s2891] ss:$2 sm:$0xff]
        %s2893 = scalar_lea.vmem [#allocation3], 209
        %v2894 = vld [vmem:[%s2893] ss:$2 sm:$0xff]
        %s2895 = scalar_lea.vmem [#allocation3], 225
        %v2896 = vld [vmem:[%s2895] ss:$2 sm:$0xff]
        %s2897 = scalar_lea.vmem [#allocation3], 241
        %v2898 = vld [vmem:[%s2897] ss:$2 sm:$0xff]
        %v2899 = vadd.f32 %v2836, %v2868
        %v2900 = vadd.f32 %v2838, %v2870
        %v2901 = vadd.f32 %v2840, %v2872
        %v2902 = vadd.f32 %v2842, %v2874
        %v2903 = vadd.f32 %v2844, %v2876
        %v2904 = vadd.f32 %v2846, %v2878
        %v2905 = vadd.f32 %v2848, %v2880
        %v2906 = vadd.f32 %v2850, %v2882
        %v2907 = vadd.f32 %v2852, %v2884
        %v2908 = vadd.f32 %v2854, %v2886
        %v2909 = vadd.f32 %v2856, %v2888
        %v2910 = vadd.f32 %v2858, %v2890
        %v2911 = vadd.f32 %v2860, %v2892
        %v2912 = vadd.f32 %v2862, %v2894
        %v2913 = vadd.f32 %v2864, %v2896
        %v2914 = vadd.f32 %v2866, %v2898
        %2915 = vst.msk [vmem:[#allocation4] sm:$0xff] %vm2803, %v2899
        %2916 = vst.msk [vmem:[#allocation4 + $0x8] sm:$0xff] %vm2803, %v2900
        %2917 = vst.msk [vmem:[#allocation4 + $0x10] sm:$0xff] %vm2803, %v2901
        %2918 = vst.msk [vmem:[#allocation4 + $0x18] sm:$0xff] %vm2803, %v2902
        %2919 = vst.msk [vmem:[#allocation4 + $0x20] sm:$0xff] %vm2803, %v2903
        %2920 = vst.msk [vmem:[#allocation4 + $0x28] sm:$0xff] %vm2803, %v2904
        %2921 = vst.msk [vmem:[#allocation4 + $0x30] sm:$0xff] %vm2803, %v2905
        %2922 = vst.msk [vmem:[#allocation4 + $0x38] sm:$0xff] %vm2803, %v2906
        %2923 = vst.msk [vmem:[#allocation4 + $0x40] sm:$0xff] %vm2803, %v2907
        %2924 = vst.msk [vmem:[#allocation4 + $0x48] sm:$0xff] %vm2803, %v2908
        %2925 = vst.msk [vmem:[#allocation4 + $0x50] sm:$0xff] %vm2803, %v2909
        %2926 = vst.msk [vmem:[#allocation4 + $0x58] sm:$0xff] %vm2803, %v2910
        %2927 = vst.msk [vmem:[#allocation4 + $0x60] sm:$0xff] %vm2803, %v2911
        %2928 = vst.msk [vmem:[#allocation4 + $0x68] sm:$0xff] %vm2803, %v2912
        %2929 = vst.msk [vmem:[#allocation4 + $0x70] sm:$0xff] %vm2803, %v2913
        %2930 = vst.msk [vmem:[#allocation4 + $0x78] sm:$0xff] %vm2803, %v2914
        %2931 = vst.msk [vmem:[#allocation4 + $0x80] sm:$0xff] %vm2803, 0.0
        %v2932 = vld [vmem:[#allocation4] sm:$0xff]
        %v2933 = vld [vmem:[#allocation4 + $0x8] sm:$0xff]
        %v2934 = vld [vmem:[#allocation4 + $0x10] sm:$0xff]
        %v2935 = vld [vmem:[#allocation4 + $0x18] sm:$0xff]
        %v2936 = vld [vmem:[#allocation4 + $0x20] sm:$0xff]
        %v2937 = vld [vmem:[#allocation4 + $0x28] sm:$0xff]
        %v2938 = vld [vmem:[#allocation4 + $0x30] sm:$0xff]
        %v2939 = vld [vmem:[#allocation4 + $0x38] sm:$0xff]
        %v2940 = vld [vmem:[#allocation4 + $0x40] sm:$0xff]
        %v2941 = vld [vmem:[#allocation4 + $0x48] sm:$0xff]
        %v2942 = vld [vmem:[#allocation4 + $0x50] sm:$0xff]
        %v2943 = vld [vmem:[#allocation4 + $0x58] sm:$0xff]
        %v2944 = vld [vmem:[#allocation4 + $0x60] sm:$0xff]
        %v2945 = vld [vmem:[#allocation4 + $0x68] sm:$0xff]
        %v2946 = vld [vmem:[#allocation4 + $0x70] sm:$0xff]
        %v2947 = vld [vmem:[#allocation4 + $0x78] sm:$0xff]
        %v2948 = vpack.c.bf16 %v2933, %v2932
        %v2949 = vpack.c.bf16 %v2935, %v2934
        %v2950 = vpack.c.bf16 %v2937, %v2936
        %v2951 = vpack.c.bf16 %v2939, %v2938
        %v2952 = vpack.c.bf16 %v2941, %v2940
        %v2953 = vpack.c.bf16 %v2943, %v2942
        %v2954 = vpack.c.bf16 %v2945, %v2944
        %v2955 = vpack.c.bf16 %v2947, %v2946
        %v2956 = vld [vmem:[%s4] sm:$0xff]
        %v2957 = vld [vmem:[%s4 + $0x8] sm:$0xff]
        %v2958 = vld [vmem:[%s4 + $0x10] sm:$0xff]
        %v2959 = vld [vmem:[%s4 + $0x18] sm:$0xff]
        %v2960 = vld [vmem:[%s4 + $0x20] sm:$0xff]
        %v2961 = vld [vmem:[%s4 + $0x28] sm:$0xff]
        %v2962 = vld [vmem:[%s4 + $0x30] sm:$0xff]
        %v2963 = vld [vmem:[%s4 + $0x38] sm:$0xff]
        %v2964 = vld [vmem:[%s4 + $0x40] sm:$0xff]
        %v2965 = vld [vmem:[%s4 + $0x48] sm:$0xff]
        %v2966 = vld [vmem:[%s4 + $0x50] sm:$0x33]
        %v2967 = vld [vmem:[#allocation4 + $0x1] sm:$0xff]
        %v2968 = vld [vmem:[#allocation4 + $0x9] sm:$0xff]
        %v2969 = vld [vmem:[#allocation4 + $0x11] sm:$0xff]
        %v2970 = vld [vmem:[#allocation4 + $0x19] sm:$0xff]
        %v2971 = vld [vmem:[#allocation4 + $0x21] sm:$0xff]
        %v2972 = vld [vmem:[#allocation4 + $0x29] sm:$0xff]
        %v2973 = vld [vmem:[#allocation4 + $0x31] sm:$0xff]
        %v2974 = vld [vmem:[#allocation4 + $0x39] sm:$0xff]
        %v2975 = vld [vmem:[#allocation4 + $0x41] sm:$0xff]
        %v2976 = vld [vmem:[#allocation4 + $0x49] sm:$0xff]
        %v2977 = vld [vmem:[#allocation4 + $0x51] sm:$0xff]
        %v2978 = vld [vmem:[#allocation4 + $0x59] sm:$0xff]
        %v2979 = vld [vmem:[#allocation4 + $0x61] sm:$0xff]
        %v2980 = vld [vmem:[#allocation4 + $0x69] sm:$0xff]
        %v2981 = vld [vmem:[#allocation4 + $0x71] sm:$0xff]
        %v2982 = vld [vmem:[#allocation4 + $0x79] sm:$0xff]
        %v2983 = vpack.c.bf16 %v2968, %v2967
        %v2984 = vpack.c.bf16 %v2970, %v2969
        %v2985 = vpack.c.bf16 %v2972, %v2971
        %v2986 = vpack.c.bf16 %v2974, %v2973
        %v2987 = vpack.c.bf16 %v2976, %v2975
        %v2988 = vpack.c.bf16 %v2978, %v2977
        %v2989 = vpack.c.bf16 %v2980, %v2979
        %v2990 = vpack.c.bf16 %v2982, %v2981
        %s2991 = scalar_lea.vmem %s4, 88
        %v2992 = vld [vmem:[%s2991] sm:$0xff]
        %v2993 = vld [vmem:[%s2991 + $0x8] sm:$0xff]
        %v2994 = vld [vmem:[%s2991 + $0x10] sm:$0xff]
        %v2995 = vld [vmem:[%s2991 + $0x18] sm:$0xff]
        %v2996 = vld [vmem:[%s2991 + $0x20] sm:$0xff]
        %v2997 = vld [vmem:[%s2991 + $0x28] sm:$0xff]
        %v2998 = vld [vmem:[%s2991 + $0x30] sm:$0xff]
        %v2999 = vld [vmem:[%s2991 + $0x38] sm:$0xff]
        %v3000 = vld [vmem:[%s2991 + $0x40] sm:$0xff]
        %v3001 = vld [vmem:[%s2991 + $0x48] sm:$0xff]
        %v3002 = vld [vmem:[%s2991 + $0x50] sm:$0x33]
        %v3014 = vunpack.c.l.b16 %v2992
        %v3015 = vunpack.c.h.b16 %v2992
        %v3016 = vunpack.c.l.b16 %v2993
        %v3017 = vunpack.c.h.b16 %v2993
        %v3018 = vunpack.c.l.b16 %v2994
        %v3019 = vunpack.c.h.b16 %v2994
        %v3020 = vunpack.c.l.b16 %v2995
        %v3021 = vunpack.c.h.b16 %v2995
        %v3022 = vunpack.c.l.b16 %v2996
        %v3023 = vunpack.c.h.b16 %v2996
        %v3024 = vunpack.c.l.b16 %v2997
        %v3025 = vunpack.c.h.b16 %v2997
        %v3026 = vunpack.c.l.b16 %v2998
        %v3027 = vunpack.c.h.b16 %v2998
        %v3028 = vunpack.c.l.b16 %v2999
        %v3029 = vunpack.c.h.b16 %v2999
        %v3030 = vunpack.c.l.b16 %v3000
        %v3031 = vunpack.c.h.b16 %v3000
        %v3032 = vunpack.c.l.b16 %v3001
        %v3033 = vunpack.c.h.b16 %v3001
        %v3034 = vunpack.c.l.b16 %v3002
        %v3035 = vunpack.c.h.b16 %v3002
        %v3036 = vpack.c.b16 %v3016, %v3014
        %v3037 = vpack.c.b16 %v3017, %v3015
        %v3038 = vpack.c.b16 %v3020, %v3018
        %v3039 = vpack.c.b16 %v3021, %v3019
        %v3040 = vpack.c.b16 %v3024, %v3022
        %v3041 = vpack.c.b16 %v3025, %v3023
        %v3042 = vpack.c.b16 %v3028, %v3026
        %v3043 = vpack.c.b16 %v3029, %v3027
        %v3044 = vpack.c.b16 %v3032, %v3030
        %v3045 = vpack.c.b16 %v3033, %v3031
        %v3046 = vpack.c.b16 %v3034, %v3034
        %v3047 = vpack.c.b16 %v3035, %v3035
        %v3059 = vsel %vm2803, %v2983, 0
        %v3062 = vsel %vm2803, %v2984, 0
        %v3065 = vsel %vm2803, %v2985, 0
        %v3068 = vsel %vm2803, %v2986, 0
        %v3071 = vsel %vm2803, %v2987, 0
        %v3074 = vsel %vm2803, %v2988, 0
        %v3077 = vsel %vm2803, %v2989, 0
        %v3080 = vsel %vm2803, %v2990, 0
        %vm3082 = vcmask 1041408
        %v3084 = vsel %vm3082, %v3046, 0
        %v3087 = vsel %vm3082, %v3047, 0
        %3089 = vmatprep.subr.bf16.mxu0 %v3037
        %3090 = vmatpush1.bf16.msra.mxu0 %v3036
        %3091 = vmatprep.subr.bf16.mxu0 %v3039
        %3092 = vmatpush1.bf16.msra.mxu0 %v3038
        %3093 = vmatprep.subr.bf16.mxu0 %v3041
        %3094 = vmatpush1.bf16.msra.mxu0 %v3040
        %3095 = vmatprep.subr.bf16.mxu0 %v3043
        %3096 = vmatpush1.bf16.msra.mxu0 %v3042
        %3097 = vmatprep.subr.bf16.mxu0 %v3045
        %3098 = vmatpush1.bf16.msra.mxu0 %v3044
        %3099 = vmatprep.subr.bf16.mxu0 %v3087
        %3100 = vmatpush1.bf16.msra.mxu0 %v3084
        %3101 = vmatprep.subr.bf16.mxu0 0
        %3102 = vmatpush1.bf16.msra.mxu0 0
        %3103 = vmatprep.subr.bf16.mxu0 0
        %3104 = vmatpush1.bf16.msra.mxu0 0
        %3105 = vmatprep.subr.bf16.mxu0 0
        %3106 = vmatpush1.bf16.msra.mxu0 0
        %3107 = vmatprep.subr.bf16.mxu0 0
        %3108 = vmatpush1.bf16.msra.mxu0 0
        %3109 = vmatprep.subr.bf16.mxu0 0
        %3110 = vmatpush1.bf16.msra.mxu0 0
        %3111 = vmatprep.subr.bf16.mxu0 0
        %3112 = vmatpush1.bf16.msra.mxu0 0
        %3113 = vmatprep.subr.bf16.mxu0 0
        %3114 = vmatpush1.bf16.msra.mxu0 0
        %3115 = vmatprep.subr.bf16.mxu0 0
        %3116 = vmatpush1.bf16.msra.mxu0 0
        %3117 = vmatprep.subr.bf16.mxu0 0
        %3118 = vmatpush1.bf16.msra.mxu0 0
        %3119 = vmatprep.subr.bf16.mxu0 0
        %3120 = vmatpush1.bf16.msra.mxu0 0
        %3121 = vmatprep.mubr.bf16.mxu0 0
        %3122 = vmatmul.mubr.bf16.gmra.mrb[0].mxu0 %v3059
        %v3123 = vpop.f32.mrb[0].mxu0
        %v3124 = vadd.f32 0.0, %v3123
        %v3125 = vpop.f32.mrb[0].mxu0
        %v3126 = vadd.f32 0.0, %v3125
        %v3127 = vpop.f32.mrb[0].mxu0
        %v3128 = vadd.f32 0.0, %v3127
        %v3129 = vpop.f32.mrb[0].mxu0
        %v3130 = vadd.f32 0.0, %v3129
        %3131 = vmatprep.mubr.bf16.mxu0 0
        %3132 = vmatmul.mubr.bf16.gmra.mrb[0].mxu0 %v3062
        %v3133 = vpop.f32.mrb[0].mxu0
        %v3134 = vadd.f32 0.0, %v3133
        %v3135 = vpop.f32.mrb[0].mxu0
        %v3136 = vadd.f32 0.0, %v3135
        %v3137 = vpop.f32.mrb[0].mxu0
        %v3138 = vadd.f32 0.0, %v3137
        %v3139 = vpop.f32.mrb[0].mxu0
        %v3140 = vadd.f32 0.0, %v3139
        %3141 = vmatprep.mubr.bf16.mxu0 0
        %3142 = vmatmul.mubr.bf16.gmra.mrb[0].mxu0 %v3065
        %v3143 = vpop.f32.mrb[0].mxu0
        %v3144 = vadd.f32 0.0, %v3143
        %v3145 = vpop.f32.mrb[0].mxu0
        %v3146 = vadd.f32 0.0, %v3145
        %v3147 = vpop.f32.mrb[0].mxu0
        %v3148 = vadd.f32 0.0, %v3147
        %v3149 = vpop.f32.mrb[0].mxu0
        %v3150 = vadd.f32 0.0, %v3149
        %3151 = vmatprep.mubr.bf16.mxu0 0
        %3152 = vmatmul.mubr.bf16.gmra.mrb[0].mxu0 %v3068
        %v3153 = vpop.f32.mrb[0].mxu0
        %v3154 = vadd.f32 0.0, %v3153
        %v3155 = vpop.f32.mrb[0].mxu0
        %v3156 = vadd.f32 0.0, %v3155
        %v3157 = vpop.f32.mrb[0].mxu0
        %v3158 = vadd.f32 0.0, %v3157
        %v3159 = vpop.f32.mrb[0].mxu0
        %v3160 = vadd.f32 0.0, %v3159
        %3161 = vmatprep.mubr.bf16.mxu0 0
        %3162 = vmatmul.mubr.bf16.gmra.mrb[0].mxu0 %v3071
        %v3163 = vpop.f32.mrb[0].mxu0
        %v3164 = vadd.f32 0.0, %v3163
        %v3165 = vpop.f32.mrb[0].mxu0
        %v3166 = vadd.f32 0.0, %v3165
        %v3167 = vpop.f32.mrb[0].mxu0
        %v3168 = vadd.f32 0.0, %v3167
        %v3169 = vpop.f32.mrb[0].mxu0
        %v3170 = vadd.f32 0.0, %v3169
        %3171 = vmatprep.mubr.bf16.mxu0 0
        %3172 = vmatmul.mubr.bf16.gmra.mrb[0].mxu0 %v3074
        %v3173 = vpop.f32.mrb[0].mxu0
        %v3174 = vadd.f32 0.0, %v3173
        %v3175 = vpop.f32.mrb[0].mxu0
        %v3176 = vadd.f32 0.0, %v3175
        %v3177 = vpop.f32.mrb[0].mxu0
        %v3178 = vadd.f32 0.0, %v3177
        %v3179 = vpop.f32.mrb[0].mxu0
        %v3180 = vadd.f32 0.0, %v3179
        %3181 = vmatprep.mubr.bf16.mxu0 0
        %3182 = vmatmul.mubr.bf16.gmra.mrb[0].mxu0 %v3077
        %v3183 = vpop.f32.mrb[0].mxu0
        %v3184 = vadd.f32 0.0, %v3183
        %v3185 = vpop.f32.mrb[0].mxu0
        %v3186 = vadd.f32 0.0, %v3185
        %v3187 = vpop.f32.mrb[0].mxu0
        %v3188 = vadd.f32 0.0, %v3187
        %v3189 = vpop.f32.mrb[0].mxu0
        %v3190 = vadd.f32 0.0, %v3189
        %3191 = vmatprep.mubr.bf16.mxu0 0
        %3192 = vmatmul.mubr.bf16.gmra.mrb[0].mxu0 %v3080
        %v3193 = vpop.f32.mrb[0].mxu0
        %v3194 = vadd.f32 0.0, %v3193
        %v3195 = vpop.f32.mrb[0].mxu0
        %v3196 = vadd.f32 0.0, %v3195
        %v3197 = vpop.f32.mrb[0].mxu0
        %v3198 = vadd.f32 0.0, %v3197
        %v3199 = vpop.f32.mrb[0].mxu0
        %v3200 = vadd.f32 0.0, %v3199
        %3201 = vdwg.mxu0
        %v3213 = vunpack.c.l.b16 %v2956
        %v3214 = vunpack.c.h.b16 %v2956
        %v3215 = vunpack.c.l.b16 %v2957
        %v3216 = vunpack.c.h.b16 %v2957
        %v3217 = vunpack.c.l.b16 %v2958
        %v3218 = vunpack.c.h.b16 %v2958
        %v3219 = vunpack.c.l.b16 %v2959
        %v3220 = vunpack.c.h.b16 %v2959
        %v3221 = vunpack.c.l.b16 %v2960
        %v3222 = vunpack.c.h.b16 %v2960
        %v3223 = vunpack.c.l.b16 %v2961
        %v3224 = vunpack.c.h.b16 %v2961
        %v3225 = vunpack.c.l.b16 %v2962
        %v3226 = vunpack.c.h.b16 %v2962
        %v3227 = vunpack.c.l.b16 %v2963
        %v3228 = vunpack.c.h.b16 %v2963
        %v3229 = vunpack.c.l.b16 %v2964
        %v3230 = vunpack.c.h.b16 %v2964
        %v3231 = vunpack.c.l.b16 %v2965
        %v3232 = vunpack.c.h.b16 %v2965
        %v3233 = vunpack.c.l.b16 %v2966
        %v3234 = vunpack.c.h.b16 %v2966
        %v3235 = vpack.c.b16 %v3215, %v3213
        %v3236 = vpack.c.b16 %v3216, %v3214
        %v3237 = vpack.c.b16 %v3219, %v3217
        %v3238 = vpack.c.b16 %v3220, %v3218
        %v3239 = vpack.c.b16 %v3223, %v3221
        %v3240 = vpack.c.b16 %v3224, %v3222
        %v3241 = vpack.c.b16 %v3227, %v3225
        %v3242 = vpack.c.b16 %v3228, %v3226
        %v3243 = vpack.c.b16 %v3231, %v3229
        %v3244 = vpack.c.b16 %v3232, %v3230
        %v3245 = vpack.c.b16 %v3233, %v3233
        %v3246 = vpack.c.b16 %v3234, %v3234
        %v3258 = vsel %vm2803, %v2948, 0
        %v3261 = vsel %vm2803, %v2949, 0
        %v3264 = vsel %vm2803, %v2950, 0
        %v3267 = vsel %vm2803, %v2951, 0
        %v3270 = vsel %vm2803, %v2952, 0
        %v3273 = vsel %vm2803, %v2953, 0
        %v3276 = vsel %vm2803, %v2954, 0
        %v3279 = vsel %vm2803, %v2955, 0
        %v3282 = vsel %vm3082, %v3245, 0
        %v3285 = vsel %vm3082, %v3246, 0
        %3287 = vmatprep.subr.bf16.mxu0 %v3236
        %3288 = vmatpush1.bf16.msra.mxu0 %v3235
        %3289 = vmatprep.subr.bf16.mxu0 %v3238
        %3290 = vmatpush1.bf16.msra.mxu0 %v3237
        %3291 = vmatprep.subr.bf16.mxu0 %v3240
        %3292 = vmatpush1.bf16.msra.mxu0 %v3239
        %3293 = vmatprep.subr.bf16.mxu0 %v3242
        %3294 = vmatpush1.bf16.msra.mxu0 %v3241
        %3295 = vmatprep.subr.bf16.mxu0 %v3244
        %3296 = vmatpush1.bf16.msra.mxu0 %v3243
        %3297 = vmatprep.subr.bf16.mxu0 %v3285
        %3298 = vmatpush1.bf16.msra.mxu0 %v3282
        %3299 = vmatprep.subr.bf16.mxu0 0
        %3300 = vmatpush1.bf16.msra.mxu0 0
        %3301 = vmatprep.subr.bf16.mxu0 0
        %3302 = vmatpush1.bf16.msra.mxu0 0
        %3303 = vmatprep.subr.bf16.mxu0 0
        %3304 = vmatpush1.bf16.msra.mxu0 0
        %3305 = vmatprep.subr.bf16.mxu0 0
        %3306 = vmatpush1.bf16.msra.mxu0 0
        %3307 = vmatprep.subr.bf16.mxu0 0
        %3308 = vmatpush1.bf16.msra.mxu0 0
        %3309 = vmatprep.subr.bf16.mxu0 0
        %3310 = vmatpush1.bf16.msra.mxu0 0
        %3311 = vmatprep.subr.bf16.mxu0 0
        %3312 = vmatpush1.bf16.msra.mxu0 0
        %3313 = vmatprep.subr.bf16.mxu0 0
        %3314 = vmatpush1.bf16.msra.mxu0 0
        %3315 = vmatprep.subr.bf16.mxu0 0
        %3316 = vmatpush1.bf16.msra.mxu0 0
        %3317 = vmatprep.subr.bf16.mxu0 0
        %3318 = vmatpush1.bf16.msra.mxu0 0
        %3319 = vmatprep.mubr.bf16.mxu0 0
        %3320 = vmatmul.mubr.bf16.gmra.mrb[0].mxu0 %v3258
        %v3321 = vpop.f32.mrb[0].mxu0
        %v3322 = vadd.f32 %v3124, %v3321
        %v3323 = vpop.f32.mrb[0].mxu0
        %v3324 = vadd.f32 %v3126, %v3323
        %v3325 = vpop.f32.mrb[0].mxu0
        %v3326 = vadd.f32 %v3128, %v3325
        %v3327 = vpop.f32.mrb[0].mxu0
        %v3328 = vadd.f32 %v3130, %v3327
        %3329 = vmatprep.mubr.bf16.mxu0 0
        %3330 = vmatmul.mubr.bf16.gmra.mrb[0].mxu0 %v3261
        %v3331 = vpop.f32.mrb[0].mxu0
        %v3332 = vadd.f32 %v3134, %v3331
        %v3333 = vpop.f32.mrb[0].mxu0
        %v3334 = vadd.f32 %v3136, %v3333
        %v3335 = vpop.f32.mrb[0].mxu0
        %v3336 = vadd.f32 %v3138, %v3335
        %v3337 = vpop.f32.mrb[0].mxu0
        %v3338 = vadd.f32 %v3140, %v3337
        %3339 = vmatprep.mubr.bf16.mxu0 0
        %3340 = vmatmul.mubr.bf16.gmra.mrb[0].mxu0 %v3264
        %v3341 = vpop.f32.mrb[0].mxu0
        %v3342 = vadd.f32 %v3144, %v3341
        %v3343 = vpop.f32.mrb[0].mxu0
        %v3344 = vadd.f32 %v3146, %v3343
        %v3345 = vpop.f32.mrb[0].mxu0
        %v3346 = vadd.f32 %v3148, %v3345
        %v3347 = vpop.f32.mrb[0].mxu0
        %v3348 = vadd.f32 %v3150, %v3347
        %3349 = vmatprep.mubr.bf16.mxu0 0
        %3350 = vmatmul.mubr.bf16.gmra.mrb[0].mxu0 %v3267
        %v3351 = vpop.f32.mrb[0].mxu0
        %v3352 = vadd.f32 %v3154, %v3351
        %v3353 = vpop.f32.mrb[0].mxu0
        %v3354 = vadd.f32 %v3156, %v3353
        %v3355 = vpop.f32.mrb[0].mxu0
        %v3356 = vadd.f32 %v3158, %v3355
        %v3357 = vpop.f32.mrb[0].mxu0
        %v3358 = vadd.f32 %v3160, %v3357
        %3359 = vmatprep.mubr.bf16.mxu0 0
        %3360 = vmatmul.mubr.bf16.gmra.mrb[0].mxu0 %v3270
        %v3361 = vpop.f32.mrb[0].mxu0
        %v3362 = vadd.f32 %v3164, %v3361
        %v3363 = vpop.f32.mrb[0].mxu0
        %v3364 = vadd.f32 %v3166, %v3363
        %v3365 = vpop.f32.mrb[0].mxu0
        %v3366 = vadd.f32 %v3168, %v3365
        %v3367 = vpop.f32.mrb[0].mxu0
        %v3368 = vadd.f32 %v3170, %v3367
        %3369 = vmatprep.mubr.bf16.mxu0 0
        %3370 = vmatmul.mubr.bf16.gmra.mrb[0].mxu0 %v3273
        %v3371 = vpop.f32.mrb[0].mxu0
        %v3372 = vadd.f32 %v3174, %v3371
        %v3373 = vpop.f32.mrb[0].mxu0
        %v3374 = vadd.f32 %v3176, %v3373
        %v3375 = vpop.f32.mrb[0].mxu0
        %v3376 = vadd.f32 %v3178, %v3375
        %v3377 = vpop.f32.mrb[0].mxu0
        %v3378 = vadd.f32 %v3180, %v3377
        %3379 = vmatprep.mubr.bf16.mxu0 0
        %3380 = vmatmul.mubr.bf16.gmra.mrb[0].mxu0 %v3276
        %v3381 = vpop.f32.mrb[0].mxu0
        %v3382 = vadd.f32 %v3184, %v3381
        %v3383 = vpop.f32.mrb[0].mxu0
        %v3384 = vadd.f32 %v3186, %v3383
        %v3385 = vpop.f32.mrb[0].mxu0
        %v3386 = vadd.f32 %v3188, %v3385
        %v3387 = vpop.f32.mrb[0].mxu0
        %v3388 = vadd.f32 %v3190, %v3387
        %3389 = vmatprep.mubr.bf16.mxu0 0
        %3390 = vmatmul.mubr.bf16.gmra.mrb[0].mxu0 %v3279
        %v3391 = vpop.f32.mrb[0].mxu0
        %v3392 = vadd.f32 %v3194, %v3391
        %v3393 = vpop.f32.mrb[0].mxu0
        %v3394 = vadd.f32 %v3196, %v3393
        %v3395 = vpop.f32.mrb[0].mxu0
        %v3396 = vadd.f32 %v3198, %v3395
        %v3397 = vpop.f32.mrb[0].mxu0
        %v3398 = vadd.f32 %v3200, %v3397
        %3399 = vdwg.mxu0
        %v3400 = vld [vmem:[#allocation4 + $0x2] sm:$0xff]
        %v3401 = vld [vmem:[#allocation4 + $0xa] sm:$0xff]
        %v3402 = vld [vmem:[#allocation4 + $0x12] sm:$0xff]
        %v3403 = vld [vmem:[#allocation4 + $0x1a] sm:$0xff]
        %v3404 = vld [vmem:[#allocation4 + $0x22] sm:$0xff]
        %v3405 = vld [vmem:[#allocation4 + $0x2a] sm:$0xff]
        %v3406 = vld [vmem:[#allocation4 + $0x32] sm:$0xff]
        %v3407 = vld [vmem:[#allocation4 + $0x3a] sm:$0xff]
        %v3408 = vld [vmem:[#allocation4 + $0x42] sm:$0xff]
        %v3409 = vld [vmem:[#allocation4 + $0x4a] sm:$0xff]
        %v3410 = vld [vmem:[#allocation4 + $0x52] sm:$0xff]
        %v3411 = vld [vmem:[#allocation4 + $0x5a] sm:$0xff]
        %v3412 = vld [vmem:[#allocation4 + $0x62] sm:$0xff]
        %v3413 = vld [vmem:[#allocation4 + $0x6a] sm:$0xff]
        %v3414 = vld [vmem:[#allocation4 + $0x72] sm:$0xff]
        %v3415 = vld [vmem:[#allocation4 + $0x7a] sm:$0xff]
        %v3416 = vpack.c.bf16 %v3401, %v3400
        %v3417 = vpack.c.bf16 %v3403, %v3402
        %v3418 = vpack.c.bf16 %v3405, %v3404
        %v3419 = vpack.c.bf16 %v3407, %v3406
        %v3420 = vpack.c.bf16 %v3409, %v3408
        %v3421 = vpack.c.bf16 %v3411, %v3410
        %v3422 = vpack.c.bf16 %v3413, %v3412
        %v3423 = vpack.c.bf16 %v3415, %v3414
        %s3424 = scalar_lea.vmem %s4, 176
        %v3425 = vld [vmem:[%s3424] sm:$0xff]
        %v3426 = vld [vmem:[%s3424 + $0x8] sm:$0xff]
        %v3427 = vld [vmem:[%s3424 + $0x10] sm:$0xff]
        %v3428 = vld [vmem:[%s3424 + $0x18] sm:$0xff]
        %v3429 = vld [vmem:[%s3424 + $0x20] sm:$0xff]
        %v3430 = vld [vmem:[%s3424 + $0x28] sm:$0xff]
        %v3431 = vld [vmem:[%s3424 + $0x30] sm:$0xff]
        %v3432 = vld [vmem:[%s3424 + $0x38] sm:$0xff]
        %v3433 = vld [vmem:[%s3424 + $0x40] sm:$0xff]
        %v3434 = vld [vmem:[%s3424 + $0x48] sm:$0xff]
        %v3435 = vld [vmem:[%s3424 + $0x50] sm:$0x33]
        %v3447 = vunpack.c.l.b16 %v3425
        %v3448 = vunpack.c.h.b16 %v3425
        %v3449 = vunpack.c.l.b16 %v3426
        %v3450 = vunpack.c.h.b16 %v3426
        %v3451 = vunpack.c.l.b16 %v3427
        %v3452 = vunpack.c.h.b16 %v3427
        %v3453 = vunpack.c.l.b16 %v3428
        %v3454 = vunpack.c.h.b16 %v3428
        %v3455 = vunpack.c.l.b16 %v3429
        %v3456 = vunpack.c.h.b16 %v3429
        %v3457 = vunpack.c.l.b16 %v3430
        %v3458 = vunpack.c.h.b16 %v3430
        %v3459 = vunpack.c.l.b16 %v3431
        %v3460 = vunpack.c.h.b16 %v3431
        %v3461 = vunpack.c.l.b16 %v3432
        %v3462 = vunpack.c.h.b16 %v3432
        %v3463 = vunpack.c.l.b16 %v3433
        %v3464 = vunpack.c.h.b16 %v3433
        %v3465 = vunpack.c.l.b16 %v3434
        %v3466 = vunpack.c.h.b16 %v3434
        %v3467 = vunpack.c.l.b16 %v3435
        %v3468 = vunpack.c.h.b16 %v3435
        %v3469 = vpack.c.b16 %v3449, %v3447
        %v3470 = vpack.c.b16 %v3450, %v3448
        %v3471 = vpack.c.b16 %v3453, %v3451
        %v3472 = vpack.c.b16 %v3454, %v3452
        %v3473 = vpack.c.b16 %v3457, %v3455
        %v3474 = vpack.c.b16 %v3458, %v3456
        %v3475 = vpack.c.b16 %v3461, %v3459
        %v3476 = vpack.c.b16 %v3462, %v3460
        %v3477 = vpack.c.b16 %v3465, %v3463
        %v3478 = vpack.c.b16 %v3466, %v3464
        %v3479 = vpack.c.b16 %v3467, %v3467
        %v3480 = vpack.c.b16 %v3468, %v3468
        %v3492 = vsel %vm2803, %v3416, 0
        %v3495 = vsel %vm2803, %v3417, 0
        %v3498 = vsel %vm2803, %v3418, 0
        %v3501 = vsel %vm2803, %v3419, 0
        %v3504 = vsel %vm2803, %v3420, 0
        %v3507 = vsel %vm2803, %v3421, 0
        %v3510 = vsel %vm2803, %v3422, 0
        %v3513 = vsel %vm2803, %v3423, 0
        %v3516 = vsel %vm3082, %v3479, 0
        %v3519 = vsel %vm3082, %v3480, 0
        %3521 = vmatprep.subr.bf16.mxu0 %v3470
        %3522 = vmatpush1.bf16.msra.mxu0 %v3469
        %3523 = vmatprep.subr.bf16.mxu0 %v3472
        %3524 = vmatpush1.bf16.msra.mxu0 %v3471
        %3525 = vmatprep.subr.bf16.mxu0 %v3474
        %3526 = vmatpush1.bf16.msra.mxu0 %v3473
        %3527 = vmatprep.subr.bf16.mxu0 %v3476
        %3528 = vmatpush1.bf16.msra.mxu0 %v3475
        %3529 = vmatprep.subr.bf16.mxu0 %v3478
        %3530 = vmatpush1.bf16.msra.mxu0 %v3477
        %3531 = vmatprep.subr.bf16.mxu0 %v3519
        %3532 = vmatpush1.bf16.msra.mxu0 %v3516
        %3533 = vmatprep.subr.bf16.mxu0 0
        %3534 = vmatpush1.bf16.msra.mxu0 0
        %3535 = vmatprep.subr.bf16.mxu0 0
        %3536 = vmatpush1.bf16.msra.mxu0 0
        %3537 = vmatprep.subr.bf16.mxu0 0
        %3538 = vmatpush1.bf16.msra.mxu0 0
        %3539 = vmatprep.subr.bf16.mxu0 0
        %3540 = vmatpush1.bf16.msra.mxu0 0
        %3541 = vmatprep.subr.bf16.mxu0 0
        %3542 = vmatpush1.bf16.msra.mxu0 0
        %3543 = vmatprep.subr.bf16.mxu0 0
        %3544 = vmatpush1.bf16.msra.mxu0 0
        %3545 = vmatprep.subr.bf16.mxu0 0
        %3546 = vmatpush1.bf16.msra.mxu0 0
        %3547 = vmatprep.subr.bf16.mxu0 0
        %3548 = vmatpush1.bf16.msra.mxu0 0
        %3549 = vmatprep.subr.bf16.mxu0 0
        %3550 = vmatpush1.bf16.msra.mxu0 0
        %3551 = vmatprep.subr.bf16.mxu0 0
        %3552 = vmatpush1.bf16.msra.mxu0 0
        %3553 = vmatprep.mubr.bf16.mxu0 0
        %3554 = vmatmul.mubr.bf16.gmra.mrb[0].mxu0 %v3492
        %v3555 = vpop.f32.mrb[0].mxu0
        %v3556 = vadd.f32 0.0, %v3555
        %v3557 = vpop.f32.mrb[0].mxu0
        %v3558 = vadd.f32 0.0, %v3557
        %v3559 = vpop.f32.mrb[0].mxu0
        %v3560 = vadd.f32 0.0, %v3559
        %v3561 = vpop.f32.mrb[0].mxu0
        %v3562 = vadd.f32 0.0, %v3561
        %3563 = vmatprep.mubr.bf16.mxu0 0
        %3564 = vmatmul.mubr.bf16.gmra.mrb[0].mxu0 %v3495
        %v3565 = vpop.f32.mrb[0].mxu0
        %v3566 = vadd.f32 0.0, %v3565
        %v3567 = vpop.f32.mrb[0].mxu0
        %v3568 = vadd.f32 0.0, %v3567
        %v3569 = vpop.f32.mrb[0].mxu0
        %v3570 = vadd.f32 0.0, %v3569
        %v3571 = vpop.f32.mrb[0].mxu0
        %v3572 = vadd.f32 0.0, %v3571
        %3573 = vmatprep.mubr.bf16.mxu0 0
        %3574 = vmatmul.mubr.bf16.gmra.mrb[0].mxu0 %v3498
        %v3575 = vpop.f32.mrb[0].mxu0
        %v3576 = vadd.f32 0.0, %v3575
        %v3577 = vpop.f32.mrb[0].mxu0
        %v3578 = vadd.f32 0.0, %v3577
        %v3579 = vpop.f32.mrb[0].mxu0
        %v3580 = vadd.f32 0.0, %v3579
        %v3581 = vpop.f32.mrb[0].mxu0
        %v3582 = vadd.f32 0.0, %v3581
        %3583 = vmatprep.mubr.bf16.mxu0 0
        %3584 = vmatmul.mubr.bf16.gmra.mrb[0].mxu0 %v3501
        %v3585 = vpop.f32.mrb[0].mxu0
        %v3586 = vadd.f32 0.0, %v3585
        %v3587 = vpop.f32.mrb[0].mxu0
        %v3588 = vadd.f32 0.0, %v3587
        %v3589 = vpop.f32.mrb[0].mxu0
        %v3590 = vadd.f32 0.0, %v3589
        %v3591 = vpop.f32.mrb[0].mxu0
        %v3592 = vadd.f32 0.0, %v3591
        %3593 = vmatprep.mubr.bf16.mxu0 0
        %3594 = vmatmul.mubr.bf16.gmra.mrb[0].mxu0 %v3504
        %v3595 = vpop.f32.mrb[0].mxu0
        %v3596 = vadd.f32 0.0, %v3595
        %v3597 = vpop.f32.mrb[0].mxu0
        %v3598 = vadd.f32 0.0, %v3597
        %v3599 = vpop.f32.mrb[0].mxu0
        %v3600 = vadd.f32 0.0, %v3599
        %v3601 = vpop.f32.mrb[0].mxu0
        %v3602 = vadd.f32 0.0, %v3601
        %3603 = vmatprep.mubr.bf16.mxu0 0
        %3604 = vmatmul.mubr.bf16.gmra.mrb[0].mxu0 %v3507
        %v3605 = vpop.f32.mrb[0].mxu0
        %v3606 = vadd.f32 0.0, %v3605
        %v3607 = vpop.f32.mrb[0].mxu0
        %v3608 = vadd.f32 0.0, %v3607
        %v3609 = vpop.f32.mrb[0].mxu0
        %v3610 = vadd.f32 0.0, %v3609
        %v3611 = vpop.f32.mrb[0].mxu0
        %v3612 = vadd.f32 0.0, %v3611
        %3613 = vmatprep.mubr.bf16.mxu0 0
        %3614 = vmatmul.mubr.bf16.gmra.mrb[0].mxu0 %v3510
        %v3615 = vpop.f32.mrb[0].mxu0
        %v3616 = vadd.f32 0.0, %v3615
        %v3617 = vpop.f32.mrb[0].mxu0
        %v3618 = vadd.f32 0.0, %v3617
        %v3619 = vpop.f32.mrb[0].mxu0
        %v3620 = vadd.f32 0.0, %v3619
        %v3621 = vpop.f32.mrb[0].mxu0
        %v3622 = vadd.f32 0.0, %v3621
        %3623 = vmatprep.mubr.bf16.mxu0 0
        %3624 = vmatmul.mubr.bf16.gmra.mrb[0].mxu0 %v3513
        %v3625 = vpop.f32.mrb[0].mxu0
        %v3626 = vadd.f32 0.0, %v3625
        %v3627 = vpop.f32.mrb[0].mxu0
        %v3628 = vadd.f32 0.0, %v3627
        %v3629 = vpop.f32.mrb[0].mxu0
        %v3630 = vadd.f32 0.0, %v3629
        %v3631 = vpop.f32.mrb[0].mxu0
        %v3632 = vadd.f32 0.0, %v3631
        %3633 = vdwg.mxu0
        %v3634 = vadd.f32 %v3322, %v3556
        %v3635 = vadd.f32 %v3324, %v3558
        %v3636 = vadd.f32 %v3326, %v3560
        %v3637 = vadd.f32 %v3328, %v3562
        %v3638 = vadd.f32 %v3332, %v3566
        %v3639 = vadd.f32 %v3334, %v3568
        %v3640 = vadd.f32 %v3336, %v3570
        %v3641 = vadd.f32 %v3338, %v3572
        %v3642 = vadd.f32 %v3342, %v3576
        %v3643 = vadd.f32 %v3344, %v3578
        %v3644 = vadd.f32 %v3346, %v3580
        %v3645 = vadd.f32 %v3348, %v3582
        %v3646 = vadd.f32 %v3352, %v3586
        %v3647 = vadd.f32 %v3354, %v3588
        %v3648 = vadd.f32 %v3356, %v3590
        %v3649 = vadd.f32 %v3358, %v3592
        %v3650 = vadd.f32 %v3362, %v3596
        %v3651 = vadd.f32 %v3364, %v3598
        %v3652 = vadd.f32 %v3366, %v3600
        %v3653 = vadd.f32 %v3368, %v3602
        %v3654 = vadd.f32 %v3372, %v3606
        %v3655 = vadd.f32 %v3374, %v3608
        %v3656 = vadd.f32 %v3376, %v3610
        %v3657 = vadd.f32 %v3378, %v3612
        %v3658 = vadd.f32 %v3382, %v3616
        %v3659 = vadd.f32 %v3384, %v3618
        %v3660 = vadd.f32 %v3386, %v3620
        %v3661 = vadd.f32 %v3388, %v3622
        %v3662 = vadd.f32 %v3392, %v3626
        %v3663 = vadd.f32 %v3394, %v3628
        %v3664 = vadd.f32 %v3396, %v3630
        %v3665 = vadd.f32 %v3398, %v3632
        %v3666 = vld [vmem:[#allocation4 + $0x3] sm:$0xff]
        %v3667 = vld [vmem:[#allocation4 + $0xb] sm:$0xff]
        %v3668 = vld [vmem:[#allocation4 + $0x13] sm:$0xff]
        %v3669 = vld [vmem:[#allocation4 + $0x1b] sm:$0xff]
        %v3670 = vld [vmem:[#allocation4 + $0x23] sm:$0xff]
        %v3671 = vld [vmem:[#allocation4 + $0x2b] sm:$0xff]
        %v3672 = vld [vmem:[#allocation4 + $0x33] sm:$0xff]
        %v3673 = vld [vmem:[#allocation4 + $0x3b] sm:$0xff]
        %v3674 = vld [vmem:[#allocation4 + $0x43] sm:$0xff]
        %v3675 = vld [vmem:[#allocation4 + $0x4b] sm:$0xff]
        %v3676 = vld [vmem:[#allocation4 + $0x53] sm:$0xff]
        %v3677 = vld [vmem:[#allocation4 + $0x5b] sm:$0xff]
        %v3678 = vld [vmem:[#allocation4 + $0x63] sm:$0xff]
        %v3679 = vld [vmem:[#allocation4 + $0x6b] sm:$0xff]
        %v3680 = vld [vmem:[#allocation4 + $0x73] sm:$0xff]
        %v3681 = vld [vmem:[#allocation4 + $0x7b] sm:$0xff]
        %v3682 = vpack.c.bf16 %v3667, %v3666
        %v3683 = vpack.c.bf16 %v3669, %v3668
        %v3684 = vpack.c.bf16 %v3671, %v3670
        %v3685 = vpack.c.bf16 %v3673, %v3672
        %v3686 = vpack.c.bf16 %v3675, %v3674
        %v3687 = vpack.c.bf16 %v3677, %v3676
        %v3688 = vpack.c.bf16 %v3679, %v3678
        %v3689 = vpack.c.bf16 %v3681, %v3680
        %s3690 = scalar_lea.vmem %s4, 264
        %v3691 = vld [vmem:[%s3690] sm:$0xff]
        %v3692 = vld [vmem:[%s3690 + $0x8] sm:$0xff]
        %v3693 = vld [vmem:[%s3690 + $0x10] sm:$0xff]
        %v3694 = vld [vmem:[%s3690 + $0x18] sm:$0xff]
        %v3695 = vld [vmem:[%s3690 + $0x20] sm:$0xff]
        %v3696 = vld [vmem:[%s3690 + $0x28] sm:$0xff]
        %v3697 = vld [vmem:[%s3690 + $0x30] sm:$0xff]
        %v3698 = vld [vmem:[%s3690 + $0x38] sm:$0xff]
        %v3699 = vld [vmem:[%s3690 + $0x40] sm:$0xff]
        %v3700 = vld [vmem:[%s3690 + $0x48] sm:$0xff]
        %v3701 = vld [vmem:[%s3690 + $0x50] sm:$0x33]
        %v3713 = vunpack.c.l.b16 %v3691
        %v3714 = vunpack.c.h.b16 %v3691
        %v3715 = vunpack.c.l.b16 %v3692
        %v3716 = vunpack.c.h.b16 %v3692
        %v3717 = vunpack.c.l.b16 %v3693
        %v3718 = vunpack.c.h.b16 %v3693
        %v3719 = vunpack.c.l.b16 %v3694
        %v3720 = vunpack.c.h.b16 %v3694
        %v3721 = vunpack.c.l.b16 %v3695
        %v3722 = vunpack.c.h.b16 %v3695
        %v3723 = vunpack.c.l.b16 %v3696
        %v3724 = vunpack.c.h.b16 %v3696
        %v3725 = vunpack.c.l.b16 %v3697
        %v3726 = vunpack.c.h.b16 %v3697
        %v3727 = vunpack.c.l.b16 %v3698
        %v3728 = vunpack.c.h.b16 %v3698
        %v3729 = vunpack.c.l.b16 %v3699
        %v3730 = vunpack.c.h.b16 %v3699
        %v3731 = vunpack.c.l.b16 %v3700
        %v3732 = vunpack.c.h.b16 %v3700
        %v3733 = vunpack.c.l.b16 %v3701
        %v3734 = vunpack.c.h.b16 %v3701
        %v3735 = vpack.c.b16 %v3715, %v3713
        %v3736 = vpack.c.b16 %v3716, %v3714
        %v3737 = vpack.c.b16 %v3719, %v3717
        %v3738 = vpack.c.b16 %v3720, %v3718
        %v3739 = vpack.c.b16 %v3723, %v3721
        %v3740 = vpack.c.b16 %v3724, %v3722
        %v3741 = vpack.c.b16 %v3727, %v3725
        %v3742 = vpack.c.b16 %v3728, %v3726
        %v3743 = vpack.c.b16 %v3731, %v3729
        %v3744 = vpack.c.b16 %v3732, %v3730
        %v3745 = vpack.c.b16 %v3733, %v3733
        %v3746 = vpack.c.b16 %v3734, %v3734
        %v3758 = vsel %vm2803, %v3682, 0
        %v3761 = vsel %vm2803, %v3683, 0
        %v3764 = vsel %vm2803, %v3684, 0
        %v3767 = vsel %vm2803, %v3685, 0
        %v3770 = vsel %vm2803, %v3686, 0
        %v3773 = vsel %vm2803, %v3687, 0
        %v3776 = vsel %vm2803, %v3688, 0
        %v3779 = vsel %vm2803, %v3689, 0
        %v3782 = vsel %vm3082, %v3745, 0
        %v3785 = vsel %vm3082, %v3746, 0
        %3787 = vmatprep.subr.bf16.mxu0 %v3736
        %3788 = vmatpush1.bf16.msra.mxu0 %v3735
        %3789 = vmatprep.subr.bf16.mxu0 %v3738
        %3790 = vmatpush1.bf16.msra.mxu0 %v3737
        %3791 = vmatprep.subr.bf16.mxu0 %v3740
        %3792 = vmatpush1.bf16.msra.mxu0 %v3739
        %3793 = vmatprep.subr.bf16.mxu0 %v3742
        %3794 = vmatpush1.bf16.msra.mxu0 %v3741
        %3795 = vmatprep.subr.bf16.mxu0 %v3744
        %3796 = vmatpush1.bf16.msra.mxu0 %v3743
        %3797 = vmatprep.subr.bf16.mxu0 %v3785
        %3798 = vmatpush1.bf16.msra.mxu0 %v3782
        %3799 = vmatprep.subr.bf16.mxu0 0
        %3800 = vmatpush1.bf16.msra.mxu0 0
        %3801 = vmatprep.subr.bf16.mxu0 0
        %3802 = vmatpush1.bf16.msra.mxu0 0
        %3803 = vmatprep.subr.bf16.mxu0 0
        %3804 = vmatpush1.bf16.msra.mxu0 0
        %3805 = vmatprep.subr.bf16.mxu0 0
        %3806 = vmatpush1.bf16.msra.mxu0 0
        %3807 = vmatprep.subr.bf16.mxu0 0
        %3808 = vmatpush1.bf16.msra.mxu0 0
        %3809 = vmatprep.subr.bf16.mxu0 0
        %3810 = vmatpush1.bf16.msra.mxu0 0
        %3811 = vmatprep.subr.bf16.mxu0 0
        %3812 = vmatpush1.bf16.msra.mxu0 0
        %3813 = vmatprep.subr.bf16.mxu0 0
        %3814 = vmatpush1.bf16.msra.mxu0 0
        %3815 = vmatprep.subr.bf16.mxu0 0
        %3816 = vmatpush1.bf16.msra.mxu0 0
        %3817 = vmatprep.subr.bf16.mxu0 0
        %3818 = vmatpush1.bf16.msra.mxu0 0
        %3819 = vmatprep.mubr.bf16.mxu0 0
        %3820 = vmatmul.mubr.bf16.gmra.mrb[0].mxu0 %v3758
        %v3821 = vpop.f32.mrb[0].mxu0
        %v3822 = vadd.f32 0.0, %v3821
        %v3823 = vpop.f32.mrb[0].mxu0
        %v3824 = vadd.f32 0.0, %v3823
        %v3825 = vpop.f32.mrb[0].mxu0
        %v3826 = vadd.f32 0.0, %v3825
        %v3827 = vpop.f32.mrb[0].mxu0
        %v3828 = vadd.f32 0.0, %v3827
        %3829 = vmatprep.mubr.bf16.mxu0 0
        %3830 = vmatmul.mubr.bf16.gmra.mrb[0].mxu0 %v3761
        %v3831 = vpop.f32.mrb[0].mxu0
        %v3832 = vadd.f32 0.0, %v3831
        %v3833 = vpop.f32.mrb[0].mxu0
        %v3834 = vadd.f32 0.0, %v3833
        %v3835 = vpop.f32.mrb[0].mxu0
        %v3836 = vadd.f32 0.0, %v3835
        %v3837 = vpop.f32.mrb[0].mxu0
        %v3838 = vadd.f32 0.0, %v3837
        %3839 = vmatprep.mubr.bf16.mxu0 0
        %3840 = vmatmul.mubr.bf16.gmra.mrb[0].mxu0 %v3764
        %v3841 = vpop.f32.mrb[0].mxu0
        %v3842 = vadd.f32 0.0, %v3841
        %v3843 = vpop.f32.mrb[0].mxu0
        %v3844 = vadd.f32 0.0, %v3843
        %v3845 = vpop.f32.mrb[0].mxu0
        %v3846 = vadd.f32 0.0, %v3845
        %v3847 = vpop.f32.mrb[0].mxu0
        %v3848 = vadd.f32 0.0, %v3847
        %3849 = vmatprep.mubr.bf16.mxu0 0
        %3850 = vmatmul.mubr.bf16.gmra.mrb[0].mxu0 %v3767
        %v3851 = vpop.f32.mrb[0].mxu0
        %v3852 = vadd.f32 0.0, %v3851
        %v3853 = vpop.f32.mrb[0].mxu0
        %v3854 = vadd.f32 0.0, %v3853
        %v3855 = vpop.f32.mrb[0].mxu0
        %v3856 = vadd.f32 0.0, %v3855
        %v3857 = vpop.f32.mrb[0].mxu0
        %v3858 = vadd.f32 0.0, %v3857
        %3859 = vmatprep.mubr.bf16.mxu0 0
        %3860 = vmatmul.mubr.bf16.gmra.mrb[0].mxu0 %v3770
        %v3861 = vpop.f32.mrb[0].mxu0
        %v3862 = vadd.f32 0.0, %v3861
        %v3863 = vpop.f32.mrb[0].mxu0
        %v3864 = vadd.f32 0.0, %v3863
        %v3865 = vpop.f32.mrb[0].mxu0
        %v3866 = vadd.f32 0.0, %v3865
        %v3867 = vpop.f32.mrb[0].mxu0
        %v3868 = vadd.f32 0.0, %v3867
        %3869 = vmatprep.mubr.bf16.mxu0 0
        %3870 = vmatmul.mubr.bf16.gmra.mrb[0].mxu0 %v3773
        %v3871 = vpop.f32.mrb[0].mxu0
        %v3872 = vadd.f32 0.0, %v3871
        %v3873 = vpop.f32.mrb[0].mxu0
        %v3874 = vadd.f32 0.0, %v3873
        %v3875 = vpop.f32.mrb[0].mxu0
        %v3876 = vadd.f32 0.0, %v3875
        %v3877 = vpop.f32.mrb[0].mxu0
        %v3878 = vadd.f32 0.0, %v3877
        %3879 = vmatprep.mubr.bf16.mxu0 0
        %3880 = vmatmul.mubr.bf16.gmra.mrb[0].mxu0 %v3776
        %v3881 = vpop.f32.mrb[0].mxu0
        %v3882 = vadd.f32 0.0, %v3881
        %v3883 = vpop.f32.mrb[0].mxu0
        %v3884 = vadd.f32 0.0, %v3883
        %v3885 = vpop.f32.mrb[0].mxu0
        %v3886 = vadd.f32 0.0, %v3885
        %v3887 = vpop.f32.mrb[0].mxu0
        %v3888 = vadd.f32 0.0, %v3887
        %3889 = vmatprep.mubr.bf16.mxu0 0
        %3890 = vmatmul.mubr.bf16.gmra.mrb[0].mxu0 %v3779
        %v3891 = vpop.f32.mrb[0].mxu0
        %v3892 = vadd.f32 0.0, %v3891
        %v3893 = vpop.f32.mrb[0].mxu0
        %v3894 = vadd.f32 0.0, %v3893
        %v3895 = vpop.f32.mrb[0].mxu0
        %v3896 = vadd.f32 0.0, %v3895
        %v3897 = vpop.f32.mrb[0].mxu0
        %v3898 = vadd.f32 0.0, %v3897
        %3899 = vdwg.mxu0
        %v3900 = vadd.f32 %v3634, %v3822
        %v3901 = vadd.f32 %v3635, %v3824
        %v3902 = vadd.f32 %v3636, %v3826
        %v3903 = vadd.f32 %v3637, %v3828
        %v3904 = vadd.f32 %v3638, %v3832
        %v3905 = vadd.f32 %v3639, %v3834
        %v3906 = vadd.f32 %v3640, %v3836
        %v3907 = vadd.f32 %v3641, %v3838
        %v3908 = vadd.f32 %v3642, %v3842
        %v3909 = vadd.f32 %v3643, %v3844
        %v3910 = vadd.f32 %v3644, %v3846
        %v3911 = vadd.f32 %v3645, %v3848
        %v3912 = vadd.f32 %v3646, %v3852
        %v3913 = vadd.f32 %v3647, %v3854
        %v3914 = vadd.f32 %v3648, %v3856
        %v3915 = vadd.f32 %v3649, %v3858
        %v3916 = vadd.f32 %v3650, %v3862
        %v3917 = vadd.f32 %v3651, %v3864
        %v3918 = vadd.f32 %v3652, %v3866
        %v3919 = vadd.f32 %v3653, %v3868
        %v3920 = vadd.f32 %v3654, %v3872
        %v3921 = vadd.f32 %v3655, %v3874
        %v3922 = vadd.f32 %v3656, %v3876
        %v3923 = vadd.f32 %v3657, %v3878
        %v3924 = vadd.f32 %v3658, %v3882
        %v3925 = vadd.f32 %v3659, %v3884
        %v3926 = vadd.f32 %v3660, %v3886
        %v3927 = vadd.f32 %v3661, %v3888
        %v3928 = vadd.f32 %v3662, %v3892
        %v3929 = vadd.f32 %v3663, %v3894
        %v3930 = vadd.f32 %v3664, %v3896
        %v3931 = vadd.f32 %v3665, %v3898
        %v3932 = vld [vmem:[#allocation4 + $0x4] sm:$0xff]
        %v3933 = vld [vmem:[#allocation4 + $0xc] sm:$0xff]
        %v3934 = vld [vmem:[#allocation4 + $0x14] sm:$0xff]
        %v3935 = vld [vmem:[#allocation4 + $0x1c] sm:$0xff]
        %v3936 = vld [vmem:[#allocation4 + $0x24] sm:$0xff]
        %v3937 = vld [vmem:[#allocation4 + $0x2c] sm:$0xff]
        %v3938 = vld [vmem:[#allocation4 + $0x34] sm:$0xff]
        %v3939 = vld [vmem:[#allocation4 + $0x3c] sm:$0xff]
        %v3940 = vld [vmem:[#allocation4 + $0x44] sm:$0xff]
        %v3941 = vld [vmem:[#allocation4 + $0x4c] sm:$0xff]
        %v3942 = vld [vmem:[#allocation4 + $0x54] sm:$0xff]
        %v3943 = vld [vmem:[#allocation4 + $0x5c] sm:$0xff]
        %v3944 = vld [vmem:[#allocation4 + $0x64] sm:$0xff]
        %v3945 = vld [vmem:[#allocation4 + $0x6c] sm:$0xff]
        %v3946 = vld [vmem:[#allocation4 + $0x74] sm:$0xff]
        %v3947 = vld [vmem:[#allocation4 + $0x7c] sm:$0xff]
        %v3948 = vpack.c.bf16 %v3933, %v3932
        %v3949 = vpack.c.bf16 %v3935, %v3934
        %v3950 = vpack.c.bf16 %v3937, %v3936
        %v3951 = vpack.c.bf16 %v3939, %v3938
        %v3952 = vpack.c.bf16 %v3941, %v3940
        %v3953 = vpack.c.bf16 %v3943, %v3942
        %v3954 = vpack.c.bf16 %v3945, %v3944
        %v3955 = vpack.c.bf16 %v3947, %v3946
        %s3956 = scalar_lea.vmem %s4, 352
        %v3957 = vld [vmem:[%s3956] sm:$0xff]
        %v3958 = vld [vmem:[%s3956 + $0x8] sm:$0xff]
        %v3959 = vld [vmem:[%s3956 + $0x10] sm:$0xff]
        %v3960 = vld [vmem:[%s3956 + $0x18] sm:$0xff]
        %v3961 = vld [vmem:[%s3956 + $0x20] sm:$0xff]
        %v3962 = vld [vmem:[%s3956 + $0x28] sm:$0xff]
        %v3963 = vld [vmem:[%s3956 + $0x30] sm:$0xff]
        %v3964 = vld [vmem:[%s3956 + $0x38] sm:$0xff]
        %v3965 = vld [vmem:[%s3956 + $0x40] sm:$0xff]
        %v3966 = vld [vmem:[%s3956 + $0x48] sm:$0xff]
        %v3967 = vld [vmem:[%s3956 + $0x50] sm:$0x33]
        %v3979 = vunpack.c.l.b16 %v3957
        %v3980 = vunpack.c.h.b16 %v3957
        %v3981 = vunpack.c.l.b16 %v3958
        %v3982 = vunpack.c.h.b16 %v3958
        %v3983 = vunpack.c.l.b16 %v3959
        %v3984 = vunpack.c.h.b16 %v3959
        %v3985 = vunpack.c.l.b16 %v3960
        %v3986 = vunpack.c.h.b16 %v3960
        %v3987 = vunpack.c.l.b16 %v3961
        %v3988 = vunpack.c.h.b16 %v3961
        %v3989 = vunpack.c.l.b16 %v3962
        %v3990 = vunpack.c.h.b16 %v3962
        %v3991 = vunpack.c.l.b16 %v3963
        %v3992 = vunpack.c.h.b16 %v3963
        %v3993 = vunpack.c.l.b16 %v3964
        %v3994 = vunpack.c.h.b16 %v3964
        %v3995 = vunpack.c.l.b16 %v3965
        %v3996 = vunpack.c.h.b16 %v3965
        %v3997 = vunpack.c.l.b16 %v3966
        %v3998 = vunpack.c.h.b16 %v3966
        %v3999 = vunpack.c.l.b16 %v3967
        %v4000 = vunpack.c.h.b16 %v3967
        %v4001 = vpack.c.b16 %v3981, %v3979
        %v4002 = vpack.c.b16 %v3982, %v3980
        %v4003 = vpack.c.b16 %v3985, %v3983
        %v4004 = vpack.c.b16 %v3986, %v3984
        %v4005 = vpack.c.b16 %v3989, %v3987
        %v4006 = vpack.c.b16 %v3990, %v3988
        %v4007 = vpack.c.b16 %v3993, %v3991
        %v4008 = vpack.c.b16 %v3994, %v3992
        %v4009 = vpack.c.b16 %v3997, %v3995
        %v4010 = vpack.c.b16 %v3998, %v3996
        %v4011 = vpack.c.b16 %v3999, %v3999
        %v4012 = vpack.c.b16 %v4000, %v4000
        %v4024 = vsel %vm2803, %v3948, 0
        %v4027 = vsel %vm2803, %v3949, 0
        %v4030 = vsel %vm2803, %v3950, 0
        %v4033 = vsel %vm2803, %v3951, 0
        %v4036 = vsel %vm2803, %v3952, 0
        %v4039 = vsel %vm2803, %v3953, 0
        %v4042 = vsel %vm2803, %v3954, 0
        %v4045 = vsel %vm2803, %v3955, 0
        %v4048 = vsel %vm3082, %v4011, 0
        %v4051 = vsel %vm3082, %v4012, 0
        %4053 = vmatprep.subr.bf16.mxu0 %v4002
        %4054 = vmatpush1.bf16.msra.mxu0 %v4001
        %4055 = vmatprep.subr.bf16.mxu0 %v4004
        %4056 = vmatpush1.bf16.msra.mxu0 %v4003
        %4057 = vmatprep.subr.bf16.mxu0 %v4006
        %4058 = vmatpush1.bf16.msra.mxu0 %v4005
        %4059 = vmatprep.subr.bf16.mxu0 %v4008
        %4060 = vmatpush1.bf16.msra.mxu0 %v4007
        %4061 = vmatprep.subr.bf16.mxu0 %v4010
        %4062 = vmatpush1.bf16.msra.mxu0 %v4009
        %4063 = vmatprep.subr.bf16.mxu0 %v4051
        %4064 = vmatpush1.bf16.msra.mxu0 %v4048
        %4065 = vmatprep.subr.bf16.mxu0 0
        %4066 = vmatpush1.bf16.msra.mxu0 0
        %4067 = vmatprep.subr.bf16.mxu0 0
        %4068 = vmatpush1.bf16.msra.mxu0 0
        %4069 = vmatprep.subr.bf16.mxu0 0
        %4070 = vmatpush1.bf16.msra.mxu0 0
        %4071 = vmatprep.subr.bf16.mxu0 0
        %4072 = vmatpush1.bf16.msra.mxu0 0
        %4073 = vmatprep.subr.bf16.mxu0 0
        %4074 = vmatpush1.bf16.msra.mxu0 0
        %4075 = vmatprep.subr.bf16.mxu0 0
        %4076 = vmatpush1.bf16.msra.mxu0 0
        %4077 = vmatprep.subr.bf16.mxu0 0
        %4078 = vmatpush1.bf16.msra.mxu0 0
        %4079 = vmatprep.subr.bf16.mxu0 0
        %4080 = vmatpush1.bf16.msra.mxu0 0
        %4081 = vmatprep.subr.bf16.mxu0 0
        %4082 = vmatpush1.bf16.msra.mxu0 0
        %4083 = vmatprep.subr.bf16.mxu0 0
        %4084 = vmatpush1.bf16.msra.mxu0 0
        %4085 = vmatprep.mubr.bf16.mxu0 0
        %4086 = vmatmul.mubr.bf16.gmra.mrb[0].mxu0 %v4024
        %v4087 = vpop.f32.mrb[0].mxu0
        %v4088 = vadd.f32 0.0, %v4087
        %v4089 = vpop.f32.mrb[0].mxu0
        %v4090 = vadd.f32 0.0, %v4089
        %v4091 = vpop.f32.mrb[0].mxu0
        %v4092 = vadd.f32 0.0, %v4091
        %v4093 = vpop.f32.mrb[0].mxu0
        %v4094 = vadd.f32 0.0, %v4093
        %4095 = vmatprep.mubr.bf16.mxu0 0
        %4096 = vmatmul.mubr.bf16.gmra.mrb[0].mxu0 %v4027
        %v4097 = vpop.f32.mrb[0].mxu0
        %v4098 = vadd.f32 0.0, %v4097
        %v4099 = vpop.f32.mrb[0].mxu0
        %v4100 = vadd.f32 0.0, %v4099
        %v4101 = vpop.f32.mrb[0].mxu0
        %v4102 = vadd.f32 0.0, %v4101
        %v4103 = vpop.f32.mrb[0].mxu0
        %v4104 = vadd.f32 0.0, %v4103
        %4105 = vmatprep.mubr.bf16.mxu0 0
        %4106 = vmatmul.mubr.bf16.gmra.mrb[0].mxu0 %v4030
        %v4107 = vpop.f32.mrb[0].mxu0
        %v4108 = vadd.f32 0.0, %v4107
        %v4109 = vpop.f32.mrb[0].mxu0
        %v4110 = vadd.f32 0.0, %v4109
        %v4111 = vpop.f32.mrb[0].mxu0
        %v4112 = vadd.f32 0.0, %v4111
        %v4113 = vpop.f32.mrb[0].mxu0
        %v4114 = vadd.f32 0.0, %v4113
        %4115 = vmatprep.mubr.bf16.mxu0 0
        %4116 = vmatmul.mubr.bf16.gmra.mrb[0].mxu0 %v4033
        %v4117 = vpop.f32.mrb[0].mxu0
        %v4118 = vadd.f32 0.0, %v4117
        %v4119 = vpop.f32.mrb[0].mxu0
        %v4120 = vadd.f32 0.0, %v4119
        %v4121 = vpop.f32.mrb[0].mxu0
        %v4122 = vadd.f32 0.0, %v4121
        %v4123 = vpop.f32.mrb[0].mxu0
        %v4124 = vadd.f32 0.0, %v4123
        %4125 = vmatprep.mubr.bf16.mxu0 0
        %4126 = vmatmul.mubr.bf16.gmra.mrb[0].mxu0 %v4036
        %v4127 = vpop.f32.mrb[0].mxu0
        %v4128 = vadd.f32 0.0, %v4127
        %v4129 = vpop.f32.mrb[0].mxu0
        %v4130 = vadd.f32 0.0, %v4129
        %v4131 = vpop.f32.mrb[0].mxu0
        %v4132 = vadd.f32 0.0, %v4131
        %v4133 = vpop.f32.mrb[0].mxu0
        %v4134 = vadd.f32 0.0, %v4133
        %4135 = vmatprep.mubr.bf16.mxu0 0
        %4136 = vmatmul.mubr.bf16.gmra.mrb[0].mxu0 %v4039
        %v4137 = vpop.f32.mrb[0].mxu0
        %v4138 = vadd.f32 0.0, %v4137
        %v4139 = vpop.f32.mrb[0].mxu0
        %v4140 = vadd.f32 0.0, %v4139
        %v4141 = vpop.f32.mrb[0].mxu0
        %v4142 = vadd.f32 0.0, %v4141
        %v4143 = vpop.f32.mrb[0].mxu0
        %v4144 = vadd.f32 0.0, %v4143
        %4145 = vmatprep.mubr.bf16.mxu0 0
        %4146 = vmatmul.mubr.bf16.gmra.mrb[0].mxu0 %v4042
        %v4147 = vpop.f32.mrb[0].mxu0
        %v4148 = vadd.f32 0.0, %v4147
        %v4149 = vpop.f32.mrb[0].mxu0
        %v4150 = vadd.f32 0.0, %v4149
        %v4151 = vpop.f32.mrb[0].mxu0
        %v4152 = vadd.f32 0.0, %v4151
        %v4153 = vpop.f32.mrb[0].mxu0
        %v4154 = vadd.f32 0.0, %v4153
        %4155 = vmatprep.mubr.bf16.mxu0 0
        %4156 = vmatmul.mubr.bf16.gmra.mrb[0].mxu0 %v4045
        %v4157 = vpop.f32.mrb[0].mxu0
        %v4158 = vadd.f32 0.0, %v4157
        %v4159 = vpop.f32.mrb[0].mxu0
        %v4160 = vadd.f32 0.0, %v4159
        %v4161 = vpop.f32.mrb[0].mxu0
        %v4162 = vadd.f32 0.0, %v4161
        %v4163 = vpop.f32.mrb[0].mxu0
        %v4164 = vadd.f32 0.0, %v4163
        %4165 = vdwg.mxu0
        %v4166 = vadd.f32 %v3900, %v4088
        %v4167 = vadd.f32 %v3901, %v4090
        %v4168 = vadd.f32 %v3902, %v4092
        %v4169 = vadd.f32 %v3903, %v4094
        %v4170 = vadd.f32 %v3904, %v4098
        %v4171 = vadd.f32 %v3905, %v4100
        %v4172 = vadd.f32 %v3906, %v4102
        %v4173 = vadd.f32 %v3907, %v4104
        %v4174 = vadd.f32 %v3908, %v4108
        %v4175 = vadd.f32 %v3909, %v4110
        %v4176 = vadd.f32 %v3910, %v4112
        %v4177 = vadd.f32 %v3911, %v4114
        %v4178 = vadd.f32 %v3912, %v4118
        %v4179 = vadd.f32 %v3913, %v4120
        %v4180 = vadd.f32 %v3914, %v4122
        %v4181 = vadd.f32 %v3915, %v4124
        %v4182 = vadd.f32 %v3916, %v4128
        %v4183 = vadd.f32 %v3917, %v4130
        %v4184 = vadd.f32 %v3918, %v4132
        %v4185 = vadd.f32 %v3919, %v4134
        %v4186 = vadd.f32 %v3920, %v4138
        %v4187 = vadd.f32 %v3921, %v4140
        %v4188 = vadd.f32 %v3922, %v4142
        %v4189 = vadd.f32 %v3923, %v4144
        %v4190 = vadd.f32 %v3924, %v4148
        %v4191 = vadd.f32 %v3925, %v4150
        %v4192 = vadd.f32 %v3926, %v4152
        %v4193 = vadd.f32 %v3927, %v4154
        %v4194 = vadd.f32 %v3928, %v4158
        %v4195 = vadd.f32 %v3929, %v4160
        %v4196 = vadd.f32 %v3930, %v4162
        %v4197 = vadd.f32 %v3931, %v4164
        %v4198 = vld [vmem:[%s5] sm:$0x3]
        %v4200 = vlaneseq
        %v4201 = vshrl.u32 %v4200, 7
        %v4202 = vsub.s32 0, %v4201
        %v4203 = vrot.slane %v4198, %v4202
        %v4204 = vlaneseq
        %v4205 = vshrl.u32 %v4204, 7
        %v4206 = vsub.s32 1, %v4205
        %v4207 = vrot.slane %v4198, %v4206
        %v4210 = vadd.f32 %v4166, %v4203
        %v4211 = vadd.f32 %v4167, %v4207
        %v4212 = vadd.f32 %v4168, %v4203
        %v4213 = vadd.f32 %v4169, %v4207
        %v4214 = vadd.f32 %v4170, %v4203
        %v4215 = vadd.f32 %v4171, %v4207
        %v4216 = vadd.f32 %v4172, %v4203
        %v4217 = vadd.f32 %v4173, %v4207
        %v4218 = vadd.f32 %v4174, %v4203
        %v4219 = vadd.f32 %v4175, %v4207
        %v4220 = vadd.f32 %v4176, %v4203
        %v4221 = vadd.f32 %v4177, %v4207
        %v4222 = vadd.f32 %v4178, %v4203
        %v4223 = vadd.f32 %v4179, %v4207
        %v4224 = vadd.f32 %v4180, %v4203
        %v4225 = vadd.f32 %v4181, %v4207
        %v4226 = vadd.f32 %v4182, %v4203
        %v4227 = vadd.f32 %v4183, %v4207
        %v4228 = vadd.f32 %v4184, %v4203
        %v4229 = vadd.f32 %v4185, %v4207
        %v4230 = vadd.f32 %v4186, %v4203
        %v4231 = vadd.f32 %v4187, %v4207
        %v4232 = vadd.f32 %v4188, %v4203
        %v4233 = vadd.f32 %v4189, %v4207
        %v4234 = vadd.f32 %v4190, %v4203
        %v4235 = vadd.f32 %v4191, %v4207
        %v4236 = vadd.f32 %v4192, %v4203
        %v4237 = vadd.f32 %v4193, %v4207
        %v4238 = vadd.f32 %v4194, %v4203
        %v4239 = vadd.f32 %v4195, %v4207
        %v4240 = vadd.f32 %v4196, %v4203
        %v4241 = vadd.f32 %v4197, %v4207
        %v4242 = vtanh.pop %v4210
        %v4243 = vtanh.pop %v4211
        %v4244 = vtanh.pop %v4212
        %v4245 = vtanh.pop %v4213
        %v4246 = vtanh.pop %v4214
        %v4247 = vtanh.pop %v4215
        %v4248 = vtanh.pop %v4216
        %v4249 = vtanh.pop %v4217
        %v4250 = vtanh.pop %v4218
        %v4251 = vtanh.pop %v4219
        %v4252 = vtanh.pop %v4220
        %v4253 = vtanh.pop %v4221
        %v4254 = vtanh.pop %v4222
        %v4255 = vtanh.pop %v4223
        %v4256 = vtanh.pop %v4224
        %v4257 = vtanh.pop %v4225
        %v4258 = vtanh.pop %v4226
        %v4259 = vtanh.pop %v4227
        %v4260 = vtanh.pop %v4228
        %v4261 = vtanh.pop %v4229
        %v4262 = vtanh.pop %v4230
        %v4263 = vtanh.pop %v4231
        %v4264 = vtanh.pop %v4232
        %v4265 = vtanh.pop %v4233
        %v4266 = vtanh.pop %v4234
        %v4267 = vtanh.pop %v4235
        %v4268 = vtanh.pop %v4236
        %v4269 = vtanh.pop %v4237
        %v4270 = vtanh.pop %v4238
        %v4271 = vtanh.pop %v4239
        %v4272 = vtanh.pop %v4240
        %v4273 = vtanh.pop %v4241
        %v4274 = vpack.c.bf16 %v4244, %v4242
        %v4275 = vpack.c.bf16 %v4245, %v4243
        %v4276 = vpack.c.bf16 %v4248, %v4246
        %v4277 = vpack.c.bf16 %v4249, %v4247
        %v4278 = vpack.c.bf16 %v4252, %v4250
        %v4279 = vpack.c.bf16 %v4253, %v4251
        %v4280 = vpack.c.bf16 %v4256, %v4254
        %v4281 = vpack.c.bf16 %v4257, %v4255
        %v4282 = vpack.c.bf16 %v4260, %v4258
        %v4283 = vpack.c.bf16 %v4261, %v4259
        %v4284 = vpack.c.bf16 %v4264, %v4262
        %v4285 = vpack.c.bf16 %v4265, %v4263
        %v4286 = vpack.c.bf16 %v4268, %v4266
        %v4287 = vpack.c.bf16 %v4269, %v4267
        %v4288 = vpack.c.bf16 %v4272, %v4270
        %v4289 = vpack.c.bf16 %v4273, %v4271
        %v4290 = vld [vmem:[%s6] sm:$0xf]
        %v4291 = vld [vmem:[%s6 + $0x4] sm:$0xf]
        %v4292 = vld [vmem:[%s6 + $0x8] sm:$0xf]
        %v4293 = vld [vmem:[%s6 + $0xc] sm:$0xf]
        %v4294 = vld [vmem:[%s6 + $0x10] sm:$0xf]
        %v4295 = vld [vmem:[%s6 + $0x14] sm:$0xf]
        %v4296 = vld [vmem:[%s6 + $0x18] sm:$0xf]
        %v4297 = vld [vmem:[%s6 + $0x1c] sm:$0xf]
        %v4298 = vld [vmem:[%s6 + $0x20] sm:$0xf]
        %v4299 = vld [vmem:[%s6 + $0x24] sm:$0xf]
        %v4300 = vld [vmem:[%s6 + $0x28] sm:$0xf]
        %v4301 = vld [vmem:[%s6 + $0x2c] sm:$0xf]
        %v4302 = vld [vmem:[%s6 + $0x30] sm:$0xf]
        %v4303 = vld [vmem:[%s6 + $0x34] sm:$0xf]
        %v4304 = vld [vmem:[%s6 + $0x38] sm:$0xf]
        %v4305 = vld [vmem:[%s6 + $0x3c] sm:$0xf]
        %v4306 = vld [vmem:[%s6 + $0x40] sm:$0xf]
        %v4307 = vld [vmem:[%s6 + $0x44] sm:$0xf]
        %v4308 = vld [vmem:[%s6 + $0x48] sm:$0xf]
        %v4309 = vld [vmem:[%s6 + $0x4c] sm:$0xf]
        %v4330 = vunpack.c.l.b16 %v4290
        %v4331 = vunpack.c.l.b16 %v4291
        %v4332 = vunpack.c.l.b16 %v4292
        %v4333 = vunpack.c.l.b16 %v4293
        %v4334 = vunpack.c.l.b16 %v4294
        %v4335 = vunpack.c.l.b16 %v4295
        %v4336 = vunpack.c.l.b16 %v4296
        %v4337 = vunpack.c.l.b16 %v4297
        %v4338 = vunpack.c.l.b16 %v4298
        %v4339 = vunpack.c.l.b16 %v4299
        %v4340 = vunpack.c.l.b16 %v4300
        %v4341 = vunpack.c.l.b16 %v4301
        %v4342 = vunpack.c.l.b16 %v4302
        %v4343 = vunpack.c.l.b16 %v4303
        %v4344 = vunpack.c.l.b16 %v4304
        %v4345 = vunpack.c.l.b16 %v4305
        %v4346 = vunpack.c.l.b16 %v4306
        %v4347 = vunpack.c.l.b16 %v4307
        %v4348 = vunpack.c.l.b16 %v4308
        %v4349 = vunpack.c.l.b16 %v4309
        %v4350 = vpack.c.b16 %v4331, %v4330
        %v4351 = vpack.c.b16 %v4333, %v4332
        %v4352 = vpack.c.b16 %v4335, %v4334
        %v4353 = vpack.c.b16 %v4337, %v4336
        %v4354 = vpack.c.b16 %v4339, %v4338
        %v4355 = vpack.c.b16 %v4341, %v4340
        %v4356 = vpack.c.b16 %v4343, %v4342
        %v4357 = vpack.c.b16 %v4345, %v4344
        %v4358 = vpack.c.b16 %v4347, %v4346
        %v4359 = vpack.c.b16 %v4349, %v4348
        %vm4370 = vcmask 261120
        %v4372 = vsel %vm4370, %v4275, 0
        %v4375 = vsel %vm4370, %v4277, 0
        %v4378 = vsel %vm4370, %v4279, 0
        %v4381 = vsel %vm4370, %v4281, 0
        %v4384 = vsel %vm4370, %v4283, 0
        %v4387 = vsel %vm4370, %v4285, 0
        %v4390 = vsel %vm4370, %v4287, 0
        %v4393 = vsel %vm4370, %v4289, 0
        %4395 = vmatprep.subr.bf16.mxu0 0
        %4396 = vmatpush1.bf16.msra.mxu0 %v4350
        %4397 = vmatprep.subr.bf16.mxu0 0
        %4398 = vmatpush1.bf16.msra.mxu0 %v4351
        %4399 = vmatprep.subr.bf16.mxu0 0
        %4400 = vmatpush1.bf16.msra.mxu0 %v4352
        %4401 = vmatprep.subr.bf16.mxu0 0
        %4402 = vmatpush1.bf16.msra.mxu0 %v4353
        %4403 = vmatprep.subr.bf16.mxu0 0
        %4404 = vmatpush1.bf16.msra.mxu0 %v4354
        %4405 = vmatprep.subr.bf16.mxu0 0
        %4406 = vmatpush1.bf16.msra.mxu0 %v4355
        %4407 = vmatprep.subr.bf16.mxu0 0
        %4408 = vmatpush1.bf16.msra.mxu0 %v4356
        %4409 = vmatprep.subr.bf16.mxu0 0
        %4410 = vmatpush1.bf16.msra.mxu0 %v4357
        %4411 = vmatprep.subr.bf16.mxu0 0
        %4412 = vmatpush1.bf16.msra.mxu0 %v4358
        %4413 = vmatprep.subr.bf16.mxu0 0
        %4414 = vmatpush1.bf16.msra.mxu0 %v4359
        %4415 = vmatprep.subr.bf16.mxu0 0
        %4416 = vmatpush1.bf16.msra.mxu0 0
        %4417 = vmatprep.subr.bf16.mxu0 0
        %4418 = vmatpush1.bf16.msra.mxu0 0
        %4419 = vmatprep.subr.bf16.mxu0 0
        %4420 = vmatpush1.bf16.msra.mxu0 0
        %4421 = vmatprep.subr.bf16.mxu0 0
        %4422 = vmatpush1.bf16.msra.mxu0 0
        %4423 = vmatprep.subr.bf16.mxu0 0
        %4424 = vmatpush1.bf16.msra.mxu0 0
        %4425 = vmatprep.subr.bf16.mxu0 0
        %4426 = vmatpush1.bf16.msra.mxu0 0
        %4427 = vmatprep.mubr.bf16.mxu0 %v4372
        %4428 = vmatmul.mubr.bf16.gmra.mrb[0].mxu0 %v4274
        %v4429 = vpop.f32.mrb[0].mxu0
        %v4430 = vadd.f32 0.0, %v4429
        %v4431 = vpop.f32.mrb[0].mxu0
        %v4432 = vpop.f32.mrb[0].mxu0
        %v4433 = vadd.f32 0.0, %v4432
        %v4434 = vpop.f32.mrb[0].mxu0
        %4435 = vmatprep.mubr.bf16.mxu0 %v4375
        %4436 = vmatmul.mubr.bf16.gmra.mrb[0].mxu0 %v4276
        %v4437 = vpop.f32.mrb[0].mxu0
        %v4438 = vadd.f32 0.0, %v4437
        %v4439 = vpop.f32.mrb[0].mxu0
        %v4440 = vpop.f32.mrb[0].mxu0
        %v4441 = vadd.f32 0.0, %v4440
        %v4442 = vpop.f32.mrb[0].mxu0
        %4443 = vmatprep.mubr.bf16.mxu0 %v4378
        %4444 = vmatmul.mubr.bf16.gmra.mrb[0].mxu0 %v4278
        %v4445 = vpop.f32.mrb[0].mxu0
        %v4446 = vadd.f32 0.0, %v4445
        %v4447 = vpop.f32.mrb[0].mxu0
        %v4448 = vpop.f32.mrb[0].mxu0
        %v4449 = vadd.f32 0.0, %v4448
        %v4450 = vpop.f32.mrb[0].mxu0
        %4451 = vmatprep.mubr.bf16.mxu0 %v4381
        %4452 = vmatmul.mubr.bf16.gmra.mrb[0].mxu0 %v4280
        %v4453 = vpop.f32.mrb[0].mxu0
        %v4454 = vadd.f32 0.0, %v4453
        %v4455 = vpop.f32.mrb[0].mxu0
        %v4456 = vpop.f32.mrb[0].mxu0
        %v4457 = vadd.f32 0.0, %v4456
        %v4458 = vpop.f32.mrb[0].mxu0
        %4459 = vmatprep.mubr.bf16.mxu0 %v4384
        %4460 = vmatmul.mubr.bf16.gmra.mrb[0].mxu0 %v4282
        %v4461 = vpop.f32.mrb[0].mxu0
        %v4462 = vadd.f32 0.0, %v4461
        %v4463 = vpop.f32.mrb[0].mxu0
        %v4464 = vpop.f32.mrb[0].mxu0
        %v4465 = vadd.f32 0.0, %v4464
        %v4466 = vpop.f32.mrb[0].mxu0
        %4467 = vmatprep.mubr.bf16.mxu0 %v4387
        %4468 = vmatmul.mubr.bf16.gmra.mrb[0].mxu0 %v4284
        %v4469 = vpop.f32.mrb[0].mxu0
        %v4470 = vadd.f32 0.0, %v4469
        %v4471 = vpop.f32.mrb[0].mxu0
        %v4472 = vpop.f32.mrb[0].mxu0
        %v4473 = vadd.f32 0.0, %v4472
        %v4474 = vpop.f32.mrb[0].mxu0
        %4475 = vmatprep.mubr.bf16.mxu0 %v4390
        %4476 = vmatmul.mubr.bf16.gmra.mrb[0].mxu0 %v4286
        %v4477 = vpop.f32.mrb[0].mxu0
        %v4478 = vadd.f32 0.0, %v4477
        %v4479 = vpop.f32.mrb[0].mxu0
        %v4480 = vpop.f32.mrb[0].mxu0
        %v4481 = vadd.f32 0.0, %v4480
        %v4482 = vpop.f32.mrb[0].mxu0
        %4483 = vmatprep.mubr.bf16.mxu0 %v4393
        %4484 = vmatmul.mubr.bf16.gmra.mrb[0].mxu0 %v4288
        %v4485 = vpop.f32.mrb[0].mxu0
        %v4486 = vadd.f32 0.0, %v4485
        %v4487 = vpop.f32.mrb[0].mxu0
        %v4488 = vpop.f32.mrb[0].mxu0
        %v4489 = vadd.f32 0.0, %v4488
        %v4490 = vpop.f32.mrb[0].mxu0
        %4491 = vdwg.mxu0
        %vm4492 = vcmask 654336
        %4493 = vst.msk [vmem:[#allocation5] sm:$0xff] %vm4492, %v4430
        %4494 = vst.msk [vmem:[#allocation5 + $0x8] sm:$0xff] %vm4492, %v4433
        %4495 = vst.msk [vmem:[#allocation5 + $0x10] sm:$0xff] %vm4492, %v4438
        %4496 = vst.msk [vmem:[#allocation5 + $0x18] sm:$0xff] %vm4492, %v4441
        %4497 = vst.msk [vmem:[#allocation5 + $0x20] sm:$0xff] %vm4492, %v4446
        %4498 = vst.msk [vmem:[#allocation5 + $0x28] sm:$0xff] %vm4492, %v4449
        %4499 = vst.msk [vmem:[#allocation5 + $0x30] sm:$0xff] %vm4492, %v4454
        %4500 = vst.msk [vmem:[#allocation5 + $0x38] sm:$0xff] %vm4492, %v4457
        %4501 = vst.msk [vmem:[#allocation5 + $0x40] sm:$0xff] %vm4492, %v4462
        %4502 = vst.msk [vmem:[#allocation5 + $0x48] sm:$0xff] %vm4492, %v4465
        %4503 = vst.msk [vmem:[#allocation5 + $0x50] sm:$0xff] %vm4492, %v4470
        %4504 = vst.msk [vmem:[#allocation5 + $0x58] sm:$0xff] %vm4492, %v4473
        %4505 = vst.msk [vmem:[#allocation5 + $0x60] sm:$0xff] %vm4492, %v4478
        %4506 = vst.msk [vmem:[#allocation5 + $0x68] sm:$0xff] %vm4492, %v4481
        %4507 = vst.msk [vmem:[#allocation5 + $0x70] sm:$0xff] %vm4492, %v4486
        %4508 = vst.msk [vmem:[#allocation5 + $0x78] sm:$0xff] %vm4492, %v4489
        %v4509 = vld [vmem:[#allocation5] ss:$2 sm:$0xff]
        %s4510 = scalar_lea.vmem [#allocation5], 16
        %v4511 = vld [vmem:[%s4510] ss:$2 sm:$0xff]
        %s4512 = scalar_lea.vmem [#allocation5], 32
        %v4513 = vld [vmem:[%s4512] ss:$2 sm:$0xff]
        %s4514 = scalar_lea.vmem [#allocation5], 48
        %v4515 = vld [vmem:[%s4514] ss:$2 sm:$0xff]
        %s4516 = scalar_lea.vmem [#allocation5], 64
        %v4517 = vld [vmem:[%s4516] ss:$2 sm:$0xff]
        %s4518 = scalar_lea.vmem [#allocation5], 80
        %v4519 = vld [vmem:[%s4518] ss:$2 sm:$0xff]
        %s4520 = scalar_lea.vmem [#allocation5], 96
        %v4521 = vld [vmem:[%s4520] ss:$2 sm:$0xff]
        %s4522 = scalar_lea.vmem [#allocation5], 112
        %v4523 = vld [vmem:[%s4522] ss:$2 sm:$0xff]
        %s4524 = scalar_lea.vmem [#allocation5], 1
        %v4525 = vld [vmem:[%s4524] ss:$2 sm:$0xff]
        %s4526 = scalar_lea.vmem [#allocation5], 17
        %v4527 = vld [vmem:[%s4526] ss:$2 sm:$0xff]
        %s4528 = scalar_lea.vmem [#allocation5], 33
        %v4529 = vld [vmem:[%s4528] ss:$2 sm:$0xff]
        %s4530 = scalar_lea.vmem [#allocation5], 49
        %v4531 = vld [vmem:[%s4530] ss:$2 sm:$0xff]
        %s4532 = scalar_lea.vmem [#allocation5], 65
        %v4533 = vld [vmem:[%s4532] ss:$2 sm:$0xff]
        %s4534 = scalar_lea.vmem [#allocation5], 81
        %v4535 = vld [vmem:[%s4534] ss:$2 sm:$0xff]
        %s4536 = scalar_lea.vmem [#allocation5], 97
        %v4537 = vld [vmem:[%s4536] ss:$2 sm:$0xff]
        %s4538 = scalar_lea.vmem [#allocation5], 113
        %v4539 = vld [vmem:[%s4538] ss:$2 sm:$0xff]
        %v4540 = vadd.f32 %v4509, %v4525
        %v4541 = vadd.f32 %v4511, %v4527
        %v4542 = vadd.f32 %v4513, %v4529
        %v4543 = vadd.f32 %v4515, %v4531
        %v4544 = vadd.f32 %v4517, %v4533
        %v4545 = vadd.f32 %v4519, %v4535
        %v4546 = vadd.f32 %v4521, %v4537
        %v4547 = vadd.f32 %v4523, %v4539
        %4548 = vst.msk [vmem:[#allocation6] sm:$0xff] %vm4492, %v4540
        %4549 = vst.msk [vmem:[#allocation6 + $0x8] sm:$0xff] %vm4492, %v4541
        %4550 = vst.msk [vmem:[#allocation6 + $0x10] sm:$0xff] %vm4492, %v4542
        %4551 = vst.msk [vmem:[#allocation6 + $0x18] sm:$0xff] %vm4492, %v4543
        %4552 = vst.msk [vmem:[#allocation6 + $0x20] sm:$0xff] %vm4492, %v4544
        %4553 = vst.msk [vmem:[#allocation6 + $0x28] sm:$0xff] %vm4492, %v4545
        %4554 = vst.msk [vmem:[#allocation6 + $0x30] sm:$0xff] %vm4492, %v4546
        %4555 = vst.msk [vmem:[#allocation6 + $0x38] sm:$0xff] %vm4492, %v4547
        %v4556 = vld [vmem:[#allocation6] ss:$8 sm:$0xf]
        %v4557 = vld [vmem:[#allocation6] ss:$8 sm:$0xf0]
        %v4558 = vor.u32 %v4556, %v4557
        %v4559 = vpack.c.bf16 %v4558, %v4558
        %v4560 = vld [vmem:[%s7] sm:$0xf]
        %v4561 = vld [vmem:[%s7 + $0x4] sm:$0xf]
        %v4562 = vld [vmem:[%s7 + $0x8] sm:$0xf]
        %v4563 = vld [vmem:[%s7 + $0xc] sm:$0xf]
        %v4564 = vld [vmem:[%s7 + $0x10] sm:$0xf]
        %v4565 = vld [vmem:[%s7 + $0x14] sm:$0xf]
        %v4566 = vld [vmem:[%s7 + $0x18] sm:$0xf]
        %v4567 = vld [vmem:[%s7 + $0x1c] sm:$0xf]
        %v4568 = vld [vmem:[%s7 + $0x20] sm:$0xf]
        %v4569 = vld [vmem:[%s7 + $0x24] sm:$0xf]
        %s4570 = scalar_lea.vmem [#allocation6], 1
        %v4571 = vld [vmem:[%s4570] ss:$8 sm:$0xf]
        %v4572 = vld [vmem:[%s4570] ss:$8 sm:$0xf0]
        %v4573 = vor.u32 %v4571, %v4572
        %v4574 = vpack.c.bf16 %v4573, %v4573
        %s4575 = scalar_lea.vmem %s7, 40
        %v4576 = vld [vmem:[%s4575] sm:$0xf]
        %v4577 = vld [vmem:[%s4575 + $0x4] sm:$0xf]
        %v4578 = vld [vmem:[%s4575 + $0x8] sm:$0xf]
        %v4579 = vld [vmem:[%s4575 + $0xc] sm:$0xf]
        %v4580 = vld [vmem:[%s4575 + $0x10] sm:$0xf]
        %v4581 = vld [vmem:[%s4575 + $0x14] sm:$0xf]
        %v4582 = vld [vmem:[%s4575 + $0x18] sm:$0xf]
        %v4583 = vld [vmem:[%s4575 + $0x1c] sm:$0xf]
        %v4584 = vld [vmem:[%s4575 + $0x20] sm:$0xf]
        %v4585 = vld [vmem:[%s4575 + $0x24] sm:$0xf]
        %v4596 = vunpack.c.l.b16 %v4576
        %v4597 = vunpack.c.l.b16 %v4577
        %v4598 = vunpack.c.l.b16 %v4578
        %v4599 = vunpack.c.l.b16 %v4579
        %v4600 = vunpack.c.l.b16 %v4580
        %v4601 = vunpack.c.l.b16 %v4581
        %v4602 = vunpack.c.l.b16 %v4582
        %v4603 = vunpack.c.l.b16 %v4583
        %v4604 = vunpack.c.l.b16 %v4584
        %v4605 = vunpack.c.l.b16 %v4585
        %v4606 = vpack.c.b16 %v4597, %v4596
        %v4607 = vpack.c.b16 %v4599, %v4598
        %v4608 = vpack.c.b16 %v4601, %v4600
        %v4609 = vpack.c.b16 %v4603, %v4602
        %v4610 = vpack.c.b16 %v4605, %v4604
        %v4617 = vsel %vm4492, %v4574, 0
        %4619 = vmatprep.subr.bf16.mxu0 0
        %4620 = vmatpush1.bf16.msra.mxu0 %v4606
        %4621 = vmatprep.subr.bf16.mxu0 0
        %4622 = vmatpush1.bf16.msra.mxu0 %v4607
        %4623 = vmatprep.subr.bf16.mxu0 0
        %4624 = vmatpush1.bf16.msra.mxu0 %v4608
        %4625 = vmatprep.subr.bf16.mxu0 0
        %4626 = vmatpush1.bf16.msra.mxu0 %v4609
        %4627 = vmatprep.subr.bf16.mxu0 0
        %4628 = vmatpush1.bf16.msra.mxu0 %v4610
        %4629 = vmatprep.subr.bf16.mxu0 0
        %4630 = vmatpush1.bf16.msra.mxu0 0
        %4631 = vmatprep.subr.bf16.mxu0 0
        %4632 = vmatpush1.bf16.msra.mxu0 0
        %4633 = vmatprep.subr.bf16.mxu0 0
        %4634 = vmatpush1.bf16.msra.mxu0 0
        %4635 = vmatprep.subr.bf16.mxu0 0
        %4636 = vmatpush1.bf16.msra.mxu0 0
        %4637 = vmatprep.subr.bf16.mxu0 0
        %4638 = vmatpush1.bf16.msra.mxu0 0
        %4639 = vmatprep.subr.bf16.mxu0 0
        %4640 = vmatpush1.bf16.msra.mxu0 0
        %4641 = vmatprep.subr.bf16.mxu0 0
        %4642 = vmatpush1.bf16.msra.mxu0 0
        %4643 = vmatprep.subr.bf16.mxu0 0
        %4644 = vmatpush1.bf16.msra.mxu0 0
        %4645 = vmatprep.subr.bf16.mxu0 0
        %4646 = vmatpush1.bf16.msra.mxu0 0
        %4647 = vmatprep.subr.bf16.mxu0 0
        %4648 = vmatpush1.bf16.msra.mxu0 0
        %4649 = vmatprep.subr.bf16.mxu0 0
        %4650 = vmatpush1.bf16.msra.mxu0 0
        %4651 = vmatprep.mubr.bf16.mxu0 0
        %4652 = vmatmul.mubr.bf16.gmra.mrb[0].mxu0 %v4617
        %v4653 = vpop.f32.mrb[0].mxu0
        %v4654 = vadd.f32 0.0, %v4653
        %v4655 = vpop.f32.mrb[0].mxu0
        %v4656 = vpop.f32.mrb[0].mxu0
        %v4657 = vpop.f32.mrb[0].mxu0
        %4658 = vdwg.mxu0
        %v4669 = vunpack.c.l.b16 %v4560
        %v4670 = vunpack.c.l.b16 %v4561
        %v4671 = vunpack.c.l.b16 %v4562
        %v4672 = vunpack.c.l.b16 %v4563
        %v4673 = vunpack.c.l.b16 %v4564
        %v4674 = vunpack.c.l.b16 %v4565
        %v4675 = vunpack.c.l.b16 %v4566
        %v4676 = vunpack.c.l.b16 %v4567
        %v4677 = vunpack.c.l.b16 %v4568
        %v4678 = vunpack.c.l.b16 %v4569
        %v4679 = vpack.c.b16 %v4670, %v4669
        %v4680 = vpack.c.b16 %v4672, %v4671
        %v4681 = vpack.c.b16 %v4674, %v4673
        %v4682 = vpack.c.b16 %v4676, %v4675
        %v4683 = vpack.c.b16 %v4678, %v4677
        %v4690 = vsel %vm4492, %v4559, 0
        %4692 = vmatprep.subr.bf16.mxu0 0
        %4693 = vmatpush1.bf16.msra.mxu0 %v4679
        %4694 = vmatprep.subr.bf16.mxu0 0
        %4695 = vmatpush1.bf16.msra.mxu0 %v4680
        %4696 = vmatprep.subr.bf16.mxu0 0
        %4697 = vmatpush1.bf16.msra.mxu0 %v4681
        %4698 = vmatprep.subr.bf16.mxu0 0
        %4699 = vmatpush1.bf16.msra.mxu0 %v4682
        %4700 = vmatprep.subr.bf16.mxu0 0
        %4701 = vmatpush1.bf16.msra.mxu0 %v4683
        %4702 = vmatprep.subr.bf16.mxu0 0
        %4703 = vmatpush1.bf16.msra.mxu0 0
        %4704 = vmatprep.subr.bf16.mxu0 0
        %4705 = vmatpush1.bf16.msra.mxu0 0
        %4706 = vmatprep.subr.bf16.mxu0 0
        %4707 = vmatpush1.bf16.msra.mxu0 0
        %4708 = vmatprep.subr.bf16.mxu0 0
        %4709 = vmatpush1.bf16.msra.mxu0 0
        %4710 = vmatprep.subr.bf16.mxu0 0
        %4711 = vmatpush1.bf16.msra.mxu0 0
        %4712 = vmatprep.subr.bf16.mxu0 0
        %4713 = vmatpush1.bf16.msra.mxu0 0
        %4714 = vmatprep.subr.bf16.mxu0 0
        %4715 = vmatpush1.bf16.msra.mxu0 0
        %4716 = vmatprep.subr.bf16.mxu0 0
        %4717 = vmatpush1.bf16.msra.mxu0 0
        %4718 = vmatprep.subr.bf16.mxu0 0
        %4719 = vmatpush1.bf16.msra.mxu0 0
        %4720 = vmatprep.subr.bf16.mxu0 0
        %4721 = vmatpush1.bf16.msra.mxu0 0
        %4722 = vmatprep.subr.bf16.mxu0 0
        %4723 = vmatpush1.bf16.msra.mxu0 0
        %4724 = vmatprep.mubr.bf16.mxu0 0
        %4725 = vmatmul.mubr.bf16.gmra.mrb[0].mxu0 %v4690
        %v4726 = vpop.f32.mrb[0].mxu0
        %v4727 = vadd.f32 %v4654, %v4726
        %v4728 = vpop.f32.mrb[0].mxu0
        %v4729 = vpop.f32.mrb[0].mxu0
        %v4730 = vpop.f32.mrb[0].mxu0
        %4731 = vdwg.mxu0
        %s4732 = scalar_lea.vmem [#allocation6], 2
        %v4733 = vld [vmem:[%s4732] ss:$8 sm:$0xf]
        %v4734 = vld [vmem:[%s4732] ss:$8 sm:$0xf0]
        %v4735 = vor.u32 %v4733, %v4734
        %v4736 = vpack.c.bf16 %v4735, %v4735
        %s4737 = scalar_lea.vmem %s7, 80
        %v4738 = vld [vmem:[%s4737] sm:$0xf]
        %v4739 = vld [vmem:[%s4737 + $0x4] sm:$0xf]
        %v4740 = vld [vmem:[%s4737 + $0x8] sm:$0xf]
        %v4741 = vld [vmem:[%s4737 + $0xc] sm:$0xf]
        %v4742 = vld [vmem:[%s4737 + $0x10] sm:$0xf]
        %v4743 = vld [vmem:[%s4737 + $0x14] sm:$0xf]
        %v4744 = vld [vmem:[%s4737 + $0x18] sm:$0xf]
        %v4745 = vld [vmem:[%s4737 + $0x1c] sm:$0xf]
        %v4746 = vld [vmem:[%s4737 + $0x20] sm:$0xf]
        %v4747 = vld [vmem:[%s4737 + $0x24] sm:$0xf]
        %v4758 = vunpack.c.l.b16 %v4738
        %v4759 = vunpack.c.l.b16 %v4739
        %v4760 = vunpack.c.l.b16 %v4740
        %v4761 = vunpack.c.l.b16 %v4741
        %v4762 = vunpack.c.l.b16 %v4742
        %v4763 = vunpack.c.l.b16 %v4743
        %v4764 = vunpack.c.l.b16 %v4744
        %v4765 = vunpack.c.l.b16 %v4745
        %v4766 = vunpack.c.l.b16 %v4746
        %v4767 = vunpack.c.l.b16 %v4747
        %v4768 = vpack.c.b16 %v4759, %v4758
        %v4769 = vpack.c.b16 %v4761, %v4760
        %v4770 = vpack.c.b16 %v4763, %v4762
        %v4771 = vpack.c.b16 %v4765, %v4764
        %v4772 = vpack.c.b16 %v4767, %v4766
        %v4779 = vsel %vm4492, %v4736, 0
        %4781 = vmatprep.subr.bf16.mxu0 0
        %4782 = vmatpush1.bf16.msra.mxu0 %v4768
        %4783 = vmatprep.subr.bf16.mxu0 0
        %4784 = vmatpush1.bf16.msra.mxu0 %v4769
        %4785 = vmatprep.subr.bf16.mxu0 0
        %4786 = vmatpush1.bf16.msra.mxu0 %v4770
        %4787 = vmatprep.subr.bf16.mxu0 0
        %4788 = vmatpush1.bf16.msra.mxu0 %v4771
        %4789 = vmatprep.subr.bf16.mxu0 0
        %4790 = vmatpush1.bf16.msra.mxu0 %v4772
        %4791 = vmatprep.subr.bf16.mxu0 0
        %4792 = vmatpush1.bf16.msra.mxu0 0
        %4793 = vmatprep.subr.bf16.mxu0 0
        %4794 = vmatpush1.bf16.msra.mxu0 0
        %4795 = vmatprep.subr.bf16.mxu0 0
        %4796 = vmatpush1.bf16.msra.mxu0 0
        %4797 = vmatprep.subr.bf16.mxu0 0
        %4798 = vmatpush1.bf16.msra.mxu0 0
        %4799 = vmatprep.subr.bf16.mxu0 0
        %4800 = vmatpush1.bf16.msra.mxu0 0
        %4801 = vmatprep.subr.bf16.mxu0 0
        %4802 = vmatpush1.bf16.msra.mxu0 0
        %4803 = vmatprep.subr.bf16.mxu0 0
        %4804 = vmatpush1.bf16.msra.mxu0 0
        %4805 = vmatprep.subr.bf16.mxu0 0
        %4806 = vmatpush1.bf16.msra.mxu0 0
        %4807 = vmatprep.subr.bf16.mxu0 0
        %4808 = vmatpush1.bf16.msra.mxu0 0
        %4809 = vmatprep.subr.bf16.mxu0 0
        %4810 = vmatpush1.bf16.msra.mxu0 0
        %4811 = vmatprep.subr.bf16.mxu0 0
        %4812 = vmatpush1.bf16.msra.mxu0 0
        %4813 = vmatprep.mubr.bf16.mxu0 0
        %4814 = vmatmul.mubr.bf16.gmra.mrb[0].mxu0 %v4779
        %v4815 = vpop.f32.mrb[0].mxu0
        %v4816 = vadd.f32 0.0, %v4815
        %v4817 = vpop.f32.mrb[0].mxu0
        %v4818 = vpop.f32.mrb[0].mxu0
        %v4819 = vpop.f32.mrb[0].mxu0
        %4820 = vdwg.mxu0
        %v4821 = vadd.f32 %v4727, %v4816
        %s4822 = scalar_lea.vmem [#allocation6], 3
        %v4823 = vld [vmem:[%s4822] ss:$8 sm:$0xf]
        %v4824 = vld [vmem:[%s4822] ss:$8 sm:$0xf0]
        %v4825 = vor.u32 %v4823, %v4824
        %v4826 = vpack.c.bf16 %v4825, %v4825
        %s4827 = scalar_lea.vmem %s7, 120
        %v4828 = vld [vmem:[%s4827] sm:$0xf]
        %v4829 = vld [vmem:[%s4827 + $0x4] sm:$0xf]
        %v4830 = vld [vmem:[%s4827 + $0x8] sm:$0xf]
        %v4831 = vld [vmem:[%s4827 + $0xc] sm:$0xf]
        %v4832 = vld [vmem:[%s4827 + $0x10] sm:$0xf]
        %v4833 = vld [vmem:[%s4827 + $0x14] sm:$0xf]
        %v4834 = vld [vmem:[%s4827 + $0x18] sm:$0xf]
        %v4835 = vld [vmem:[%s4827 + $0x1c] sm:$0xf]
        %v4836 = vld [vmem:[%s4827 + $0x20] sm:$0xf]
        %v4837 = vld [vmem:[%s4827 + $0x24] sm:$0xf]
        %v4848 = vunpack.c.l.b16 %v4828
        %v4849 = vunpack.c.l.b16 %v4829
        %v4850 = vunpack.c.l.b16 %v4830
        %v4851 = vunpack.c.l.b16 %v4831
        %v4852 = vunpack.c.l.b16 %v4832
        %v4853 = vunpack.c.l.b16 %v4833
        %v4854 = vunpack.c.l.b16 %v4834
        %v4855 = vunpack.c.l.b16 %v4835
        %v4856 = vunpack.c.l.b16 %v4836
        %v4857 = vunpack.c.l.b16 %v4837
        %v4858 = vpack.c.b16 %v4849, %v4848
        %v4859 = vpack.c.b16 %v4851, %v4850
        %v4860 = vpack.c.b16 %v4853, %v4852
        %v4861 = vpack.c.b16 %v4855, %v4854
        %v4862 = vpack.c.b16 %v4857, %v4856
        %v4869 = vsel %vm4492, %v4826, 0
        %4871 = vmatprep.subr.bf16.mxu0 0
        %4872 = vmatpush1.bf16.msra.mxu0 %v4858
        %4873 = vmatprep.subr.bf16.mxu0 0
        %4874 = vmatpush1.bf16.msra.mxu0 %v4859
        %4875 = vmatprep.subr.bf16.mxu0 0
        %4876 = vmatpush1.bf16.msra.mxu0 %v4860
        %4877 = vmatprep.subr.bf16.mxu0 0
        %4878 = vmatpush1.bf16.msra.mxu0 %v4861
        %4879 = vmatprep.subr.bf16.mxu0 0
        %4880 = vmatpush1.bf16.msra.mxu0 %v4862
        %4881 = vmatprep.subr.bf16.mxu0 0
        %4882 = vmatpush1.bf16.msra.mxu0 0
        %4883 = vmatprep.subr.bf16.mxu0 0
        %4884 = vmatpush1.bf16.msra.mxu0 0
        %4885 = vmatprep.subr.bf16.mxu0 0
        %4886 = vmatpush1.bf16.msra.mxu0 0
        %4887 = vmatprep.subr.bf16.mxu0 0
        %4888 = vmatpush1.bf16.msra.mxu0 0
        %4889 = vmatprep.subr.bf16.mxu0 0
        %4890 = vmatpush1.bf16.msra.mxu0 0
        %4891 = vmatprep.subr.bf16.mxu0 0
        %4892 = vmatpush1.bf16.msra.mxu0 0
        %4893 = vmatprep.subr.bf16.mxu0 0
        %4894 = vmatpush1.bf16.msra.mxu0 0
        %4895 = vmatprep.subr.bf16.mxu0 0
        %4896 = vmatpush1.bf16.msra.mxu0 0
        %4897 = vmatprep.subr.bf16.mxu0 0
        %4898 = vmatpush1.bf16.msra.mxu0 0
        %4899 = vmatprep.subr.bf16.mxu0 0
        %4900 = vmatpush1.bf16.msra.mxu0 0
        %4901 = vmatprep.subr.bf16.mxu0 0
        %4902 = vmatpush1.bf16.msra.mxu0 0
        %4903 = vmatprep.mubr.bf16.mxu0 0
        %4904 = vmatmul.mubr.bf16.gmra.mrb[0].mxu0 %v4869
        %v4905 = vpop.f32.mrb[0].mxu0
        %v4906 = vadd.f32 0.0, %v4905
        %v4907 = vpop.f32.mrb[0].mxu0
        %v4908 = vpop.f32.mrb[0].mxu0
        %v4909 = vpop.f32.mrb[0].mxu0
        %4910 = vdwg.mxu0
        %v4911 = vadd.f32 %v4821, %v4906
        %s4912 = scalar_lea.vmem [#allocation6], 4
        %v4913 = vld [vmem:[%s4912] ss:$8 sm:$0xf]
        %v4914 = vld [vmem:[%s4912] ss:$8 sm:$0xf0]
        %v4915 = vor.u32 %v4913, %v4914
        %v4916 = vpack.c.bf16 %v4915, %v4915
        %s4917 = scalar_lea.vmem %s7, 160
        %v4918 = vld [vmem:[%s4917] sm:$0xf]
        %v4919 = vld [vmem:[%s4917 + $0x4] sm:$0xf]
        %v4920 = vld [vmem:[%s4917 + $0x8] sm:$0xf]
        %v4921 = vld [vmem:[%s4917 + $0xc] sm:$0xf]
        %v4922 = vld [vmem:[%s4917 + $0x10] sm:$0xf]
        %v4923 = vld [vmem:[%s4917 + $0x14] sm:$0xf]
        %v4924 = vld [vmem:[%s4917 + $0x18] sm:$0xf]
        %v4925 = vld [vmem:[%s4917 + $0x1c] sm:$0xf]
        %v4926 = vld [vmem:[%s4917 + $0x20] sm:$0xf]
        %v4927 = vld [vmem:[%s4917 + $0x24] sm:$0xf]
        %v4938 = vunpack.c.l.b16 %v4918
        %v4939 = vunpack.c.l.b16 %v4919
        %v4940 = vunpack.c.l.b16 %v4920
        %v4941 = vunpack.c.l.b16 %v4921
        %v4942 = vunpack.c.l.b16 %v4922
        %v4943 = vunpack.c.l.b16 %v4923
        %v4944 = vunpack.c.l.b16 %v4924
        %v4945 = vunpack.c.l.b16 %v4925
        %v4946 = vunpack.c.l.b16 %v4926
        %v4947 = vunpack.c.l.b16 %v4927
        %v4948 = vpack.c.b16 %v4939, %v4938
        %v4949 = vpack.c.b16 %v4941, %v4940
        %v4950 = vpack.c.b16 %v4943, %v4942
        %v4951 = vpack.c.b16 %v4945, %v4944
        %v4952 = vpack.c.b16 %v4947, %v4946
        %v4959 = vsel %vm4492, %v4916, 0
        %4961 = vmatprep.subr.bf16.mxu0 0
        %4962 = vmatpush1.bf16.msra.mxu0 %v4948
        %4963 = vmatprep.subr.bf16.mxu0 0
        %4964 = vmatpush1.bf16.msra.mxu0 %v4949
        %4965 = vmatprep.subr.bf16.mxu0 0
        %4966 = vmatpush1.bf16.msra.mxu0 %v4950
        %4967 = vmatprep.subr.bf16.mxu0 0
        %4968 = vmatpush1.bf16.msra.mxu0 %v4951
        %4969 = vmatprep.subr.bf16.mxu0 0
        %4970 = vmatpush1.bf16.msra.mxu0 %v4952
        %4971 = vmatprep.subr.bf16.mxu0 0
        %4972 = vmatpush1.bf16.msra.mxu0 0
        %4973 = vmatprep.subr.bf16.mxu0 0
        %4974 = vmatpush1.bf16.msra.mxu0 0
        %4975 = vmatprep.subr.bf16.mxu0 0
        %4976 = vmatpush1.bf16.msra.mxu0 0
        %4977 = vmatprep.subr.bf16.mxu0 0
        %4978 = vmatpush1.bf16.msra.mxu0 0
        %4979 = vmatprep.subr.bf16.mxu0 0
        %4980 = vmatpush1.bf16.msra.mxu0 0
        %4981 = vmatprep.subr.bf16.mxu0 0
        %4982 = vmatpush1.bf16.msra.mxu0 0
        %4983 = vmatprep.subr.bf16.mxu0 0
        %4984 = vmatpush1.bf16.msra.mxu0 0
        %4985 = vmatprep.subr.bf16.mxu0 0
        %4986 = vmatpush1.bf16.msra.mxu0 0
        %4987 = vmatprep.subr.bf16.mxu0 0
        %4988 = vmatpush1.bf16.msra.mxu0 0
        %4989 = vmatprep.subr.bf16.mxu0 0
        %4990 = vmatpush1.bf16.msra.mxu0 0
        %4991 = vmatprep.subr.bf16.mxu0 0
        %4992 = vmatpush1.bf16.msra.mxu0 0
        %4993 = vmatprep.mubr.bf16.mxu0 0
        %4994 = vmatmul.mubr.bf16.gmra.mrb[0].mxu0 %v4959
        %v4995 = vpop.f32.mrb[0].mxu0
        %v4996 = vadd.f32 0.0, %v4995
        %v4997 = vpop.f32.mrb[0].mxu0
        %v4998 = vpop.f32.mrb[0].mxu0
        %v4999 = vpop.f32.mrb[0].mxu0
        %5000 = vdwg.mxu0
        %v5001 = vadd.f32 %v4911, %v4996
        %v5002 = vld [vmem:[%s8] sm:$0x1]
        %v5004 = vlaneseq
        %v5005 = vshrl.u32 %v5004, 7
        %v5006 = vsub.s32 0, %v5005
        %v5007 = vrot.slane %v5002, %v5006
        %v5009 = vadd.f32 %v5001, %v5007
        %v5010 = vtanh.pop %v5009
        %v5011 = vpack.c.bf16 %v5010, %v5010
        %v5012 = vld [vmem:[%s9] sm:$0xf]
        %v5013 = vld [vmem:[%s9 + $0x4] sm:$0xf]
        %v5014 = vld [vmem:[%s9 + $0x8] sm:$0xf]
        %v5015 = vld [vmem:[%s9 + $0xc] sm:$0xf]
        %v5016 = vld [vmem:[%s9 + $0x10] sm:$0xf]
        %v5017 = vld [vmem:[%s9 + $0x14] sm:$0xf]
        %v5018 = vld [vmem:[%s9 + $0x18] sm:$0xf]
        %v5019 = vld [vmem:[%s9 + $0x1c] sm:$0xf]
        %v5020 = vld [vmem:[%s9 + $0x20] sm:$0xf]
        %v5021 = vld [vmem:[%s9 + $0x24] sm:$0xf]
        %v5022 = vld [vmem:[%s9 + $0x28] sm:$0xf]
        %v5023 = vld [vmem:[%s9 + $0x2c] sm:$0xf]
        %v5024 = vld [vmem:[%s9 + $0x30] sm:$0xf]
        %v5025 = vld [vmem:[%s9 + $0x34] sm:$0xf]
        %v5026 = vld [vmem:[%s9 + $0x38] sm:$0xf]
        %v5027 = vld [vmem:[%s10] sm:$0x1]
        %v5029 = vlaneseq
        %v5030 = vshrl.u32 %v5029, 7
        %v5031 = vsub.s32 0, %v5030
        %v5032 = vrot.slane %v5027, %v5031
        %v5049 = vunpack.c.l.b16 %v5012
        %v5050 = vunpack.c.l.b16 %v5013
        %v5051 = vunpack.c.l.b16 %v5014
        %v5052 = vunpack.c.l.b16 %v5015
        %v5053 = vunpack.c.l.b16 %v5016
        %v5054 = vunpack.c.l.b16 %v5017
        %v5055 = vunpack.c.l.b16 %v5018
        %v5056 = vunpack.c.l.b16 %v5019
        %v5057 = vunpack.c.l.b16 %v5020
        %v5058 = vunpack.c.l.b16 %v5021
        %v5059 = vunpack.c.l.b16 %v5022
        %v5060 = vunpack.c.l.b16 %v5023
        %v5061 = vunpack.c.l.b16 %v5024
        %v5062 = vunpack.c.l.b16 %v5025
        %v5063 = vunpack.c.l.b16 %v5026
        %v5064 = vpack.c.b16 %v5050, %v5049
        %v5065 = vpack.c.b16 %v5052, %v5051
        %v5066 = vpack.c.b16 %v5054, %v5053
        %v5067 = vpack.c.b16 %v5056, %v5055
        %v5068 = vpack.c.b16 %v5058, %v5057
        %v5069 = vpack.c.b16 %v5060, %v5059
        %v5070 = vpack.c.b16 %v5062, %v5061
        %v5071 = vpack.c.b16 %v5063, %v5063
        %vm5079 = vcmask 982016
        %v5081 = vsel %vm5079, %v5011, 0
        %v5084 = vsel %vm2638, %v5071, 0
        %5086 = vmatprep.subr.bf16.mxu0 0
        %5087 = vmatpush1.bf16.msra.mxu0 %v5064
        %5088 = vmatprep.subr.bf16.mxu0 0
        %5089 = vmatpush1.bf16.msra.mxu0 %v5065
        %5090 = vmatprep.subr.bf16.mxu0 0
        %5091 = vmatpush1.bf16.msra.mxu0 %v5066
        %5092 = vmatprep.subr.bf16.mxu0 0
        %5093 = vmatpush1.bf16.msra.mxu0 %v5067
        %5094 = vmatprep.subr.bf16.mxu0 0
        %5095 = vmatpush1.bf16.msra.mxu0 %v5068
        %5096 = vmatprep.subr.bf16.mxu0 0
        %5097 = vmatpush1.bf16.msra.mxu0 %v5069
        %5098 = vmatprep.subr.bf16.mxu0 0
        %5099 = vmatpush1.bf16.msra.mxu0 %v5070
        %5100 = vmatprep.subr.bf16.mxu0 0
        %5101 = vmatpush1.bf16.msra.mxu0 %v5084
        %5102 = vmatprep.subr.bf16.mxu0 0
        %5103 = vmatpush1.bf16.msra.mxu0 0
        %5104 = vmatprep.subr.bf16.mxu0 0
        %5105 = vmatpush1.bf16.msra.mxu0 0
        %5106 = vmatprep.subr.bf16.mxu0 0
        %5107 = vmatpush1.bf16.msra.mxu0 0
        %5108 = vmatprep.subr.bf16.mxu0 0
        %5109 = vmatpush1.bf16.msra.mxu0 0
        %5110 = vmatprep.subr.bf16.mxu0 0
        %5111 = vmatpush1.bf16.msra.mxu0 0
        %5112 = vmatprep.subr.bf16.mxu0 0
        %5113 = vmatpush1.bf16.msra.mxu0 0
        %5114 = vmatprep.subr.bf16.mxu0 0
        %5115 = vmatpush1.bf16.msra.mxu0 0
        %5116 = vmatprep.subr.bf16.mxu0 0
        %5117 = vmatpush1.bf16.msra.mxu0 0
        %5118 = vmatprep.mubr.bf16.mxu0 0
        %5119 = vmatmul.mubr.bf16.gmra.mrb[0].mxu0 %v5081
        %v5120 = vpop.f32.mrb[0].mxu0
        %v5121 = vadd.f32 %v5032, %v5120
        %v5122 = vpop.f32.mrb[0].mxu0
        %v5123 = vpop.f32.mrb[0].mxu0
        %v5124 = vpop.f32.mrb[0].mxu0
        %5125 = vdwg.mxu0
        %v5126 = vtanh.pop %v5121
        %v5127 = vpack.c.bf16 %v5126, %v5126
        %v5128 = vld [vmem:[%s11] sm:$0xf]
        %v5129 = vld [vmem:[%s11 + $0x4] sm:$0xf]
        %v5130 = vld [vmem:[%s11 + $0x8] sm:$0xf]
        %v5131 = vld [vmem:[%s11 + $0xc] sm:$0xf]
        %v5132 = vld [vmem:[%s11 + $0x10] sm:$0xf]
        %v5133 = vld [vmem:[%s11 + $0x14] sm:$0xf]
        %v5134 = vld [vmem:[%s11 + $0x18] sm:$0xf]
        %v5135 = vld [vmem:[%s11 + $0x1c] sm:$0xf]
        %v5136 = vld [vmem:[%s11 + $0x20] sm:$0xf]
        %v5137 = vld [vmem:[%s11 + $0x24] sm:$0xf]
        %v5138 = vld [vmem:[%s11 + $0x28] sm:$0x3]
        %v5139 = vld [vmem:[%s12] sm:$0x1]
        %v5141 = vlaneseq
        %v5142 = vshrl.u32 %v5141, 7
        %v5143 = vsub.s32 0, %v5142
        %v5144 = vrot.slane %v5139, %v5143
        %v5157 = vunpack.c.l.b16 %v5128
        %v5158 = vunpack.c.l.b16 %v5129
        %v5159 = vunpack.c.l.b16 %v5130
        %v5160 = vunpack.c.l.b16 %v5131
        %v5161 = vunpack.c.l.b16 %v5132
        %v5162 = vunpack.c.l.b16 %v5133
        %v5163 = vunpack.c.l.b16 %v5134
        %v5164 = vunpack.c.l.b16 %v5135
        %v5165 = vunpack.c.l.b16 %v5136
        %v5166 = vunpack.c.l.b16 %v5137
        %v5167 = vunpack.c.l.b16 %v5138
        %v5168 = vpack.c.b16 %v5158, %v5157
        %v5169 = vpack.c.b16 %v5160, %v5159
        %v5170 = vpack.c.b16 %v5162, %v5161
        %v5171 = vpack.c.b16 %v5164, %v5163
        %v5172 = vpack.c.b16 %v5166, %v5165
        %v5173 = vpack.c.b16 %v5167, %v5167
        %v5180 = vsel %vm2803, %v5127, 0
        %v5183 = vsel %vm3082, %v5173, 0
        %5185 = vmatprep.subr.bf16.mxu0 0
        %5186 = vmatpush1.bf16.msra.mxu0 %v5168
        %5187 = vmatprep.subr.bf16.mxu0 0
        %5188 = vmatpush1.bf16.msra.mxu0 %v5169
        %5189 = vmatprep.subr.bf16.mxu0 0
        %5190 = vmatpush1.bf16.msra.mxu0 %v5170
        %5191 = vmatprep.subr.bf16.mxu0 0
        %5192 = vmatpush1.bf16.msra.mxu0 %v5171
        %5193 = vmatprep.subr.bf16.mxu0 0
        %5194 = vmatpush1.bf16.msra.mxu0 %v5172
        %5195 = vmatprep.subr.bf16.mxu0 0
        %5196 = vmatpush1.bf16.msra.mxu0 %v5183
        %5197 = vmatprep.subr.bf16.mxu0 0
        %5198 = vmatpush1.bf16.msra.mxu0 0
        %5199 = vmatprep.subr.bf16.mxu0 0
        %5200 = vmatpush1.bf16.msra.mxu0 0
        %5201 = vmatprep.subr.bf16.mxu0 0
        %5202 = vmatpush1.bf16.msra.mxu0 0
        %5203 = vmatprep.subr.bf16.mxu0 0
        %5204 = vmatpush1.bf16.msra.mxu0 0
        %5205 = vmatprep.subr.bf16.mxu0 0
        %5206 = vmatpush1.bf16.msra.mxu0 0
        %5207 = vmatprep.subr.bf16.mxu0 0
        %5208 = vmatpush1.bf16.msra.mxu0 0
        %5209 = vmatprep.subr.bf16.mxu0 0
        %5210 = vmatpush1.bf16.msra.mxu0 0
        %5211 = vmatprep.subr.bf16.mxu0 0
        %5212 = vmatpush1.bf16.msra.mxu0 0
        %5213 = vmatprep.subr.bf16.mxu0 0
        %5214 = vmatpush1.bf16.msra.mxu0 0
        %5215 = vmatprep.subr.bf16.mxu0 0
        %5216 = vmatpush1.bf16.msra.mxu0 0
        %5217 = vmatprep.mubr.bf16.mxu0 0
        %5218 = vmatmul.mubr.bf16.gmra.mrb[0].mxu0 %v5180
        %v5219 = vpop.f32.mrb[0].mxu0
        %v5220 = vadd.f32 %v5144, %v5219
        %v5221 = vpop.f32.mrb[0].mxu0
        %v5222 = vpop.f32.mrb[0].mxu0
        %v5223 = vpop.f32.mrb[0].mxu0
        %5224 = vdwg.mxu0
        %vm5225 = vcmask 80896
        %v5226 = vsel %vm5225, %v5220, -inf
        %5227 = vmax.xlane.f32.xlu0 %v5226
        %v5228 = vpop.xlane.xlu0 %5227
        %v5229 = vsub.f32 %v5220, %v5228
        %v5230 = vmul.f32 %v5229, 1.442695
        %v5231 = vpow.pop %v5230
        %v5232 = vsel %vm5225, %v5231, 0.0
        %5233 = vadd.xlane.f32.xlu0 %v5232
        %v5234 = vpop.xlane.xlu0 %5233
        %v5235 = vlog2.pop %v5234
        %v5236 = vmul.f32 %v5235, 0.6931472
        %v5237 = vsub.f32 %v5229, %v5236
        %5238 = vst.msk [vmem:[%s436] sm:$0xff] %vm5225, %v5237
        %s5239 = sand.u32 %s313, 1
        %s5240 = scalar_lea.sflag [#allocation8], %s5239
        %s5241 = sand.u32 %s313, 1
        %s5242 = smul.addr %s5241, 8
        %s5243 = scalar_lea.vmem [#allocation7], %s5242
        // Predicated region
        $region73: #{lenet_forward.1} parent=71 // pred_check
          %p5244 = pneg %p323
        $region74: #{lenet_forward.1} parent=71 // pred_check_branch
          %5246 = sbr.rel (%p5244) target = $region76
        $region75: #{lenet_forward.1} parent=71 // pred_region
          %s5248 = ssub.s32 128, 128
          %5249 = vsyncadd %s5240, %s5248
          %s5250 = smul.addr %s27, 128
          %s5251 = scalar_lea.hbm %s13, %s5250
          %s5253 = sshll.u32 %s5243, 4
          %s5254 = int_to_ptr.vmem [resolvable:$true] %s5253
          %5256 = dma.vmem_to_hbm [thread:$0]  %s5254, 128, %s5251, %s5240
        $region76: #{lenet_forward.1} parent=71 // pred_fallthru
          _
      $region72: #{lenet_forward.1} parent=5 // pred_fallthru
        _
      %p5257 = scmp.le.s32.totalorder 2, %s22
      // Predicated region
      $region77: #{lenet_forward.1} parent=5 // pred_check
        %p5258 = pneg %p5257
      $region78: #{lenet_forward.1} parent=5 // pred_check_branch
        %5260 = sbr.rel (%p5258) target = $region80
      $region79: #{lenet_forward.1} parent=5 // pred_region
        %s5261 = ssub.s32 %s22, 2
        // Predicated region
        $region81: #{lenet_forward.1} parent=79 // pred_check
          %p5262 = pneg %p329
        $region82: #{lenet_forward.1} parent=79 // pred_check_branch
          %5264 = sbr.rel (%p5262) target = $region84
        $region83: #{lenet_forward.1} parent=79 // pred_region
          %s5265 = sand.u32 %s314, 1
          %s5266 = scalar_lea.sflag [#allocation8], %s5265
          %s5267 = sand.u32 %s314, 1
          %s5268 = smul.addr %s5267, 8
          %s5269 = scalar_lea.vmem [#allocation7], %s5268
          %5270 = dma.done %s5266, 128
        $region84: #{lenet_forward.1} parent=79 // pred_fallthru
          _
      $region80: #{lenet_forward.1} parent=5 // pred_fallthru
        _
    $region6: #{lenet_forward.1} parent=1 // loop_footer
      %s26 = sadd.s32 1, %s22
    $region7: #{lenet_forward.1} parent=1 // loop_footer_branch
      %21 = sbr.rel target = $region3
    $region8: #{lenet_forward.1} parent=1 // loop_exit
      _
    %5271 = vsyncpa [#allocation8], 1
    %s5272 = scalar_lea.sflag [#allocation8], 1
    %5273 = vsyncpa %s5272, 1

</llo_original>
